<compile_context>
chip_gen: v7x
topology: tpu7x:2x2x1
jax: 0.10.0
libtpu: 0.0.40
codegen_flags: <defaults>
</compile_context>

<pallas_src>
import math

import jax
import jax.numpy as jnp
from jax.experimental import pallas as pl
from jax.experimental.pallas import tpu as pltpu

# ----------------------------- model hyper-params ---------------------------
B        = 2                    # batch
N_COL    = 4                    # number of (numerical) feature columns
N_CLASS  = 3                    # classification head size
M_PARAM  = 4                    # m
D_PARAM  = 4                    # d  (conditions per rODT)
N_HEAD   = 1                    # single-head attention
N_FOREST = 8
N_HIDDEN = 32                   # H
N_COND   = D_PARAM * M_PARAM                               # 16
N_RODT   = N_COND * N_COL // D_PARAM                       # 16
N_EST    = max(2, int(N_COL ** 0.5)) * N_COND // D_PARAM   # 8
LN_EPS   = 1e-5
NVEC     = 16                   # sublane rows reserved for (1,H) vectors


# ----------------------------- in-kernel helpers ----------------------------
def _ln(x, g, b):
    """PyTorch nn.LayerNorm over the last dim (biased variance)."""
    mu = jnp.mean(x, axis=-1, keepdims=True)
    var = jnp.mean((x - mu) ** 2, axis=-1, keepdims=True)
    return (x - mu) * jax.lax.rsqrt(var + LN_EPS) * g + b


# ============================================================================
# Single fused kernel: whole DOFENTransformer forward (eval mode).
# Row i = b*(n_cond*n_col) + r*d + j is already in rODT-permuted order, so the
# per-rODT attention is a block-diagonal (block=d) masked softmax on one (R,R)
# score matrix and the d-mean + swr gather is one constant matmul (g2).
# ============================================================================
def dofen_kernel(dyn_ref, selx_ref, pack_ref, big_ref, out_ref):
    H = dyn_ref.shape[1]
    F = dyn_ref.shape[0] // 2            # B * n_col
    R = big_ref.shape[0] // 2            # B * n_cond * n_col

    # --- unpack the 32-lane constant pack (static sublane-aligned slices) ---
    vec = pack_ref[0:NVEC, :]            # (16, H) of (1, H) rows
    lng,  lnb  = vec[0:1], vec[1:2]
    u_w,  u_e  = vec[2:3], vec[3:4]
    bve,  boe  = vec[4:5], vec[5:6]
    ln1g, ln1b = vec[6:7], vec[7:8]
    b1         = vec[8:9]
    ln2g, ln2b = vec[9:10], vec[10:11]
    b2         = vec[11:12]

    c1 = pack_ref[NVEC:NVEC + R, :]                  # w1p @ wc1^T
    c2 = pack_ref[NVEC + R:NVEC + 2 * R, :]          # b1p @ wc1^T + bc
    w0 = NVEC + 2 * R
    a_w   = pack_ref[w0 + 0 * H:w0 + 1 * H, :]       # Wq_w^T Wk_w * sqrt(d)
    a_e   = pack_ref[w0 + 1 * H:w0 + 2 * H, :]       # Wq_E^T Wk_E * sqrt(d)
    wve_t = pack_ref[w0 + 2 * H:w0 + 3 * H, :]       # Wv_E^T
    woe_t = pack_ref[w0 + 3 * H:w0 + 4 * H, :]       # Wo_E^T
    w1_t  = pack_ref[w0 + 4 * H:w0 + 5 * H, :]       # bagging W1^T
    w2_t  = pack_ref[w0 + 5 * H:w0 + 6 * H, :]       # bagging W2^T (lane-padded)
    vv_w  = pack_ref[w0 + 6 * H:w0 + 7 * H, :]       # Wv_w^T ow^T (replicated)
    wc2_t = pack_ref[w0 + 7 * H:w0 + 8 * H, :]       # pos half of comb Linear

    g2 = big_ref[R:2 * R, :]             # mean-over-d + swr gather matrix
    selx = selx_ref[...]                 # (R, B*n_col) one-hot (constant)

    # --- ConditionGeneration (numerical branch), rows already permuted ------
    xb   = jnp.dot(selx, dyn_ref[0:F, :], preferred_element_type=jnp.float32)
    posp = jnp.dot(selx, dyn_ref[F:2 * F, :], preferred_element_type=jnp.float32)
    m_rows = xb * c1 + c2 + jnp.dot(posp, wc2_t,
                                    preferred_element_type=jnp.float32)  # (R,H)

    # --- self.norm (LayerNorm over n_hidden) --------------------------------
    o_n = _ln(m_rows, lng, lnb)

    # --- per-rODT attention probabilities (Q/K + scale folded into A/u) -----
    def probs(a_mat, u_row):
        qa = jnp.dot(o_n, a_mat, preferred_element_type=jnp.float32) + u_row
        s = jax.lax.dot_general(qa, o_n, (((1,), (1,)), ((), ())),
                                preferred_element_type=jnp.float32)
        s = s + big_ref[0:R, :]                       # additive block-diag bias
        s = s - jnp.max(s, axis=-1, keepdims=True)
        p = jnp.exp(s)
        return p * pl.reciprocal(jnp.sum(p, axis=-1, keepdims=True),
                                 approx=True)         # attn dropout: eval no-op

    # --- w branch (ow folded into V, every lane carries the same scalar;
    #     its additive bias terms cancel under the per-forest softmax) -------
    p_w = probs(a_w, u_w)
    vv = jnp.dot(o_n, vv_w, preferred_element_type=jnp.float32)          # (R,H)
    w_g = jnp.dot(g2, jnp.dot(p_w, vv, preferred_element_type=jnp.float32),
                  preferred_element_type=jnp.float32)                    # (R,H)

    # --- E branch ------------------------------------------------------------
    p_e = probs(a_e, u_e)
    v_e = jnp.dot(o_n, wve_t, preferred_element_type=jnp.float32) + bve
    e_g = jnp.dot(g2, jnp.dot(p_e, v_e, preferred_element_type=jnp.float32),
                  preferred_element_type=jnp.float32)
    e_g = jnp.dot(e_g, woe_t, preferred_element_type=jnp.float32) + boe   # (R,H)

    # --- rODTForestConstruction: softmax over the estimator axis ------------
    gf = R // N_EST                          # B * n_forest groups
    w3 = w_g.reshape(gf, N_EST, H)
    e3 = e_g.reshape(gf, N_EST, H)
    w3 = w3 - jnp.max(w3, axis=1, keepdims=True)
    p3 = jnp.exp(w3)
    p3 = p3 * pl.reciprocal(jnp.sum(p3, axis=1, keepdims=True), approx=True)
    f = jnp.sum(p3 * e3, axis=1)                                          # (gf,H)

    # --- rODTForestBagging.phi_3 + mean over forests -------------------------
    # (Dropout = identity; the final Linear commutes with the forest mean.)
    h = _ln(f, ln1g, ln1b)
    h = jnp.maximum(jnp.dot(h, w1_t, preferred_element_type=jnp.float32) + b1,
                    0.0)
    h = _ln(h, ln2g, ln2b)
    hm = jnp.mean(h.reshape(-1, N_FOREST, H), axis=1)                     # (B,H)
    logits = jnp.dot(hm, w2_t, preferred_element_type=jnp.float32) + b2   # (B,H)
    out_ref[...] = logits[:, :out_ref.shape[1]]                           # (B,NC)


# ----------------------------- full forward (wrapper) -----------------------
def dofen_forward(X, quantile, params):
    bsz, ncol = X.shape
    H, C, D, NF, NE, NR = N_HIDDEN, N_COND, D_PARAM, N_FOREST, N_EST, N_RODT
    R = bsz * C * ncol
    # reference: scores / head_dim**-0.5  ==  scores * sqrt(head_dim)
    sqrt_d = math.sqrt(H // N_HEAD)

    cond, attn, bag = params["cond"], params["attn"], params["bag"]
    perm, swr = params["perm"], params["swr"]

    # ---- constant-folded index plumbing & weight folds (jit closure consts) -
    condp = perm // ncol
    colp = perm % ncol
    w1p = jnp.tile(cond["w1"][condp], (bsz, 1))                       # (R,H)
    b1p = jnp.tile(cond["b1"][condp], (bsz, 1))                       # (R,H)
    selx = jnp.kron(jnp.eye(bsz, dtype=jnp.float32),
                    jax.nn.one_hot(colp, ncol, dtype=jnp.float32))    # (R, B*F)

    wc1 = cond["wc"][:, :H]                 # sample half of Linear(2H, H)
    wc2 = cond["wc"][:, H:]                 # positional half
    c1 = w1p @ wc1.T                                                  # (R,H)
    c2 = b1p @ wc1.T + cond["bc"][None, :]                            # (R,H)

    # Q/K fold: row-constant score terms cancel under the row softmax.
    a_w = (attn["qw_w"].T @ attn["kw_w"]) * sqrt_d
    a_e = (attn["qE_w"].T @ attn["kE_w"]) * sqrt_d
    u_w = (attn["qw_b"] @ attn["kw_w"]) * sqrt_d
    u_e = (attn["qE_b"] @ attn["kE_w"]) * sqrt_d
    # ow folded into Wv_w, replicated across all 32 lanes (MXU does the bcast)
    vv_w = jnp.tile(attn["vw_w"].T @ attn["ow_w"].T, (1, H))          # (H,H)

    # combined "mean over d" + swr gather, block-diagonal over batch
    cols = swr.reshape(-1)[:, None] * D + jnp.arange(D)[None, :]
    blk = jnp.zeros((NF * NE, NR * D), jnp.float32)
    blk = blk.at[jnp.arange(NF * NE)[:, None], cols].set(1.0 / D)
    g2 = jnp.kron(jnp.eye(bsz, dtype=jnp.float32), blk)               # (R,R)

    # additive block-diagonal attention bias (0 inside an rODT, -1e30 outside)
    gi = jnp.arange(R) // D
    maskb = jnp.where(gi[:, None] == gi[None, :], 0.0, -1e30).astype(jnp.float32)

    # lane-padded classifier weights
    b2pad = jnp.zeros((H,), jnp.float32).at[:N_CLASS].set(bag["b2"])
    w2pad = jnp.zeros((H, H), jnp.float32).at[:, :N_CLASS].set(bag["w2"].T)

    # (1,H) vector rows, one sublane each
    vec = jnp.zeros((NVEC, H), jnp.float32)
    vec = vec.at[0].set(attn["ln_g"]).at[1].set(attn["ln_b"])
    vec = vec.at[2].set(u_w).at[3].set(u_e)
    vec = vec.at[4].set(attn["vE_b"]).at[5].set(attn["oE_b"])
    vec = vec.at[6].set(bag["ln1_g"]).at[7].set(bag["ln1_b"])
    vec = vec.at[8].set(bag["b1"])
    vec = vec.at[9].set(bag["ln2_g"]).at[10].set(bag["ln2_b"])
    vec = vec.at[11].set(b2pad)

    pack32 = jnp.concatenate(
        [vec, c1, c2,
         a_w, a_e, attn["vE_w"].T, attn["oE_w"].T,
         bag["w1"].T, w2pad, vv_w, wc2.T], axis=0)                    # (528,H)
    bigpack = jnp.concatenate([maskb, g2], axis=0)                    # (2R,R)

    # ---- data-dependent operand: [x broadcast ; sinusoidal pos] ------------
    # TODO(synk): sin/cos kept in the (tiny) wrapper fusion rather than in-kernel.
    inv_freq = jnp.exp(jnp.arange(0, H, 2, dtype=jnp.float32)
                       * (-math.log(1000.0) / H))
    angle = quantile[..., None] * inv_freq                            # (B,F,H/2)
    pos = jnp.stack([jnp.sin(angle), jnp.cos(angle)],
                    axis=-1).reshape(bsz * ncol, H)                   # (B*F,H)
    xb = jnp.broadcast_to(X.reshape(bsz * ncol, 1).astype(jnp.float32),
                          (bsz * ncol, H))
    dyn = jnp.concatenate([xb, pos], axis=0)                          # (2*B*F,H)

    y_hat = pl.pallas_call(
        dofen_kernel,
        out_shape=jax.ShapeDtypeStruct((bsz, N_CLASS), jnp.float32),
        in_specs=[pl.BlockSpec(memory_space=pltpu.MemorySpace.VMEM)] * 4,
        out_specs=pl.BlockSpec(memory_space=pltpu.MemorySpace.VMEM),
    )(dyn, selx, pack32, bigpack)
    return {"pred": y_hat}


# ----------------------------- deterministic parameter init -----------------
def init_params(key):
    H, C, NC = N_HIDDEN, N_COND, N_CLASS
    keys = list(jax.random.split(key, 32))
    ki = iter(keys)

    def linear(out_f, in_f):
        k1, k2 = jax.random.split(next(ki))
        bound = 1.0 / math.sqrt(in_f)
        w = jax.random.uniform(k1, (out_f, in_f), jnp.float32, -bound, bound)
        b = jax.random.uniform(k2, (out_f,), jnp.float32, -bound, bound)
        return w, b

    def xavier(out_f, in_f):  # MultiheadAttention.create_linear (gain=1/sqrt2)
        k1, k2 = jax.random.split(next(ki))
        a = (1.0 / math.sqrt(2.0)) * math.sqrt(6.0 / (in_f + out_f))
        bb = 1.0 / math.sqrt(in_f)
        w = jax.random.uniform(k1, (out_f, in_f), jnp.float32, -a, a)
        b = jax.random.uniform(k2, (out_f,), jnp.float32, -bb, bb)
        return w, b

    # ConditionGeneration.phi_1 (numerical branch only)
    w_num, b_num = linear(C * H, 1)            # Linear(1, n_cond * n_hidden)
    wc, bc = linear(H, 2 * H)                  # Linear(2*n_hidden, n_hidden)
    cond = dict(w1=w_num[:, 0].reshape(C, H), b1=b_num.reshape(C, H),
                wc=wc, bc=bc)

    # MultiheadAttention projections (k/v_w/ow biases provably cancel in the
    # final prediction and are kept only for parameter fidelity)
    qw_w, qw_b = xavier(H, H); kw_w, kw_b = xavier(H, H)
    vw_w, vw_b = xavier(H, H); ow_w, ow_b = xavier(1, H)
    qE_w, qE_b = xavier(H, H); kE_w, kE_b = xavier(H, H)
    vE_w, vE_b = xavier(H, H); oE_w, oE_b = xavier(H, H)
    attn = dict(ln_g=jnp.ones((H,), jnp.float32),
                ln_b=jnp.zeros((H,), jnp.float32),
                qw_w=qw_w, qw_b=qw_b, kw_w=kw_w, kw_b=kw_b,
                vw_w=vw_w, vw_b=vw_b, ow_w=ow_w, ow_b=ow_b,
                qE_w=qE_w, qE_b=qE_b, kE_w=kE_w, kE_b=kE_b,
                vE_w=vE_w, vE_b=vE_b, oE_w=oE_w, oE_b=oE_b)

    # rODTForestBagging.phi_3
    w1, b1 = linear(H, H)
    w2, b2 = linear(NC, H)
    bag = dict(ln1_g=jnp.ones((H,), jnp.float32),
               ln1_b=jnp.zeros((H,), jnp.float32),
               w1=w1, b1=b1,
               ln2_g=jnp.ones((H,), jnp.float32),
               ln2_b=jnp.zeros((H,), jnp.float32),
               w2=w2, b2=b2)

    # fixed buffers (torch.rand(...).argsort equivalents, eval-fixed)
    perm = jnp.argsort(jax.random.uniform(next(ki), (C * N_COL,)))
    swr = jnp.argsort(jax.random.uniform(next(ki), (N_FOREST, N_RODT)),
                      axis=-1)[:, :N_EST]
    return dict(cond=cond, attn=attn, bag=bag, perm=perm, swr=swr)


# ----------------------------- main ------------------------------------------
if __name__ == "__main__":
    key = jax.random.PRNGKey(0)
    kx, kq, kp = jax.random.split(key, 3)
    X = jax.random.normal(kx, (B, N_COL), jnp.float32)
    quantile = jax.random.uniform(kq, (B, N_COL), jnp.float32)
    params = init_params(kp)

    fwd = jax.jit(lambda x, q: dofen_forward(x, q, params))
    out = fwd(X, quantile)
    pred = jax.block_until_ready(out["pred"])

    assert pred.shape == (B, N_CLASS), pred.shape
    assert bool(jnp.all(jnp.isfinite(pred)))
    print("KERNEL_OK")
</pallas_src>

<mosaic_0001>
module attributes {stable_mosaic.version = 11 : i64} {
  func.func @dofen_kernel(%arg0: memref<16x32xf32, #tpu.memory_space<vmem>>, %arg1: memref<128x8xf32, #tpu.memory_space<vmem>>, %arg2: memref<528x32xf32, #tpu.memory_space<vmem>>, %arg3: memref<256x128xf32, #tpu.memory_space<vmem>>, %arg4: memref<2x3xf32, #tpu.memory_space<vmem>>) attributes {dimension_semantics = [], scalar_prefetch = 0 : i64, scratch_operands = 0 : i64, tpu.core_type = #tpu.core_type<tc>} {
    %c0 = arith.constant 0 : index
    %c0_0 = arith.constant 0 : index
    %0 = vector.load %arg2[%c0, %c0_0] : memref<528x32xf32, #tpu.memory_space<vmem>>, vector<16x32xf32>
    %1 = vector.extract_strided_slice %0 {offsets = [0, 0], sizes = [1, 32], strides = [1, 1]} : vector<16x32xf32> to vector<1x32xf32>
    %2 = vector.extract_strided_slice %0 {offsets = [1, 0], sizes = [1, 32], strides = [1, 1]} : vector<16x32xf32> to vector<1x32xf32>
    %3 = vector.extract_strided_slice %0 {offsets = [2, 0], sizes = [1, 32], strides = [1, 1]} : vector<16x32xf32> to vector<1x32xf32>
    %4 = vector.extract_strided_slice %0 {offsets = [3, 0], sizes = [1, 32], strides = [1, 1]} : vector<16x32xf32> to vector<1x32xf32>
    %5 = vector.extract_strided_slice %0 {offsets = [4, 0], sizes = [1, 32], strides = [1, 1]} : vector<16x32xf32> to vector<1x32xf32>
    %6 = vector.extract_strided_slice %0 {offsets = [5, 0], sizes = [1, 32], strides = [1, 1]} : vector<16x32xf32> to vector<1x32xf32>
    %7 = vector.extract_strided_slice %0 {offsets = [6, 0], sizes = [1, 32], strides = [1, 1]} : vector<16x32xf32> to vector<1x32xf32>
    %8 = vector.extract_strided_slice %0 {offsets = [7, 0], sizes = [1, 32], strides = [1, 1]} : vector<16x32xf32> to vector<1x32xf32>
    %9 = vector.extract_strided_slice %0 {offsets = [8, 0], sizes = [1, 32], strides = [1, 1]} : vector<16x32xf32> to vector<1x32xf32>
    %10 = vector.extract_strided_slice %0 {offsets = [9, 0], sizes = [1, 32], strides = [1, 1]} : vector<16x32xf32> to vector<1x32xf32>
    %11 = vector.extract_strided_slice %0 {offsets = [10, 0], sizes = [1, 32], strides = [1, 1]} : vector<16x32xf32> to vector<1x32xf32>
    %12 = vector.extract_strided_slice %0 {offsets = [11, 0], sizes = [1, 32], strides = [1, 1]} : vector<16x32xf32> to vector<1x32xf32>
    %c16 = arith.constant 16 : index
    %c0_1 = arith.constant 0 : index
    %13 = vector.load %arg2[%c16, %c0_1] : memref<528x32xf32, #tpu.memory_space<vmem>>, vector<128x32xf32>
    %c144 = arith.constant 144 : index
    %c0_2 = arith.constant 0 : index
    %14 = vector.load %arg2[%c144, %c0_2] : memref<528x32xf32, #tpu.memory_space<vmem>>, vector<128x32xf32>
    %c272 = arith.constant 272 : index
    %c0_3 = arith.constant 0 : index
    %15 = vector.load %arg2[%c272, %c0_3] : memref<528x32xf32, #tpu.memory_space<vmem>>, vector<32x32xf32>
    %c304 = arith.constant 304 : index
    %c0_4 = arith.constant 0 : index
    %16 = vector.load %arg2[%c304, %c0_4] : memref<528x32xf32, #tpu.memory_space<vmem>>, vector<32x32xf32>
    %c336 = arith.constant 336 : index
    %c0_5 = arith.constant 0 : index
    %17 = vector.load %arg2[%c336, %c0_5] : memref<528x32xf32, #tpu.memory_space<vmem>>, vector<32x32xf32>
    %c368 = arith.constant 368 : index
    %c0_6 = arith.constant 0 : index
    %18 = vector.load %arg2[%c368, %c0_6] : memref<528x32xf32, #tpu.memory_space<vmem>>, vector<32x32xf32>
    %c400 = arith.constant 400 : index
    %c0_7 = arith.constant 0 : index
    %19 = vector.load %arg2[%c400, %c0_7] : memref<528x32xf32, #tpu.memory_space<vmem>>, vector<32x32xf32>
    %c432 = arith.constant 432 : index
    %c0_8 = arith.constant 0 : index
    %20 = vector.load %arg2[%c432, %c0_8] : memref<528x32xf32, #tpu.memory_space<vmem>>, vector<32x32xf32>
    %c464 = arith.constant 464 : index
    %c0_9 = arith.constant 0 : index
    %21 = vector.load %arg2[%c464, %c0_9] : memref<528x32xf32, #tpu.memory_space<vmem>>, vector<32x32xf32>
    %c496 = arith.constant 496 : index
    %c0_10 = arith.constant 0 : index
    %22 = vector.load %arg2[%c496, %c0_10] : memref<528x32xf32, #tpu.memory_space<vmem>>, vector<32x32xf32>
    %c128 = arith.constant 128 : index
    %c0_11 = arith.constant 0 : index
    %23 = vector.load %arg3[%c128, %c0_11] : memref<256x128xf32, #tpu.memory_space<vmem>>, vector<128x128xf32>
    %c0_12 = arith.constant 0 : index
    %c0_13 = arith.constant 0 : index
    %24 = vector.load %arg1[%c0_12, %c0_13] : memref<128x8xf32, #tpu.memory_space<vmem>>, vector<128x8xf32>
    %c0_14 = arith.constant 0 : index
    %c0_15 = arith.constant 0 : index
    %25 = vector.load %arg0[%c0_14, %c0_15] : memref<16x32xf32, #tpu.memory_space<vmem>>, vector<8x32xf32>
    %cst = arith.constant dense<0.000000e+00> : vector<128x32xf32>
    %26 = tpu.matmul %24, %25, %cst {dimension_numbers = #tpu.dot_dimension_numbers<[1], [0], [0], [1], [0, 0, 1, 1], [], []>} : vector<128x8xf32>, vector<8x32xf32>, vector<128x32xf32> -> vector<128x32xf32>
    %c8 = arith.constant 8 : index
    %c0_16 = arith.constant 0 : index
    %27 = vector.load %arg0[%c8, %c0_16] : memref<16x32xf32, #tpu.memory_space<vmem>>, vector<8x32xf32>
    %cst_17 = arith.constant dense<0.000000e+00> : vector<128x32xf32>
    %28 = tpu.matmul %24, %27, %cst_17 {dimension_numbers = #tpu.dot_dimension_numbers<[1], [0], [0], [1], [0, 0, 1, 1], [], []>} : vector<128x8xf32>, vector<8x32xf32>, vector<128x32xf32> -> vector<128x32xf32>
    %29 = arith.mulf %26, %13 : vector<128x32xf32>
    %30 = arith.addf %29, %14 : vector<128x32xf32>
    %cst_18 = arith.constant dense<0.000000e+00> : vector<128x32xf32>
    %31 = tpu.matmul %28, %22, %cst_18 {dimension_numbers = #tpu.dot_dimension_numbers<[1], [0], [0], [1], [0, 0, 1, 1], [], []>} : vector<128x32xf32>, vector<32x32xf32>, vector<128x32xf32> -> vector<128x32xf32>
    %32 = arith.addf %30, %31 : vector<128x32xf32>
    %cst_19 = arith.constant dense<0.000000e+00> : vector<128xf32>
    %33 = vector.multi_reduction <add>, %32, %cst_19 [1] : vector<128x32xf32> to vector<128xf32>
    %34 = vector.shape_cast %33 : vector<128xf32> to vector<128x1xf32>
    %cst_20 = arith.constant 3.200000e+01 : f32
    %35 = vector.broadcast %cst_20 : f32 to vector<128x1xf32>
    %36 = arith.divf %34, %35 : vector<128x1xf32>
    %37 = vector.broadcast %36 : vector<128x1xf32> to vector<128x32xf32>
    %38 = arith.subf %32, %37 : vector<128x32xf32>
    %39 = arith.mulf %38, %38 : vector<128x32xf32>
    %cst_21 = arith.constant dense<0.000000e+00> : vector<128xf32>
    %40 = vector.multi_reduction <add>, %39, %cst_21 [1] : vector<128x32xf32> to vector<128xf32>
    %41 = vector.shape_cast %40 : vector<128xf32> to vector<128x1xf32>
    %cst_22 = arith.constant 3.200000e+01 : f32
    %42 = vector.broadcast %cst_22 : f32 to vector<128x1xf32>
    %43 = arith.divf %41, %42 : vector<128x1xf32>
    %44 = vector.broadcast %36 : vector<128x1xf32> to vector<128x32xf32>
    %45 = arith.subf %32, %44 : vector<128x32xf32>
    %cst_23 = arith.constant 9.99999974E-6 : f32
    %46 = vector.broadcast %cst_23 : f32 to vector<128x1xf32>
    %47 = arith.addf %43, %46 : vector<128x1xf32>
    %48 = math.rsqrt %47 : vector<128x1xf32>
    %49 = vector.broadcast %48 : vector<128x1xf32> to vector<128x32xf32>
    %50 = arith.mulf %45, %49 : vector<128x32xf32>
    %51 = vector.broadcast %1 : vector<1x32xf32> to vector<128x32xf32>
    %52 = arith.mulf %50, %51 : vector<128x32xf32>
    %53 = vector.broadcast %2 : vector<1x32xf32> to vector<128x32xf32>
    %54 = arith.addf %52, %53 : vector<128x32xf32>
    %cst_24 = arith.constant dense<0.000000e+00> : vector<128x32xf32>
    %55 = tpu.matmul %54, %15, %cst_24 {dimension_numbers = #tpu.dot_dimension_numbers<[1], [0], [0], [1], [0, 0, 1, 1], [], []>} : vector<128x32xf32>, vector<32x32xf32>, vector<128x32xf32> -> vector<128x32xf32>
    %56 = vector.broadcast %3 : vector<1x32xf32> to vector<128x32xf32>
    %57 = arith.addf %55, %56 : vector<128x32xf32>
    %cst_25 = arith.constant dense<0.000000e+00> : vector<128x128xf32>
    %58 = tpu.matmul %57, %54, %cst_25 {dimension_numbers = #tpu.dot_dimension_numbers<[1], [1], [0], [0], [0, 0, 1, 0], [], []>} : vector<128x32xf32>, vector<128x32xf32>, vector<128x128xf32> -> vector<128x128xf32>
    %c0_26 = arith.constant 0 : index
    %c0_27 = arith.constant 0 : index
    %59 = vector.load %arg3[%c0_26, %c0_27] : memref<256x128xf32, #tpu.memory_space<vmem>>, vector<128x128xf32>
    %60 = arith.addf %58, %59 : vector<128x128xf32>
    %cst_28 = arith.constant dense<0xFF800000> : vector<128xf32>
    %61 = vector.multi_reduction <maximumf>, %60, %cst_28 [1] : vector<128x128xf32> to vector<128xf32>
    %62 = vector.shape_cast %61 : vector<128xf32> to vector<128x1xf32>
    %63 = vector.broadcast %62 : vector<128x1xf32> to vector<128x128xf32>
    %64 = arith.subf %60, %63 : vector<128x128xf32>
    %65 = math.exp %64 : vector<128x128xf32>
    %cst_29 = arith.constant dense<0.000000e+00> : vector<128xf32>
    %66 = vector.multi_reduction <add>, %65, %cst_29 [1] : vector<128x128xf32> to vector<128xf32>
    %67 = vector.shape_cast %66 : vector<128xf32> to vector<128x1xf32>
    %68 = tpu.reciprocal %67 {approx = true} : vector<128x1xf32> -> vector<128x1xf32>
    %69 = vector.broadcast %68 : vector<128x1xf32> to vector<128x128xf32>
    %70 = arith.mulf %65, %69 : vector<128x128xf32>
    %cst_30 = arith.constant dense<0.000000e+00> : vector<128x32xf32>
    %71 = tpu.matmul %54, %21, %cst_30 {dimension_numbers = #tpu.dot_dimension_numbers<[1], [0], [0], [1], [0, 0, 1, 1], [], []>} : vector<128x32xf32>, vector<32x32xf32>, vector<128x32xf32> -> vector<128x32xf32>
    %cst_31 = arith.constant dense<0.000000e+00> : vector<128x32xf32>
    %72 = tpu.matmul %70, %71, %cst_31 {dimension_numbers = #tpu.dot_dimension_numbers<[1], [0], [0], [1], [0, 0, 1, 1], [], []>} : vector<128x128xf32>, vector<128x32xf32>, vector<128x32xf32> -> vector<128x32xf32>
    %cst_32 = arith.constant dense<0.000000e+00> : vector<128x32xf32>
    %73 = tpu.matmul %23, %72, %cst_32 {dimension_numbers = #tpu.dot_dimension_numbers<[1], [0], [0], [1], [0, 0, 1, 1], [], []>} : vector<128x128xf32>, vector<128x32xf32>, vector<128x32xf32> -> vector<128x32xf32>
    %cst_33 = arith.constant dense<0.000000e+00> : vector<128x32xf32>
    %74 = tpu.matmul %54, %16, %cst_33 {dimension_numbers = #tpu.dot_dimension_numbers<[1], [0], [0], [1], [0, 0, 1, 1], [], []>} : vector<128x32xf32>, vector<32x32xf32>, vector<128x32xf32> -> vector<128x32xf32>
    %75 = vector.broadcast %4 : vector<1x32xf32> to vector<128x32xf32>
    %76 = arith.addf %74, %75 : vector<128x32xf32>
    %cst_34 = arith.constant dense<0.000000e+00> : vector<128x128xf32>
    %77 = tpu.matmul %76, %54, %cst_34 {dimension_numbers = #tpu.dot_dimension_numbers<[1], [1], [0], [0], [0, 0, 1, 0], [], []>} : vector<128x32xf32>, vector<128x32xf32>, vector<128x128xf32> -> vector<128x128xf32>
    %c0_35 = arith.constant 0 : index
    %c0_36 = arith.constant 0 : index
    %78 = vector.load %arg3[%c0_35, %c0_36] : memref<256x128xf32, #tpu.memory_space<vmem>>, vector<128x128xf32>
    %79 = arith.addf %77, %78 : vector<128x128xf32>
    %cst_37 = arith.constant dense<0xFF800000> : vector<128xf32>
    %80 = vector.multi_reduction <maximumf>, %79, %cst_37 [1] : vector<128x128xf32> to vector<128xf32>
    %81 = vector.shape_cast %80 : vector<128xf32> to vector<128x1xf32>
    %82 = vector.broadcast %81 : vector<128x1xf32> to vector<128x128xf32>
    %83 = arith.subf %79, %82 : vector<128x128xf32>
    %84 = math.exp %83 : vector<128x128xf32>
    %cst_38 = arith.constant dense<0.000000e+00> : vector<128xf32>
    %85 = vector.multi_reduction <add>, %84, %cst_38 [1] : vector<128x128xf32> to vector<128xf32>
    %86 = vector.shape_cast %85 : vector<128xf32> to vector<128x1xf32>
    %87 = tpu.reciprocal %86 {approx = true} : vector<128x1xf32> -> vector<128x1xf32>
    %88 = vector.broadcast %87 : vector<128x1xf32> to vector<128x128xf32>
    %89 = arith.mulf %84, %88 : vector<128x128xf32>
    %cst_39 = arith.constant dense<0.000000e+00> : vector<128x32xf32>
    %90 = tpu.matmul %54, %17, %cst_39 {dimension_numbers = #tpu.dot_dimension_numbers<[1], [0], [0], [1], [0, 0, 1, 1], [], []>} : vector<128x32xf32>, vector<32x32xf32>, vector<128x32xf32> -> vector<128x32xf32>
    %91 = vector.broadcast %5 : vector<1x32xf32> to vector<128x32xf32>
    %92 = arith.addf %90, %91 : vector<128x32xf32>
    %cst_40 = arith.constant dense<0.000000e+00> : vector<128x32xf32>
    %93 = tpu.matmul %89, %92, %cst_40 {dimension_numbers = #tpu.dot_dimension_numbers<[1], [0], [0], [1], [0, 0, 1, 1], [], []>} : vector<128x128xf32>, vector<128x32xf32>, vector<128x32xf32> -> vector<128x32xf32>
    %cst_41 = arith.constant dense<0.000000e+00> : vector<128x32xf32>
    %94 = tpu.matmul %23, %93, %cst_41 {dimension_numbers = #tpu.dot_dimension_numbers<[1], [0], [0], [1], [0, 0, 1, 1], [], []>} : vector<128x128xf32>, vector<128x32xf32>, vector<128x32xf32> -> vector<128x32xf32>
    %cst_42 = arith.constant dense<0.000000e+00> : vector<128x32xf32>
    %95 = tpu.matmul %94, %18, %cst_42 {dimension_numbers = #tpu.dot_dimension_numbers<[1], [0], [0], [1], [0, 0, 1, 1], [], []>} : vector<128x32xf32>, vector<32x32xf32>, vector<128x32xf32> -> vector<128x32xf32>
    %96 = vector.broadcast %6 : vector<1x32xf32> to vector<128x32xf32>
    %97 = arith.addf %95, %96 : vector<128x32xf32>
    %98 = vector.shape_cast %73 : vector<128x32xf32> to vector<16x8x32xf32>
    %99 = vector.shape_cast %97 : vector<128x32xf32> to vector<16x8x32xf32>
    %cst_43 = arith.constant dense<0xFF800000> : vector<16x32xf32>
    %100 = vector.multi_reduction <maximumf>, %98, %cst_43 [1] : vector<16x8x32xf32> to vector<16x32xf32>
    %101 = vector.shape_cast %100 : vector<16x32xf32> to vector<16x1x32xf32>
    %102 = vector.broadcast %101 : vector<16x1x32xf32> to vector<16x8x32xf32>
    %103 = arith.subf %98, %102 : vector<16x8x32xf32>
    %104 = math.exp %103 : vector<16x8x32xf32>
    %cst_44 = arith.constant dense<0.000000e+00> : vector<16x32xf32>
    %105 = vector.multi_reduction <add>, %104, %cst_44 [1] : vector<16x8x32xf32> to vector<16x32xf32>
    %106 = vector.shape_cast %105 : vector<16x32xf32> to vector<16x1x32xf32>
    %107 = tpu.reciprocal %106 {approx = true} : vector<16x1x32xf32> -> vector<16x1x32xf32>
    %108 = vector.broadcast %107 : vector<16x1x32xf32> to vector<16x8x32xf32>
    %109 = arith.mulf %104, %108 : vector<16x8x32xf32>
    %110 = arith.mulf %109, %99 : vector<16x8x32xf32>
    %cst_45 = arith.constant dense<0.000000e+00> : vector<16x32xf32>
    %111 = vector.multi_reduction <add>, %110, %cst_45 [1] : vector<16x8x32xf32> to vector<16x32xf32>
    %cst_46 = arith.constant dense<0.000000e+00> : vector<16xf32>
    %112 = vector.multi_reduction <add>, %111, %cst_46 [1] : vector<16x32xf32> to vector<16xf32>
    %113 = vector.shape_cast %112 : vector<16xf32> to vector<16x1xf32>
    %cst_47 = arith.constant 3.200000e+01 : f32
    %114 = vector.broadcast %cst_47 : f32 to vector<16x1xf32>
    %115 = arith.divf %113, %114 : vector<16x1xf32>
    %116 = vector.broadcast %115 : vector<16x1xf32> to vector<16x32xf32>
    %117 = arith.subf %111, %116 : vector<16x32xf32>
    %118 = arith.mulf %117, %117 : vector<16x32xf32>
    %cst_48 = arith.constant dense<0.000000e+00> : vector<16xf32>
    %119 = vector.multi_reduction <add>, %118, %cst_48 [1] : vector<16x32xf32> to vector<16xf32>
    %120 = vector.shape_cast %119 : vector<16xf32> to vector<16x1xf32>
    %cst_49 = arith.constant 3.200000e+01 : f32
    %121 = vector.broadcast %cst_49 : f32 to vector<16x1xf32>
    %122 = arith.divf %120, %121 : vector<16x1xf32>
    %123 = vector.broadcast %115 : vector<16x1xf32> to vector<16x32xf32>
    %124 = arith.subf %111, %123 : vector<16x32xf32>
    %cst_50 = arith.constant 9.99999974E-6 : f32
    %125 = vector.broadcast %cst_50 : f32 to vector<16x1xf32>
    %126 = arith.addf %122, %125 : vector<16x1xf32>
    %127 = math.rsqrt %126 : vector<16x1xf32>
    %128 = vector.broadcast %127 : vector<16x1xf32> to vector<16x32xf32>
    %129 = arith.mulf %124, %128 : vector<16x32xf32>
    %130 = vector.broadcast %7 : vector<1x32xf32> to vector<16x32xf32>
    %131 = arith.mulf %129, %130 : vector<16x32xf32>
    %132 = vector.broadcast %8 : vector<1x32xf32> to vector<16x32xf32>
    %133 = arith.addf %131, %132 : vector<16x32xf32>
    %cst_51 = arith.constant dense<0.000000e+00> : vector<16x32xf32>
    %134 = tpu.matmul %133, %19, %cst_51 {dimension_numbers = #tpu.dot_dimension_numbers<[1], [0], [0], [1], [0, 0, 1, 1], [], []>} : vector<16x32xf32>, vector<32x32xf32>, vector<16x32xf32> -> vector<16x32xf32>
    %135 = vector.broadcast %9 : vector<1x32xf32> to vector<16x32xf32>
    %136 = arith.addf %134, %135 : vector<16x32xf32>
    %cst_52 = arith.constant 0.000000e+00 : f32
    %137 = vector.broadcast %cst_52 : f32 to vector<16x32xf32>
    %138 = arith.maximumf %136, %137 : vector<16x32xf32>
    %cst_53 = arith.constant dense<0.000000e+00> : vector<16xf32>
    %139 = vector.multi_reduction <add>, %138, %cst_53 [1] : vector<16x32xf32> to vector<16xf32>
    %140 = vector.shape_cast %139 : vector<16xf32> to vector<16x1xf32>
    %cst_54 = arith.constant 3.200000e+01 : f32
    %141 = vector.broadcast %cst_54 : f32 to vector<16x1xf32>
    %142 = arith.divf %140, %141 : vector<16x1xf32>
    %143 = vector.broadcast %142 : vector<16x1xf32> to vector<16x32xf32>
    %144 = arith.subf %138, %143 : vector<16x32xf32>
    %145 = arith.mulf %144, %144 : vector<16x32xf32>
    %cst_55 = arith.constant dense<0.000000e+00> : vector<16xf32>
    %146 = vector.multi_reduction <add>, %145, %cst_55 [1] : vector<16x32xf32> to vector<16xf32>
    %147 = vector.shape_cast %146 : vector<16xf32> to vector<16x1xf32>
    %cst_56 = arith.constant 3.200000e+01 : f32
    %148 = vector.broadcast %cst_56 : f32 to vector<16x1xf32>
    %149 = arith.divf %147, %148 : vector<16x1xf32>
    %150 = vector.broadcast %142 : vector<16x1xf32> to vector<16x32xf32>
    %151 = arith.subf %138, %150 : vector<16x32xf32>
    %cst_57 = arith.constant 9.99999974E-6 : f32
    %152 = vector.broadcast %cst_57 : f32 to vector<16x1xf32>
    %153 = arith.addf %149, %152 : vector<16x1xf32>
    %154 = math.rsqrt %153 : vector<16x1xf32>
    %155 = vector.broadcast %154 : vector<16x1xf32> to vector<16x32xf32>
    %156 = arith.mulf %151, %155 : vector<16x32xf32>
    %157 = vector.broadcast %10 : vector<1x32xf32> to vector<16x32xf32>
    %158 = arith.mulf %156, %157 : vector<16x32xf32>
    %159 = vector.broadcast %11 : vector<1x32xf32> to vector<16x32xf32>
    %160 = arith.addf %158, %159 : vector<16x32xf32>
    %161 = vector.shape_cast %160 : vector<16x32xf32> to vector<2x8x32xf32>
    %cst_58 = arith.constant dense<0.000000e+00> : vector<2x32xf32>
    %162 = vector.multi_reduction <add>, %161, %cst_58 [1] : vector<2x8x32xf32> to vector<2x32xf32>
    %cst_59 = arith.constant 8.000000e+00 : f32
    %163 = vector.broadcast %cst_59 : f32 to vector<2x32xf32>
    %164 = arith.divf %162, %163 : vector<2x32xf32>
    %cst_60 = arith.constant dense<0.000000e+00> : vector<2x32xf32>
    %165 = tpu.matmul %164, %20, %cst_60 {dimension_numbers = #tpu.dot_dimension_numbers<[1], [0], [0], [1], [0, 0, 1, 1], [], []>} : vector<2x32xf32>, vector<32x32xf32>, vector<2x32xf32> -> vector<2x32xf32>
    %166 = vector.broadcast %12 : vector<1x32xf32> to vector<2x32xf32>
    %167 = arith.addf %165, %166 : vector<2x32xf32>
    %168 = vector.extract_strided_slice %167 {offsets = [0, 0], sizes = [2, 3], strides = [1, 1]} : vector<2x32xf32> to vector<2x3xf32>
    %c0_61 = arith.constant 0 : index
    %c0_62 = arith.constant 0 : index
    %169 = vector.load %arg4[%c0_61, %c0_62] : memref<2x3xf32, #tpu.memory_space<vmem>>, vector<2x3xf32>
    tpu.vector_store %arg4[%c0_61, %c0_62], %168 {strides = array<i32>} : memref<2x3xf32, #tpu.memory_space<vmem>>, vector<2x3xf32>,
    return
  }
}

</mosaic_0001>

<llo_original>
// kernel: _lambda_.1
$region0: #{_lambda_.1}
  #allocation0 [shape = 'u32[]', space=smem, size = 0x4, offset = 0x4, fixed_abs, tag = 'smem constant byte address 0x4 - core index']
  #allocation1 [shape = 'u32[144,128]{1,0:T(1,128)}', space=vmem, size = 0x12000, scoped, tag = 'internal scratch']
  %s0 = inlined_call_operand.vmem [shape: f32[16,32], index: 0, kind: input, shape index: {}]
  %s1 = inlined_call_operand.vmem [shape: f32[128,8], index: 1, kind: input, shape index: {}]
  %s2 = inlined_call_operand.vmem [shape: f32[528,32], index: 2, kind: input, shape index: {}]
  %s3 = inlined_call_operand.vmem [shape: f32[256,128], index: 3, kind: input, shape index: {}]
  %s4 = inlined_call_operand.hbm [shape: f32[2,3], index: 4, kind: output, shape index: {}]
  %s5 = sld [smem:[#allocation0]]
  $region26: #{_lambda_.1} parent=0
    _
  %s7 = ssub.s32 1, %s5
  %s8 = scalar_select 0, %s7, %s5
  $region1: #{_lambda_.1} parent=0
    #allocation2 [shape = 'u8[1024]{0}', space=vmem, size = 0x400, scoped, tag = 'output window, operand 0, single buffered']
    #allocation3 [shape = 's32[1]{0}', space=sflag, size = 0x4, scoped, tag = 'scoped memory for _lambda_.1']
    %9 = vsyncpa [#allocation3], 0
    // Predicated region
    $region2: #{_lambda_.1} parent=1 // pred_check
      _
    $region3: #{_lambda_.1} parent=1 // pred_check_branch
      %11 = sbr.rel (0) target = $region5
    $region4: #{_lambda_.1} parent=1 // pred_region
      _
    $region5: #{_lambda_.1} parent=1 // pred_fallthru
      _
    // Predicated region
    $region6: #{_lambda_.1} parent=1 // pred_check
      _
    $region7: #{_lambda_.1} parent=1 // pred_check_branch
      %13 = sbr.rel (0) target = $region9
    $region8: #{_lambda_.1} parent=1 // pred_region
      _
    $region9: #{_lambda_.1} parent=1 // pred_fallthru
      _
    // Predicated region
    $region10: #{_lambda_.1} parent=1 // pred_check
      _
    $region11: #{_lambda_.1} parent=1 // pred_check_branch
      %15 = sbr.rel (0) target = $region13
    $region12: #{_lambda_.1} parent=1 // pred_region
      _
    $region13: #{_lambda_.1} parent=1 // pred_fallthru
      _
    // Predicated region
    $region14: #{_lambda_.1} parent=1 // pred_check
      _
    $region15: #{_lambda_.1} parent=1 // pred_check_branch
      %17 = sbr.rel (0) target = $region17
    $region16: #{_lambda_.1} parent=1 // pred_region
      _
    $region17: #{_lambda_.1} parent=1 // pred_fallthru
      _
    %v18 = vld [vmem:[%s2] sm:$0xff]
    %v19 = vld [vmem:[%s2 + $0x8] sm:$0xff]
    %v20 = vld [vmem:[%s2 + $0x10] sm:$0xff]
    %v21 = vld [vmem:[%s2 + $0x18] sm:$0xff]
    %v22 = vld [vmem:[%s2 + $0x20] sm:$0xff]
    %v23 = vld [vmem:[%s2 + $0x28] sm:$0xff]
    %v24 = vld [vmem:[%s2 + $0x30] sm:$0xff]
    %v25 = vld [vmem:[%s2 + $0x38] sm:$0xff]
    %v26 = vld [vmem:[%s2 + $0x40] sm:$0xff]
    %v27 = vld [vmem:[%s2 + $0x48] sm:$0xff]
    %v28 = vld [vmem:[%s2 + $0x50] sm:$0xff]
    %v29 = vld [vmem:[%s2 + $0x58] sm:$0xff]
    %v30 = vld [vmem:[%s2 + $0x60] sm:$0xff]
    %v31 = vld [vmem:[%s2 + $0x68] sm:$0xff]
    %v32 = vld [vmem:[%s2 + $0x70] sm:$0xff]
    %v33 = vld [vmem:[%s2 + $0x78] sm:$0xff]
    %v34 = vld [vmem:[%s2 + $0x80] sm:$0xff]
    %v35 = vld [vmem:[%s2 + $0x88] sm:$0xff]
    %v36 = vld [vmem:[%s2 + $0x90] sm:$0xff]
    %v37 = vld [vmem:[%s2 + $0x98] sm:$0xff]
    %v38 = vld [vmem:[%s2 + $0xa0] sm:$0xff]
    %v39 = vld [vmem:[%s2 + $0xa8] sm:$0xff]
    %v40 = vld [vmem:[%s2 + $0xb0] sm:$0xff]
    %v41 = vld [vmem:[%s2 + $0xb8] sm:$0xff]
    %v42 = vld [vmem:[%s2 + $0xc0] sm:$0xff]
    %v43 = vld [vmem:[%s2 + $0xc8] sm:$0xff]
    %v44 = vld [vmem:[%s2 + $0xd0] sm:$0xff]
    %v45 = vld [vmem:[%s2 + $0xd8] sm:$0xff]
    %v46 = vld [vmem:[%s2 + $0xe0] sm:$0xff]
    %v47 = vld [vmem:[%s2 + $0xe8] sm:$0xff]
    %v48 = vld [vmem:[%s2 + $0xf0] sm:$0xff]
    %v49 = vld [vmem:[%s2 + $0xf8] sm:$0xff]
    %v50 = vld [vmem:[%s2 + $0x100] sm:$0xff]
    %v51 = vld [vmem:[%s2 + $0x108] sm:$0xff]
    %v52 = vld [vmem:[%s2 + $0x110] sm:$0xff]
    %v53 = vld [vmem:[%s2 + $0x118] sm:$0xff]
    %v54 = vld [vmem:[%s2 + $0x120] sm:$0xff]
    %v55 = vld [vmem:[%s2 + $0x128] sm:$0xff]
    %v56 = vld [vmem:[%s2 + $0x130] sm:$0xff]
    %v57 = vld [vmem:[%s2 + $0x138] sm:$0xff]
    %v58 = vld [vmem:[%s2 + $0x140] sm:$0xff]
    %v59 = vld [vmem:[%s2 + $0x148] sm:$0xff]
    %v60 = vld [vmem:[%s2 + $0x150] sm:$0xff]
    %v61 = vld [vmem:[%s2 + $0x158] sm:$0xff]
    %v62 = vld [vmem:[%s2 + $0x160] sm:$0xff]
    %v63 = vld [vmem:[%s2 + $0x168] sm:$0xff]
    %v64 = vld [vmem:[%s2 + $0x170] sm:$0xff]
    %v65 = vld [vmem:[%s2 + $0x178] sm:$0xff]
    %v66 = vld [vmem:[%s2 + $0x180] sm:$0xff]
    %v67 = vld [vmem:[%s2 + $0x188] sm:$0xff]
    %v68 = vld [vmem:[%s2 + $0x190] sm:$0xff]
    %v69 = vld [vmem:[%s2 + $0x198] sm:$0xff]
    %v70 = vld [vmem:[%s2 + $0x1a0] sm:$0xff]
    %v71 = vld [vmem:[%s2 + $0x1a8] sm:$0xff]
    %v72 = vld [vmem:[%s2 + $0x1b0] sm:$0xff]
    %v73 = vld [vmem:[%s2 + $0x1b8] sm:$0xff]
    %v74 = vld [vmem:[%s2 + $0x1c0] sm:$0xff]
    %v75 = vld [vmem:[%s2 + $0x1c8] sm:$0xff]
    %v76 = vld [vmem:[%s2 + $0x1d0] sm:$0xff]
    %v77 = vld [vmem:[%s2 + $0x1d8] sm:$0xff]
    %v78 = vld [vmem:[%s2 + $0x1e0] sm:$0xff]
    %v79 = vld [vmem:[%s2 + $0x1e8] sm:$0xff]
    %v80 = vld [vmem:[%s2 + $0x1f0] sm:$0xff]
    %v81 = vld [vmem:[%s2 + $0x1f8] sm:$0xff]
    %v82 = vld [vmem:[%s2 + $0x200] sm:$0xff]
    %v83 = vld [vmem:[%s2 + $0x208] sm:$0xff]
    %v84 = vld [vmem:[%s3 + $0x80] sm:$0xff]
    %v85 = vld [vmem:[%s3 + $0x88] sm:$0xff]
    %v86 = vld [vmem:[%s3 + $0x90] sm:$0xff]
    %v87 = vld [vmem:[%s3 + $0x98] sm:$0xff]
    %v88 = vld [vmem:[%s3 + $0xa0] sm:$0xff]
    %v89 = vld [vmem:[%s3 + $0xa8] sm:$0xff]
    %v90 = vld [vmem:[%s3 + $0xb0] sm:$0xff]
    %v91 = vld [vmem:[%s3 + $0xb8] sm:$0xff]
    %v92 = vld [vmem:[%s3 + $0xc0] sm:$0xff]
    %v93 = vld [vmem:[%s3 + $0xc8] sm:$0xff]
    %v94 = vld [vmem:[%s3 + $0xd0] sm:$0xff]
    %v95 = vld [vmem:[%s3 + $0xd8] sm:$0xff]
    %v96 = vld [vmem:[%s3 + $0xe0] sm:$0xff]
    %v97 = vld [vmem:[%s3 + $0xe8] sm:$0xff]
    %v98 = vld [vmem:[%s3 + $0xf0] sm:$0xff]
    %v99 = vld [vmem:[%s3 + $0xf8] sm:$0xff]
    %v100 = vld [vmem:[%s1] sm:$0xff]
    %v101 = vld [vmem:[%s1 + $0x8] sm:$0xff]
    %v102 = vld [vmem:[%s1 + $0x10] sm:$0xff]
    %v103 = vld [vmem:[%s1 + $0x18] sm:$0xff]
    %v104 = vld [vmem:[%s1 + $0x20] sm:$0xff]
    %v105 = vld [vmem:[%s1 + $0x28] sm:$0xff]
    %v106 = vld [vmem:[%s1 + $0x30] sm:$0xff]
    %v107 = vld [vmem:[%s1 + $0x38] sm:$0xff]
    %v108 = vld [vmem:[%s1 + $0x40] sm:$0xff]
    %v109 = vld [vmem:[%s1 + $0x48] sm:$0xff]
    %v110 = vld [vmem:[%s1 + $0x50] sm:$0xff]
    %v111 = vld [vmem:[%s1 + $0x58] sm:$0xff]
    %v112 = vld [vmem:[%s1 + $0x60] sm:$0xff]
    %v113 = vld [vmem:[%s1 + $0x68] sm:$0xff]
    %v114 = vld [vmem:[%s1 + $0x70] sm:$0xff]
    %v115 = vld [vmem:[%s1 + $0x78] sm:$0xff]
    %v116 = vld [vmem:[%s0] sm:$0xff]
    %vm117 = vcmask 64512
    %v119 = vsel %vm117, %v100, 0
    %v122 = vsel %vm117, %v101, 0
    %v125 = vsel %vm117, %v102, 0
    %v128 = vsel %vm117, %v103, 0
    %v131 = vsel %vm117, %v104, 0
    %v134 = vsel %vm117, %v105, 0
    %v137 = vsel %vm117, %v106, 0
    %v140 = vsel %vm117, %v107, 0
    %v143 = vsel %vm117, %v108, 0
    %v146 = vsel %vm117, %v109, 0
    %v149 = vsel %vm117, %v110, 0
    %v152 = vsel %vm117, %v111, 0
    %v155 = vsel %vm117, %v112, 0
    %v158 = vsel %vm117, %v113, 0
    %v161 = vsel %vm117, %v114, 0
    %v164 = vsel %vm117, %v115, 0
    %166 = vmatprep.subr.mxu0 0.0
    %167 = vmatpush1.msra.mxu0 %v116
    %168 = vmatprep.subr.mxu0 0.0
    %169 = vmatpush1.msra.mxu0 0.0
    %170 = vmatprep.subr.mxu0 0.0
    %171 = vmatpush1.msra.mxu0 0.0
    %172 = vmatprep.subr.mxu0 0.0
    %173 = vmatpush1.msra.mxu0 0.0
    %174 = vmatprep.subr.mxu0 0.0
    %175 = vmatpush1.msra.mxu0 0.0
    %176 = vmatprep.subr.mxu0 0.0
    %177 = vmatpush1.msra.mxu0 0.0
    %178 = vmatprep.subr.mxu0 0.0
    %179 = vmatpush1.msra.mxu0 0.0
    %180 = vmatprep.subr.mxu0 0.0
    %181 = vmatpush1.msra.mxu0 0.0
    %182 = vmatprep.subr.mxu0 0.0
    %183 = vmatpush1.msra.mxu0 0.0
    %184 = vmatprep.subr.mxu0 0.0
    %185 = vmatpush1.msra.mxu0 0.0
    %186 = vmatprep.subr.mxu0 0.0
    %187 = vmatpush1.msra.mxu0 0.0
    %188 = vmatprep.subr.mxu0 0.0
    %189 = vmatpush1.msra.mxu0 0.0
    %190 = vmatprep.subr.mxu0 0.0
    %191 = vmatpush1.msra.mxu0 0.0
    %192 = vmatprep.subr.mxu0 0.0
    %193 = vmatpush1.msra.mxu0 0.0
    %194 = vmatprep.subr.mxu0 0.0
    %195 = vmatpush1.msra.mxu0 0.0
    %196 = vmatprep.subr.mxu0 0.0
    %197 = vmatpush1.msra.mxu0 0.0
    %198 = vmatprep.subr.mxu0 0.0
    %199 = vmatpush1.msra.mxu0 0.0
    %200 = vmatprep.subr.mxu0 0.0
    %201 = vmatpush1.msra.mxu0 0.0
    %202 = vmatprep.subr.mxu0 0.0
    %203 = vmatpush1.msra.mxu0 0.0
    %204 = vmatprep.subr.mxu0 0.0
    %205 = vmatpush1.msra.mxu0 0.0
    %206 = vmatprep.subr.mxu0 0.0
    %207 = vmatpush1.msra.mxu0 0.0
    %208 = vmatprep.subr.mxu0 0.0
    %209 = vmatpush1.msra.mxu0 0.0
    %210 = vmatprep.subr.mxu0 0.0
    %211 = vmatpush1.msra.mxu0 0.0
    %212 = vmatprep.subr.mxu0 0.0
    %213 = vmatpush1.msra.mxu0 0.0
    %214 = vmatprep.subr.mxu0 0.0
    %215 = vmatpush1.msra.mxu0 0.0
    %216 = vmatprep.subr.mxu0 0.0
    %217 = vmatpush1.msra.mxu0 0.0
    %218 = vmatprep.subr.mxu0 0.0
    %219 = vmatpush1.msra.mxu0 0.0
    %220 = vmatprep.subr.mxu0 0.0
    %221 = vmatpush1.msra.mxu0 0.0
    %222 = vmatprep.subr.mxu0 0.0
    %223 = vmatpush1.msra.mxu0 0.0
    %224 = vmatprep.subr.mxu0 0.0
    %225 = vmatpush1.msra.mxu0 0.0
    %226 = vmatprep.subr.mxu0 0.0
    %227 = vmatpush1.msra.mxu0 0.0
    %228 = vmatprep.subr.mxu0 0.0
    %229 = vmatpush1.msra.mxu0 0.0
    %230 = vmatprep.mubr.f32.mxu0 0.0
    %231 = vmatmul.mubr.f32.gmra.mrb[0].mxu0 %v119
    %v232 = vpop.f32.mrb[0].mxu0
    %v233 = vadd.f32 0.0, %v232
    %v234 = vpop.f32.mrb[0].mxu0
    %235 = vmatprep.mubr.f32.mxu0 0.0
    %236 = vmatmul.mubr.f32.gmra.mrb[0].mxu0 %v122
    %v237 = vpop.f32.mrb[0].mxu0
    %v238 = vadd.f32 0.0, %v237
    %v239 = vpop.f32.mrb[0].mxu0
    %240 = vmatprep.mubr.f32.mxu0 0.0
    %241 = vmatmul.mubr.f32.gmra.mrb[0].mxu0 %v125
    %v242 = vpop.f32.mrb[0].mxu0
    %v243 = vadd.f32 0.0, %v242
    %v244 = vpop.f32.mrb[0].mxu0
    %245 = vmatprep.mubr.f32.mxu0 0.0
    %246 = vmatmul.mubr.f32.gmra.mrb[0].mxu0 %v128
    %v247 = vpop.f32.mrb[0].mxu0
    %v248 = vadd.f32 0.0, %v247
    %v249 = vpop.f32.mrb[0].mxu0
    %250 = vmatprep.mubr.f32.mxu0 0.0
    %251 = vmatmul.mubr.f32.gmra.mrb[0].mxu0 %v131
    %v252 = vpop.f32.mrb[0].mxu0
    %v253 = vadd.f32 0.0, %v252
    %v254 = vpop.f32.mrb[0].mxu0
    %255 = vmatprep.mubr.f32.mxu0 0.0
    %256 = vmatmul.mubr.f32.gmra.mrb[0].mxu0 %v134
    %v257 = vpop.f32.mrb[0].mxu0
    %v258 = vadd.f32 0.0, %v257
    %v259 = vpop.f32.mrb[0].mxu0
    %260 = vmatprep.mubr.f32.mxu0 0.0
    %261 = vmatmul.mubr.f32.gmra.mrb[0].mxu0 %v137
    %v262 = vpop.f32.mrb[0].mxu0
    %v263 = vadd.f32 0.0, %v262
    %v264 = vpop.f32.mrb[0].mxu0
    %265 = vmatprep.mubr.f32.mxu0 0.0
    %266 = vmatmul.mubr.f32.gmra.mrb[0].mxu0 %v140
    %v267 = vpop.f32.mrb[0].mxu0
    %v268 = vadd.f32 0.0, %v267
    %v269 = vpop.f32.mrb[0].mxu0
    %270 = vmatprep.mubr.f32.mxu0 0.0
    %271 = vmatmul.mubr.f32.gmra.mrb[0].mxu0 %v143
    %v272 = vpop.f32.mrb[0].mxu0
    %v273 = vadd.f32 0.0, %v272
    %v274 = vpop.f32.mrb[0].mxu0
    %275 = vmatprep.mubr.f32.mxu0 0.0
    %276 = vmatmul.mubr.f32.gmra.mrb[0].mxu0 %v146
    %v277 = vpop.f32.mrb[0].mxu0
    %v278 = vadd.f32 0.0, %v277
    %v279 = vpop.f32.mrb[0].mxu0
    %280 = vmatprep.mubr.f32.mxu0 0.0
    %281 = vmatmul.mubr.f32.gmra.mrb[0].mxu0 %v149
    %v282 = vpop.f32.mrb[0].mxu0
    %v283 = vadd.f32 0.0, %v282
    %v284 = vpop.f32.mrb[0].mxu0
    %285 = vmatprep.mubr.f32.mxu0 0.0
    %286 = vmatmul.mubr.f32.gmra.mrb[0].mxu0 %v152
    %v287 = vpop.f32.mrb[0].mxu0
    %v288 = vadd.f32 0.0, %v287
    %v289 = vpop.f32.mrb[0].mxu0
    %290 = vmatprep.mubr.f32.mxu0 0.0
    %291 = vmatmul.mubr.f32.gmra.mrb[0].mxu0 %v155
    %v292 = vpop.f32.mrb[0].mxu0
    %v293 = vadd.f32 0.0, %v292
    %v294 = vpop.f32.mrb[0].mxu0
    %295 = vmatprep.mubr.f32.mxu0 0.0
    %296 = vmatmul.mubr.f32.gmra.mrb[0].mxu0 %v158
    %v297 = vpop.f32.mrb[0].mxu0
    %v298 = vadd.f32 0.0, %v297
    %v299 = vpop.f32.mrb[0].mxu0
    %300 = vmatprep.mubr.f32.mxu0 0.0
    %301 = vmatmul.mubr.f32.gmra.mrb[0].mxu0 %v161
    %v302 = vpop.f32.mrb[0].mxu0
    %v303 = vadd.f32 0.0, %v302
    %v304 = vpop.f32.mrb[0].mxu0
    %305 = vmatprep.mubr.f32.mxu0 0.0
    %306 = vmatmul.mubr.f32.gmra.mrb[0].mxu0 %v164
    %v307 = vpop.f32.mrb[0].mxu0
    %v308 = vadd.f32 0.0, %v307
    %v309 = vpop.f32.mrb[0].mxu0
    %310 = vdwg.mxu0
    %v311 = vld [vmem:[%s0 + $0x8] sm:$0xff]
    %312 = vmatprep.subr.mxu0 0.0
    %313 = vmatpush1.msra.mxu0 %v311
    %314 = vmatprep.subr.mxu0 0.0
    %315 = vmatpush1.msra.mxu0 0.0
    %316 = vmatprep.subr.mxu0 0.0
    %317 = vmatpush1.msra.mxu0 0.0
    %318 = vmatprep.subr.mxu0 0.0
    %319 = vmatpush1.msra.mxu0 0.0
    %320 = vmatprep.subr.mxu0 0.0
    %321 = vmatpush1.msra.mxu0 0.0
    %322 = vmatprep.subr.mxu0 0.0
    %323 = vmatpush1.msra.mxu0 0.0
    %324 = vmatprep.subr.mxu0 0.0
    %325 = vmatpush1.msra.mxu0 0.0
    %326 = vmatprep.subr.mxu0 0.0
    %327 = vmatpush1.msra.mxu0 0.0
    %328 = vmatprep.subr.mxu0 0.0
    %329 = vmatpush1.msra.mxu0 0.0
    %330 = vmatprep.subr.mxu0 0.0
    %331 = vmatpush1.msra.mxu0 0.0
    %332 = vmatprep.subr.mxu0 0.0
    %333 = vmatpush1.msra.mxu0 0.0
    %334 = vmatprep.subr.mxu0 0.0
    %335 = vmatpush1.msra.mxu0 0.0
    %336 = vmatprep.subr.mxu0 0.0
    %337 = vmatpush1.msra.mxu0 0.0
    %338 = vmatprep.subr.mxu0 0.0
    %339 = vmatpush1.msra.mxu0 0.0
    %340 = vmatprep.subr.mxu0 0.0
    %341 = vmatpush1.msra.mxu0 0.0
    %342 = vmatprep.subr.mxu0 0.0
    %343 = vmatpush1.msra.mxu0 0.0
    %344 = vmatprep.subr.mxu0 0.0
    %345 = vmatpush1.msra.mxu0 0.0
    %346 = vmatprep.subr.mxu0 0.0
    %347 = vmatpush1.msra.mxu0 0.0
    %348 = vmatprep.subr.mxu0 0.0
    %349 = vmatpush1.msra.mxu0 0.0
    %350 = vmatprep.subr.mxu0 0.0
    %351 = vmatpush1.msra.mxu0 0.0
    %352 = vmatprep.subr.mxu0 0.0
    %353 = vmatpush1.msra.mxu0 0.0
    %354 = vmatprep.subr.mxu0 0.0
    %355 = vmatpush1.msra.mxu0 0.0
    %356 = vmatprep.subr.mxu0 0.0
    %357 = vmatpush1.msra.mxu0 0.0
    %358 = vmatprep.subr.mxu0 0.0
    %359 = vmatpush1.msra.mxu0 0.0
    %360 = vmatprep.subr.mxu0 0.0
    %361 = vmatpush1.msra.mxu0 0.0
    %362 = vmatprep.subr.mxu0 0.0
    %363 = vmatpush1.msra.mxu0 0.0
    %364 = vmatprep.subr.mxu0 0.0
    %365 = vmatpush1.msra.mxu0 0.0
    %366 = vmatprep.subr.mxu0 0.0
    %367 = vmatpush1.msra.mxu0 0.0
    %368 = vmatprep.subr.mxu0 0.0
    %369 = vmatpush1.msra.mxu0 0.0
    %370 = vmatprep.subr.mxu0 0.0
    %371 = vmatpush1.msra.mxu0 0.0
    %372 = vmatprep.subr.mxu0 0.0
    %373 = vmatpush1.msra.mxu0 0.0
    %374 = vmatprep.subr.mxu0 0.0
    %375 = vmatpush1.msra.mxu0 0.0
    %376 = vmatprep.mubr.f32.mxu0 0.0
    %377 = vmatmul.mubr.f32.gmra.mrb[0].mxu0 %v119
    %v378 = vpop.f32.mrb[0].mxu0
    %v379 = vadd.f32 0.0, %v378
    %v380 = vpop.f32.mrb[0].mxu0
    %381 = vmatprep.mubr.f32.mxu0 0.0
    %382 = vmatmul.mubr.f32.gmra.mrb[0].mxu0 %v122
    %v383 = vpop.f32.mrb[0].mxu0
    %v384 = vadd.f32 0.0, %v383
    %v385 = vpop.f32.mrb[0].mxu0
    %386 = vmatprep.mubr.f32.mxu0 0.0
    %387 = vmatmul.mubr.f32.gmra.mrb[0].mxu0 %v125
    %v388 = vpop.f32.mrb[0].mxu0
    %v389 = vadd.f32 0.0, %v388
    %v390 = vpop.f32.mrb[0].mxu0
    %391 = vmatprep.mubr.f32.mxu0 0.0
    %392 = vmatmul.mubr.f32.gmra.mrb[0].mxu0 %v128
    %v393 = vpop.f32.mrb[0].mxu0
    %v394 = vadd.f32 0.0, %v393
    %v395 = vpop.f32.mrb[0].mxu0
    %396 = vmatprep.mubr.f32.mxu0 0.0
    %397 = vmatmul.mubr.f32.gmra.mrb[0].mxu0 %v131
    %v398 = vpop.f32.mrb[0].mxu0
    %v399 = vadd.f32 0.0, %v398
    %v400 = vpop.f32.mrb[0].mxu0
    %401 = vmatprep.mubr.f32.mxu0 0.0
    %402 = vmatmul.mubr.f32.gmra.mrb[0].mxu0 %v134
    %v403 = vpop.f32.mrb[0].mxu0
    %v404 = vadd.f32 0.0, %v403
    %v405 = vpop.f32.mrb[0].mxu0
    %406 = vmatprep.mubr.f32.mxu0 0.0
    %407 = vmatmul.mubr.f32.gmra.mrb[0].mxu0 %v137
    %v408 = vpop.f32.mrb[0].mxu0
    %v409 = vadd.f32 0.0, %v408
    %v410 = vpop.f32.mrb[0].mxu0
    %411 = vmatprep.mubr.f32.mxu0 0.0
    %412 = vmatmul.mubr.f32.gmra.mrb[0].mxu0 %v140
    %v413 = vpop.f32.mrb[0].mxu0
    %v414 = vadd.f32 0.0, %v413
    %v415 = vpop.f32.mrb[0].mxu0
    %416 = vmatprep.mubr.f32.mxu0 0.0
    %417 = vmatmul.mubr.f32.gmra.mrb[0].mxu0 %v143
    %v418 = vpop.f32.mrb[0].mxu0
    %v419 = vadd.f32 0.0, %v418
    %v420 = vpop.f32.mrb[0].mxu0
    %421 = vmatprep.mubr.f32.mxu0 0.0
    %422 = vmatmul.mubr.f32.gmra.mrb[0].mxu0 %v146
    %v423 = vpop.f32.mrb[0].mxu0
    %v424 = vadd.f32 0.0, %v423
    %v425 = vpop.f32.mrb[0].mxu0
    %426 = vmatprep.mubr.f32.mxu0 0.0
    %427 = vmatmul.mubr.f32.gmra.mrb[0].mxu0 %v149
    %v428 = vpop.f32.mrb[0].mxu0
    %v429 = vadd.f32 0.0, %v428
    %v430 = vpop.f32.mrb[0].mxu0
    %431 = vmatprep.mubr.f32.mxu0 0.0
    %432 = vmatmul.mubr.f32.gmra.mrb[0].mxu0 %v152
    %v433 = vpop.f32.mrb[0].mxu0
    %v434 = vadd.f32 0.0, %v433
    %v435 = vpop.f32.mrb[0].mxu0
    %436 = vmatprep.mubr.f32.mxu0 0.0
    %437 = vmatmul.mubr.f32.gmra.mrb[0].mxu0 %v155
    %v438 = vpop.f32.mrb[0].mxu0
    %v439 = vadd.f32 0.0, %v438
    %v440 = vpop.f32.mrb[0].mxu0
    %441 = vmatprep.mubr.f32.mxu0 0.0
    %442 = vmatmul.mubr.f32.gmra.mrb[0].mxu0 %v158
    %v443 = vpop.f32.mrb[0].mxu0
    %v444 = vadd.f32 0.0, %v443
    %v445 = vpop.f32.mrb[0].mxu0
    %446 = vmatprep.mubr.f32.mxu0 0.0
    %447 = vmatmul.mubr.f32.gmra.mrb[0].mxu0 %v161
    %v448 = vpop.f32.mrb[0].mxu0
    %v449 = vadd.f32 0.0, %v448
    %v450 = vpop.f32.mrb[0].mxu0
    %451 = vmatprep.mubr.f32.mxu0 0.0
    %452 = vmatmul.mubr.f32.gmra.mrb[0].mxu0 %v164
    %v453 = vpop.f32.mrb[0].mxu0
    %v454 = vadd.f32 0.0, %v453
    %v455 = vpop.f32.mrb[0].mxu0
    %456 = vdwg.mxu0
    %v457 = vmul.f32 %v233, %v20
    %v458 = vmul.f32 %v238, %v21
    %v459 = vmul.f32 %v243, %v22
    %v460 = vmul.f32 %v248, %v23
    %v461 = vmul.f32 %v253, %v24
    %v462 = vmul.f32 %v258, %v25
    %v463 = vmul.f32 %v263, %v26
    %v464 = vmul.f32 %v268, %v27
    %v465 = vmul.f32 %v273, %v28
    %v466 = vmul.f32 %v278, %v29
    %v467 = vmul.f32 %v283, %v30
    %v468 = vmul.f32 %v288, %v31
    %v469 = vmul.f32 %v293, %v32
    %v470 = vmul.f32 %v298, %v33
    %v471 = vmul.f32 %v303, %v34
    %v472 = vmul.f32 %v308, %v35
    %v473 = vadd.f32 %v457, %v36
    %v474 = vadd.f32 %v458, %v37
    %v475 = vadd.f32 %v459, %v38
    %v476 = vadd.f32 %v460, %v39
    %v477 = vadd.f32 %v461, %v40
    %v478 = vadd.f32 %v462, %v41
    %v479 = vadd.f32 %v463, %v42
    %v480 = vadd.f32 %v464, %v43
    %v481 = vadd.f32 %v465, %v44
    %v482 = vadd.f32 %v466, %v45
    %v483 = vadd.f32 %v467, %v46
    %v484 = vadd.f32 %v468, %v47
    %v485 = vadd.f32 %v469, %v48
    %v486 = vadd.f32 %v470, %v49
    %v487 = vadd.f32 %v471, %v50
    %v488 = vadd.f32 %v472, %v51
    %vm489 = vcmask 261120
    %v491 = vsel %vm489, %v379, 0
    %v494 = vsel %vm489, %v384, 0
    %v497 = vsel %vm489, %v389, 0
    %v500 = vsel %vm489, %v394, 0
    %v503 = vsel %vm489, %v399, 0
    %v506 = vsel %vm489, %v404, 0
    %v509 = vsel %vm489, %v409, 0
    %v512 = vsel %vm489, %v414, 0
    %v515 = vsel %vm489, %v419, 0
    %v518 = vsel %vm489, %v424, 0
    %v521 = vsel %vm489, %v429, 0
    %v524 = vsel %vm489, %v434, 0
    %v527 = vsel %vm489, %v439, 0
    %v530 = vsel %vm489, %v444, 0
    %v533 = vsel %vm489, %v449, 0
    %v536 = vsel %vm489, %v454, 0
    %538 = vmatprep.subr.mxu0 0.0
    %539 = vmatpush1.msra.mxu0 %v80
    %540 = vmatprep.subr.mxu0 0.0
    %541 = vmatpush1.msra.mxu0 %v81
    %542 = vmatprep.subr.mxu0 0.0
    %543 = vmatpush1.msra.mxu0 %v82
    %544 = vmatprep.subr.mxu0 0.0
    %545 = vmatpush1.msra.mxu0 %v83
    %546 = vmatprep.subr.mxu0 0.0
    %547 = vmatpush1.msra.mxu0 0.0
    %548 = vmatprep.subr.mxu0 0.0
    %549 = vmatpush1.msra.mxu0 0.0
    %550 = vmatprep.subr.mxu0 0.0
    %551 = vmatpush1.msra.mxu0 0.0
    %552 = vmatprep.subr.mxu0 0.0
    %553 = vmatpush1.msra.mxu0 0.0
    %554 = vmatprep.subr.mxu0 0.0
    %555 = vmatpush1.msra.mxu0 0.0
    %556 = vmatprep.subr.mxu0 0.0
    %557 = vmatpush1.msra.mxu0 0.0
    %558 = vmatprep.subr.mxu0 0.0
    %559 = vmatpush1.msra.mxu0 0.0
    %560 = vmatprep.subr.mxu0 0.0
    %561 = vmatpush1.msra.mxu0 0.0
    %562 = vmatprep.subr.mxu0 0.0
    %563 = vmatpush1.msra.mxu0 0.0
    %564 = vmatprep.subr.mxu0 0.0
    %565 = vmatpush1.msra.mxu0 0.0
    %566 = vmatprep.subr.mxu0 0.0
    %567 = vmatpush1.msra.mxu0 0.0
    %568 = vmatprep.subr.mxu0 0.0
    %569 = vmatpush1.msra.mxu0 0.0
    %570 = vmatprep.subr.mxu0 0.0
    %571 = vmatpush1.msra.mxu0 0.0
    %572 = vmatprep.subr.mxu0 0.0
    %573 = vmatpush1.msra.mxu0 0.0
    %574 = vmatprep.subr.mxu0 0.0
    %575 = vmatpush1.msra.mxu0 0.0
    %576 = vmatprep.subr.mxu0 0.0
    %577 = vmatpush1.msra.mxu0 0.0
    %578 = vmatprep.subr.mxu0 0.0
    %579 = vmatpush1.msra.mxu0 0.0
    %580 = vmatprep.subr.mxu0 0.0
    %581 = vmatpush1.msra.mxu0 0.0
    %582 = vmatprep.subr.mxu0 0.0
    %583 = vmatpush1.msra.mxu0 0.0
    %584 = vmatprep.subr.mxu0 0.0
    %585 = vmatpush1.msra.mxu0 0.0
    %586 = vmatprep.subr.mxu0 0.0
    %587 = vmatpush1.msra.mxu0 0.0
    %588 = vmatprep.subr.mxu0 0.0
    %589 = vmatpush1.msra.mxu0 0.0
    %590 = vmatprep.subr.mxu0 0.0
    %591 = vmatpush1.msra.mxu0 0.0
    %592 = vmatprep.subr.mxu0 0.0
    %593 = vmatpush1.msra.mxu0 0.0
    %594 = vmatprep.subr.mxu0 0.0
    %595 = vmatpush1.msra.mxu0 0.0
    %596 = vmatprep.subr.mxu0 0.0
    %597 = vmatpush1.msra.mxu0 0.0
    %598 = vmatprep.subr.mxu0 0.0
    %599 = vmatpush1.msra.mxu0 0.0
    %600 = vmatprep.subr.mxu0 0.0
    %601 = vmatpush1.msra.mxu0 0.0
    %602 = vmatprep.mubr.f32.mxu0 0.0
    %603 = vmatmul.mubr.f32.gmra.mrb[0].mxu0 %v491
    %v604 = vpop.f32.mrb[0].mxu0
    %v605 = vadd.f32 0.0, %v604
    %v606 = vpop.f32.mrb[0].mxu0
    %607 = vmatprep.mubr.f32.mxu0 0.0
    %608 = vmatmul.mubr.f32.gmra.mrb[0].mxu0 %v494
    %v609 = vpop.f32.mrb[0].mxu0
    %v610 = vadd.f32 0.0, %v609
    %v611 = vpop.f32.mrb[0].mxu0
    %612 = vmatprep.mubr.f32.mxu0 0.0
    %613 = vmatmul.mubr.f32.gmra.mrb[0].mxu0 %v497
    %v614 = vpop.f32.mrb[0].mxu0
    %v615 = vadd.f32 0.0, %v614
    %v616 = vpop.f32.mrb[0].mxu0
    %617 = vmatprep.mubr.f32.mxu0 0.0
    %618 = vmatmul.mubr.f32.gmra.mrb[0].mxu0 %v500
    %v619 = vpop.f32.mrb[0].mxu0
    %v620 = vadd.f32 0.0, %v619
    %v621 = vpop.f32.mrb[0].mxu0
    %622 = vmatprep.mubr.f32.mxu0 0.0
    %623 = vmatmul.mubr.f32.gmra.mrb[0].mxu0 %v503
    %v624 = vpop.f32.mrb[0].mxu0
    %v625 = vadd.f32 0.0, %v624
    %v626 = vpop.f32.mrb[0].mxu0
    %627 = vmatprep.mubr.f32.mxu0 0.0
    %628 = vmatmul.mubr.f32.gmra.mrb[0].mxu0 %v506
    %v629 = vpop.f32.mrb[0].mxu0
    %v630 = vadd.f32 0.0, %v629
    %v631 = vpop.f32.mrb[0].mxu0
    %632 = vmatprep.mubr.f32.mxu0 0.0
    %633 = vmatmul.mubr.f32.gmra.mrb[0].mxu0 %v509
    %v634 = vpop.f32.mrb[0].mxu0
    %v635 = vadd.f32 0.0, %v634
    %v636 = vpop.f32.mrb[0].mxu0
    %637 = vmatprep.mubr.f32.mxu0 0.0
    %638 = vmatmul.mubr.f32.gmra.mrb[0].mxu0 %v512
    %v639 = vpop.f32.mrb[0].mxu0
    %v640 = vadd.f32 0.0, %v639
    %v641 = vpop.f32.mrb[0].mxu0
    %642 = vmatprep.mubr.f32.mxu0 0.0
    %643 = vmatmul.mubr.f32.gmra.mrb[0].mxu0 %v515
    %v644 = vpop.f32.mrb[0].mxu0
    %v645 = vadd.f32 0.0, %v644
    %v646 = vpop.f32.mrb[0].mxu0
    %647 = vmatprep.mubr.f32.mxu0 0.0
    %648 = vmatmul.mubr.f32.gmra.mrb[0].mxu0 %v518
    %v649 = vpop.f32.mrb[0].mxu0
    %v650 = vadd.f32 0.0, %v649
    %v651 = vpop.f32.mrb[0].mxu0
    %652 = vmatprep.mubr.f32.mxu0 0.0
    %653 = vmatmul.mubr.f32.gmra.mrb[0].mxu0 %v521
    %v654 = vpop.f32.mrb[0].mxu0
    %v655 = vadd.f32 0.0, %v654
    %v656 = vpop.f32.mrb[0].mxu0
    %657 = vmatprep.mubr.f32.mxu0 0.0
    %658 = vmatmul.mubr.f32.gmra.mrb[0].mxu0 %v524
    %v659 = vpop.f32.mrb[0].mxu0
    %v660 = vadd.f32 0.0, %v659
    %v661 = vpop.f32.mrb[0].mxu0
    %662 = vmatprep.mubr.f32.mxu0 0.0
    %663 = vmatmul.mubr.f32.gmra.mrb[0].mxu0 %v527
    %v664 = vpop.f32.mrb[0].mxu0
    %v665 = vadd.f32 0.0, %v664
    %v666 = vpop.f32.mrb[0].mxu0
    %667 = vmatprep.mubr.f32.mxu0 0.0
    %668 = vmatmul.mubr.f32.gmra.mrb[0].mxu0 %v530
    %v669 = vpop.f32.mrb[0].mxu0
    %v670 = vadd.f32 0.0, %v669
    %v671 = vpop.f32.mrb[0].mxu0
    %672 = vmatprep.mubr.f32.mxu0 0.0
    %673 = vmatmul.mubr.f32.gmra.mrb[0].mxu0 %v533
    %v674 = vpop.f32.mrb[0].mxu0
    %v675 = vadd.f32 0.0, %v674
    %v676 = vpop.f32.mrb[0].mxu0
    %677 = vmatprep.mubr.f32.mxu0 0.0
    %678 = vmatmul.mubr.f32.gmra.mrb[0].mxu0 %v536
    %v679 = vpop.f32.mrb[0].mxu0
    %v680 = vadd.f32 0.0, %v679
    %v681 = vpop.f32.mrb[0].mxu0
    %682 = vdwg.mxu0
    %v683 = vadd.f32 %v473, %v605
    %v684 = vadd.f32 %v474, %v610
    %v685 = vadd.f32 %v475, %v615
    %v686 = vadd.f32 %v476, %v620
    %v687 = vadd.f32 %v477, %v625
    %v688 = vadd.f32 %v478, %v630
    %v689 = vadd.f32 %v479, %v635
    %v690 = vadd.f32 %v480, %v640
    %v691 = vadd.f32 %v481, %v645
    %v692 = vadd.f32 %v482, %v650
    %v693 = vadd.f32 %v483, %v655
    %v694 = vadd.f32 %v484, %v660
    %v695 = vadd.f32 %v485, %v665
    %v696 = vadd.f32 %v486, %v670
    %v697 = vadd.f32 %v487, %v675
    %v698 = vadd.f32 %v488, %v680
    %v699 = vsel %vm489, %v683, 0.0
    %700 = vadd.xlane.f32.xlu0 %v699
    %v701 = vpop.xlane.xlu0 %700
    %v702 = vsel %vm489, %v684, 0.0
    %703 = vadd.xlane.f32.xlu0 %v702
    %v704 = vpop.xlane.xlu0 %703
    %v705 = vsel %vm489, %v685, 0.0
    %706 = vadd.xlane.f32.xlu0 %v705
    %v707 = vpop.xlane.xlu0 %706
    %v708 = vsel %vm489, %v686, 0.0
    %709 = vadd.xlane.f32.xlu0 %v708
    %v710 = vpop.xlane.xlu0 %709
    %v711 = vsel %vm489, %v687, 0.0
    %712 = vadd.xlane.f32.xlu0 %v711
    %v713 = vpop.xlane.xlu0 %712
    %v714 = vsel %vm489, %v688, 0.0
    %715 = vadd.xlane.f32.xlu0 %v714
    %v716 = vpop.xlane.xlu0 %715
    %v717 = vsel %vm489, %v689, 0.0
    %718 = vadd.xlane.f32.xlu0 %v717
    %v719 = vpop.xlane.xlu0 %718
    %v720 = vsel %vm489, %v690, 0.0
    %721 = vadd.xlane.f32.xlu0 %v720
    %v722 = vpop.xlane.xlu0 %721
    %v723 = vsel %vm489, %v691, 0.0
    %724 = vadd.xlane.f32.xlu0 %v723
    %v725 = vpop.xlane.xlu0 %724
    %v726 = vsel %vm489, %v692, 0.0
    %727 = vadd.xlane.f32.xlu0 %v726
    %v728 = vpop.xlane.xlu0 %727
    %v729 = vsel %vm489, %v693, 0.0
    %730 = vadd.xlane.f32.xlu0 %v729
    %v731 = vpop.xlane.xlu0 %730
    %v732 = vsel %vm489, %v694, 0.0
    %733 = vadd.xlane.f32.xlu0 %v732
    %v734 = vpop.xlane.xlu0 %733
    %v735 = vsel %vm489, %v695, 0.0
    %736 = vadd.xlane.f32.xlu0 %v735
    %v737 = vpop.xlane.xlu0 %736
    %v738 = vsel %vm489, %v696, 0.0
    %739 = vadd.xlane.f32.xlu0 %v738
    %v740 = vpop.xlane.xlu0 %739
    %v741 = vsel %vm489, %v697, 0.0
    %742 = vadd.xlane.f32.xlu0 %v741
    %v743 = vpop.xlane.xlu0 %742
    %v744 = vsel %vm489, %v698, 0.0
    %745 = vadd.xlane.f32.xlu0 %v744
    %v746 = vpop.xlane.xlu0 %745
    %v747 = vrcp.pop 32.0
    %v748 = vmul.f32 %v701, %v747
    %v749 = vmul.f32 %v704, %v747
    %v750 = vmul.f32 %v707, %v747
    %v751 = vmul.f32 %v710, %v747
    %v752 = vmul.f32 %v713, %v747
    %v753 = vmul.f32 %v716, %v747
    %v754 = vmul.f32 %v719, %v747
    %v755 = vmul.f32 %v722, %v747
    %v756 = vmul.f32 %v725, %v747
    %v757 = vmul.f32 %v728, %v747
    %v758 = vmul.f32 %v731, %v747
    %v759 = vmul.f32 %v734, %v747
    %v760 = vmul.f32 %v737, %v747
    %v761 = vmul.f32 %v740, %v747
    %v762 = vmul.f32 %v743, %v747
    %v763 = vmul.f32 %v746, %v747
    %v764 = vsub.f32 %v683, %v748
    %v765 = vsub.f32 %v684, %v749
    %v766 = vsub.f32 %v685, %v750
    %v767 = vsub.f32 %v686, %v751
    %v768 = vsub.f32 %v687, %v752
    %v769 = vsub.f32 %v688, %v753
    %v770 = vsub.f32 %v689, %v754
    %v771 = vsub.f32 %v690, %v755
    %v772 = vsub.f32 %v691, %v756
    %v773 = vsub.f32 %v692, %v757
    %v774 = vsub.f32 %v693, %v758
    %v775 = vsub.f32 %v694, %v759
    %v776 = vsub.f32 %v695, %v760
    %v777 = vsub.f32 %v696, %v761
    %v778 = vsub.f32 %v697, %v762
    %v779 = vsub.f32 %v698, %v763
    %v780 = vmul.f32 %v764, %v764
    %v781 = vmul.f32 %v765, %v765
    %v782 = vmul.f32 %v766, %v766
    %v783 = vmul.f32 %v767, %v767
    %v784 = vmul.f32 %v768, %v768
    %v785 = vmul.f32 %v769, %v769
    %v786 = vmul.f32 %v770, %v770
    %v787 = vmul.f32 %v771, %v771
    %v788 = vmul.f32 %v772, %v772
    %v789 = vmul.f32 %v773, %v773
    %v790 = vmul.f32 %v774, %v774
    %v791 = vmul.f32 %v775, %v775
    %v792 = vmul.f32 %v776, %v776
    %v793 = vmul.f32 %v777, %v777
    %v794 = vmul.f32 %v778, %v778
    %v795 = vmul.f32 %v779, %v779
    %v796 = vsel %vm489, %v780, 0.0
    %797 = vadd.xlane.f32.xlu0 %v796
    %v798 = vpop.xlane.xlu0 %797
    %v799 = vsel %vm489, %v781, 0.0
    %800 = vadd.xlane.f32.xlu0 %v799
    %v801 = vpop.xlane.xlu0 %800
    %v802 = vsel %vm489, %v782, 0.0
    %803 = vadd.xlane.f32.xlu0 %v802
    %v804 = vpop.xlane.xlu0 %803
    %v805 = vsel %vm489, %v783, 0.0
    %806 = vadd.xlane.f32.xlu0 %v805
    %v807 = vpop.xlane.xlu0 %806
    %v808 = vsel %vm489, %v784, 0.0
    %809 = vadd.xlane.f32.xlu0 %v808
    %v810 = vpop.xlane.xlu0 %809
    %v811 = vsel %vm489, %v785, 0.0
    %812 = vadd.xlane.f32.xlu0 %v811
    %v813 = vpop.xlane.xlu0 %812
    %v814 = vsel %vm489, %v786, 0.0
    %815 = vadd.xlane.f32.xlu0 %v814
    %v816 = vpop.xlane.xlu0 %815
    %v817 = vsel %vm489, %v787, 0.0
    %818 = vadd.xlane.f32.xlu0 %v817
    %v819 = vpop.xlane.xlu0 %818
    %v820 = vsel %vm489, %v788, 0.0
    %821 = vadd.xlane.f32.xlu0 %v820
    %v822 = vpop.xlane.xlu0 %821
    %v823 = vsel %vm489, %v789, 0.0
    %824 = vadd.xlane.f32.xlu0 %v823
    %v825 = vpop.xlane.xlu0 %824
    %v826 = vsel %vm489, %v790, 0.0
    %827 = vadd.xlane.f32.xlu0 %v826
    %v828 = vpop.xlane.xlu0 %827
    %v829 = vsel %vm489, %v791, 0.0
    %830 = vadd.xlane.f32.xlu0 %v829
    %v831 = vpop.xlane.xlu0 %830
    %v832 = vsel %vm489, %v792, 0.0
    %833 = vadd.xlane.f32.xlu0 %v832
    %v834 = vpop.xlane.xlu0 %833
    %v835 = vsel %vm489, %v793, 0.0
    %836 = vadd.xlane.f32.xlu0 %v835
    %v837 = vpop.xlane.xlu0 %836
    %v838 = vsel %vm489, %v794, 0.0
    %839 = vadd.xlane.f32.xlu0 %v838
    %v840 = vpop.xlane.xlu0 %839
    %v841 = vsel %vm489, %v795, 0.0
    %842 = vadd.xlane.f32.xlu0 %v841
    %v843 = vpop.xlane.xlu0 %842
    %v844 = vmul.f32 %v798, %v747
    %v845 = vmul.f32 %v801, %v747
    %v846 = vmul.f32 %v804, %v747
    %v847 = vmul.f32 %v807, %v747
    %v848 = vmul.f32 %v810, %v747
    %v849 = vmul.f32 %v813, %v747
    %v850 = vmul.f32 %v816, %v747
    %v851 = vmul.f32 %v819, %v747
    %v852 = vmul.f32 %v822, %v747
    %v853 = vmul.f32 %v825, %v747
    %v854 = vmul.f32 %v828, %v747
    %v855 = vmul.f32 %v831, %v747
    %v856 = vmul.f32 %v834, %v747
    %v857 = vmul.f32 %v837, %v747
    %v858 = vmul.f32 %v840, %v747
    %v859 = vmul.f32 %v843, %v747
    %v860 = vadd.f32 %v844, 1e-05
    %v861 = vadd.f32 %v845, 1e-05
    %v862 = vadd.f32 %v846, 1e-05
    %v863 = vadd.f32 %v847, 1e-05
    %v864 = vadd.f32 %v848, 1e-05
    %v865 = vadd.f32 %v849, 1e-05
    %v866 = vadd.f32 %v850, 1e-05
    %v867 = vadd.f32 %v851, 1e-05
    %v868 = vadd.f32 %v852, 1e-05
    %v869 = vadd.f32 %v853, 1e-05
    %v870 = vadd.f32 %v854, 1e-05
    %v871 = vadd.f32 %v855, 1e-05
    %v872 = vadd.f32 %v856, 1e-05
    %v873 = vadd.f32 %v857, 1e-05
    %v874 = vadd.f32 %v858, 1e-05
    %v875 = vadd.f32 %v859, 1e-05
    %v876 = vrsqrt.pop %v860
    %v877 = vrsqrt.pop %v861
    %v878 = vrsqrt.pop %v862
    %v879 = vrsqrt.pop %v863
    %v880 = vrsqrt.pop %v864
    %v881 = vrsqrt.pop %v865
    %v882 = vrsqrt.pop %v866
    %v883 = vrsqrt.pop %v867
    %v884 = vrsqrt.pop %v868
    %v885 = vrsqrt.pop %v869
    %v886 = vrsqrt.pop %v870
    %v887 = vrsqrt.pop %v871
    %v888 = vrsqrt.pop %v872
    %v889 = vrsqrt.pop %v873
    %v890 = vrsqrt.pop %v874
    %v891 = vrsqrt.pop %v875
    %v892 = vmul.f32 %v764, %v876
    %v893 = vmul.f32 %v765, %v877
    %v894 = vmul.f32 %v766, %v878
    %v895 = vmul.f32 %v767, %v879
    %v896 = vmul.f32 %v768, %v880
    %v897 = vmul.f32 %v769, %v881
    %v898 = vmul.f32 %v770, %v882
    %v899 = vmul.f32 %v771, %v883
    %v900 = vmul.f32 %v772, %v884
    %v901 = vmul.f32 %v773, %v885
    %v902 = vmul.f32 %v774, %v886
    %v903 = vmul.f32 %v775, %v887
    %v904 = vmul.f32 %v776, %v888
    %v905 = vmul.f32 %v777, %v889
    %v906 = vmul.f32 %v778, %v890
    %v907 = vmul.f32 %v779, %v891
    %v908 = vlaneseq
    %v909 = vshrl.u32 %v908, 7
    %v910 = vsub.s32 0, %v909
    %v911 = vrot.slane %v18, %v910
    %v912 = vmul.f32 %v892, %v911
    %v913 = vmul.f32 %v893, %v911
    %v914 = vmul.f32 %v894, %v911
    %v915 = vmul.f32 %v895, %v911
    %v916 = vmul.f32 %v896, %v911
    %v917 = vmul.f32 %v897, %v911
    %v918 = vmul.f32 %v898, %v911
    %v919 = vmul.f32 %v899, %v911
    %v920 = vmul.f32 %v900, %v911
    %v921 = vmul.f32 %v901, %v911
    %v922 = vmul.f32 %v902, %v911
    %v923 = vmul.f32 %v903, %v911
    %v924 = vmul.f32 %v904, %v911
    %v925 = vmul.f32 %v905, %v911
    %v926 = vmul.f32 %v906, %v911
    %v927 = vmul.f32 %v907, %v911
    %v928 = vlaneseq
    %v929 = vshrl.u32 %v928, 7
    %v930 = vsub.s32 1, %v929
    %v931 = vrot.slane %v18, %v930
    %v932 = vadd.f32 %v912, %v931
    %v933 = vadd.f32 %v913, %v931
    %v934 = vadd.f32 %v914, %v931
    %v935 = vadd.f32 %v915, %v931
    %v936 = vadd.f32 %v916, %v931
    %v937 = vadd.f32 %v917, %v931
    %v938 = vadd.f32 %v918, %v931
    %v939 = vadd.f32 %v919, %v931
    %v940 = vadd.f32 %v920, %v931
    %v941 = vadd.f32 %v921, %v931
    %v942 = vadd.f32 %v922, %v931
    %v943 = vadd.f32 %v923, %v931
    %v944 = vadd.f32 %v924, %v931
    %v945 = vadd.f32 %v925, %v931
    %v946 = vadd.f32 %v926, %v931
    %v947 = vadd.f32 %v927, %v931
    %v948 = vlaneseq
    %v949 = vshrl.u32 %v948, 7
    %v950 = vsub.s32 2, %v949
    %v951 = vrot.slane %v18, %v950
    %v953 = vsel %vm489, %v932, 0
    %v956 = vsel %vm489, %v933, 0
    %v959 = vsel %vm489, %v934, 0
    %v962 = vsel %vm489, %v935, 0
    %v965 = vsel %vm489, %v936, 0
    %v968 = vsel %vm489, %v937, 0
    %v971 = vsel %vm489, %v938, 0
    %v974 = vsel %vm489, %v939, 0
    %v977 = vsel %vm489, %v940, 0
    %v980 = vsel %vm489, %v941, 0
    %v983 = vsel %vm489, %v942, 0
    %v986 = vsel %vm489, %v943, 0
    %v989 = vsel %vm489, %v944, 0
    %v992 = vsel %vm489, %v945, 0
    %v995 = vsel %vm489, %v946, 0
    %v998 = vsel %vm489, %v947, 0
    %1000 = vmatprep.subr.mxu0 0.0
    %1001 = vmatpush1.msra.mxu0 %v52
    %1002 = vmatprep.subr.mxu0 0.0
    %1003 = vmatpush1.msra.mxu0 %v53
    %1004 = vmatprep.subr.mxu0 0.0
    %1005 = vmatpush1.msra.mxu0 %v54
    %1006 = vmatprep.subr.mxu0 0.0
    %1007 = vmatpush1.msra.mxu0 %v55
    %1008 = vmatprep.subr.mxu0 0.0
    %1009 = vmatpush1.msra.mxu0 0.0
    %1010 = vmatprep.subr.mxu0 0.0
    %1011 = vmatpush1.msra.mxu0 0.0
    %1012 = vmatprep.subr.mxu0 0.0
    %1013 = vmatpush1.msra.mxu0 0.0
    %1014 = vmatprep.subr.mxu0 0.0
    %1015 = vmatpush1.msra.mxu0 0.0
    %1016 = vmatprep.subr.mxu0 0.0
    %1017 = vmatpush1.msra.mxu0 0.0
    %1018 = vmatprep.subr.mxu0 0.0
    %1019 = vmatpush1.msra.mxu0 0.0
    %1020 = vmatprep.subr.mxu0 0.0
    %1021 = vmatpush1.msra.mxu0 0.0
    %1022 = vmatprep.subr.mxu0 0.0
    %1023 = vmatpush1.msra.mxu0 0.0
    %1024 = vmatprep.subr.mxu0 0.0
    %1025 = vmatpush1.msra.mxu0 0.0
    %1026 = vmatprep.subr.mxu0 0.0
    %1027 = vmatpush1.msra.mxu0 0.0
    %1028 = vmatprep.subr.mxu0 0.0
    %1029 = vmatpush1.msra.mxu0 0.0
    %1030 = vmatprep.subr.mxu0 0.0
    %1031 = vmatpush1.msra.mxu0 0.0
    %1032 = vmatprep.subr.mxu0 0.0
    %1033 = vmatpush1.msra.mxu0 0.0
    %1034 = vmatprep.subr.mxu0 0.0
    %1035 = vmatpush1.msra.mxu0 0.0
    %1036 = vmatprep.subr.mxu0 0.0
    %1037 = vmatpush1.msra.mxu0 0.0
    %1038 = vmatprep.subr.mxu0 0.0
    %1039 = vmatpush1.msra.mxu0 0.0
    %1040 = vmatprep.subr.mxu0 0.0
    %1041 = vmatpush1.msra.mxu0 0.0
    %1042 = vmatprep.subr.mxu0 0.0
    %1043 = vmatpush1.msra.mxu0 0.0
    %1044 = vmatprep.subr.mxu0 0.0
    %1045 = vmatpush1.msra.mxu0 0.0
    %1046 = vmatprep.subr.mxu0 0.0
    %1047 = vmatpush1.msra.mxu0 0.0
    %1048 = vmatprep.subr.mxu0 0.0
    %1049 = vmatpush1.msra.mxu0 0.0
    %1050 = vmatprep.subr.mxu0 0.0
    %1051 = vmatpush1.msra.mxu0 0.0
    %1052 = vmatprep.subr.mxu0 0.0
    %1053 = vmatpush1.msra.mxu0 0.0
    %1054 = vmatprep.subr.mxu0 0.0
    %1055 = vmatpush1.msra.mxu0 0.0
    %1056 = vmatprep.subr.mxu0 0.0
    %1057 = vmatpush1.msra.mxu0 0.0
    %1058 = vmatprep.subr.mxu0 0.0
    %1059 = vmatpush1.msra.mxu0 0.0
    %1060 = vmatprep.subr.mxu0 0.0
    %1061 = vmatpush1.msra.mxu0 0.0
    %1062 = vmatprep.subr.mxu0 0.0
    %1063 = vmatpush1.msra.mxu0 0.0
    %1064 = vmatprep.mubr.f32.mxu0 0.0
    %1065 = vmatmul.mubr.f32.gmra.mrb[0].mxu0 %v953
    %v1066 = vpop.f32.mrb[0].mxu0
    %v1067 = vadd.f32 %v951, %v1066
    %v1068 = vpop.f32.mrb[0].mxu0
    %1069 = vmatprep.mubr.f32.mxu0 0.0
    %1070 = vmatmul.mubr.f32.gmra.mrb[0].mxu0 %v956
    %v1071 = vpop.f32.mrb[0].mxu0
    %v1072 = vadd.f32 %v951, %v1071
    %v1073 = vpop.f32.mrb[0].mxu0
    %1074 = vmatprep.mubr.f32.mxu0 0.0
    %1075 = vmatmul.mubr.f32.gmra.mrb[0].mxu0 %v959
    %v1076 = vpop.f32.mrb[0].mxu0
    %v1077 = vadd.f32 %v951, %v1076
    %v1078 = vpop.f32.mrb[0].mxu0
    %1079 = vmatprep.mubr.f32.mxu0 0.0
    %1080 = vmatmul.mubr.f32.gmra.mrb[0].mxu0 %v962
    %v1081 = vpop.f32.mrb[0].mxu0
    %v1082 = vadd.f32 %v951, %v1081
    %v1083 = vpop.f32.mrb[0].mxu0
    %1084 = vmatprep.mubr.f32.mxu0 0.0
    %1085 = vmatmul.mubr.f32.gmra.mrb[0].mxu0 %v965
    %v1086 = vpop.f32.mrb[0].mxu0
    %v1087 = vadd.f32 %v951, %v1086
    %v1088 = vpop.f32.mrb[0].mxu0
    %1089 = vmatprep.mubr.f32.mxu0 0.0
    %1090 = vmatmul.mubr.f32.gmra.mrb[0].mxu0 %v968
    %v1091 = vpop.f32.mrb[0].mxu0
    %v1092 = vadd.f32 %v951, %v1091
    %v1093 = vpop.f32.mrb[0].mxu0
    %1094 = vmatprep.mubr.f32.mxu0 0.0
    %1095 = vmatmul.mubr.f32.gmra.mrb[0].mxu0 %v971
    %v1096 = vpop.f32.mrb[0].mxu0
    %v1097 = vadd.f32 %v951, %v1096
    %v1098 = vpop.f32.mrb[0].mxu0
    %1099 = vmatprep.mubr.f32.mxu0 0.0
    %1100 = vmatmul.mubr.f32.gmra.mrb[0].mxu0 %v974
    %v1101 = vpop.f32.mrb[0].mxu0
    %v1102 = vadd.f32 %v951, %v1101
    %v1103 = vpop.f32.mrb[0].mxu0
    %1104 = vmatprep.mubr.f32.mxu0 0.0
    %1105 = vmatmul.mubr.f32.gmra.mrb[0].mxu0 %v977
    %v1106 = vpop.f32.mrb[0].mxu0
    %v1107 = vadd.f32 %v951, %v1106
    %v1108 = vpop.f32.mrb[0].mxu0
    %1109 = vmatprep.mubr.f32.mxu0 0.0
    %1110 = vmatmul.mubr.f32.gmra.mrb[0].mxu0 %v980
    %v1111 = vpop.f32.mrb[0].mxu0
    %v1112 = vadd.f32 %v951, %v1111
    %v1113 = vpop.f32.mrb[0].mxu0
    %1114 = vmatprep.mubr.f32.mxu0 0.0
    %1115 = vmatmul.mubr.f32.gmra.mrb[0].mxu0 %v983
    %v1116 = vpop.f32.mrb[0].mxu0
    %v1117 = vadd.f32 %v951, %v1116
    %v1118 = vpop.f32.mrb[0].mxu0
    %1119 = vmatprep.mubr.f32.mxu0 0.0
    %1120 = vmatmul.mubr.f32.gmra.mrb[0].mxu0 %v986
    %v1121 = vpop.f32.mrb[0].mxu0
    %v1122 = vadd.f32 %v951, %v1121
    %v1123 = vpop.f32.mrb[0].mxu0
    %1124 = vmatprep.mubr.f32.mxu0 0.0
    %1125 = vmatmul.mubr.f32.gmra.mrb[0].mxu0 %v989
    %v1126 = vpop.f32.mrb[0].mxu0
    %v1127 = vadd.f32 %v951, %v1126
    %v1128 = vpop.f32.mrb[0].mxu0
    %1129 = vmatprep.mubr.f32.mxu0 0.0
    %1130 = vmatmul.mubr.f32.gmra.mrb[0].mxu0 %v992
    %v1131 = vpop.f32.mrb[0].mxu0
    %v1132 = vadd.f32 %v951, %v1131
    %v1133 = vpop.f32.mrb[0].mxu0
    %1134 = vmatprep.mubr.f32.mxu0 0.0
    %1135 = vmatmul.mubr.f32.gmra.mrb[0].mxu0 %v995
    %v1136 = vpop.f32.mrb[0].mxu0
    %v1137 = vadd.f32 %v951, %v1136
    %v1138 = vpop.f32.mrb[0].mxu0
    %1139 = vmatprep.mubr.f32.mxu0 0.0
    %1140 = vmatmul.mubr.f32.gmra.mrb[0].mxu0 %v998
    %v1141 = vpop.f32.mrb[0].mxu0
    %v1142 = vadd.f32 %v951, %v1141
    %v1143 = vpop.f32.mrb[0].mxu0
    %1144 = vdwg.mxu0
    %v1145 = vld [vmem:[%s3] sm:$0xff]
    %v1146 = vld [vmem:[%s3 + $0x8] sm:$0xff]
    %v1147 = vld [vmem:[%s3 + $0x10] sm:$0xff]
    %v1148 = vld [vmem:[%s3 + $0x18] sm:$0xff]
    %v1149 = vld [vmem:[%s3 + $0x20] sm:$0xff]
    %v1150 = vld [vmem:[%s3 + $0x28] sm:$0xff]
    %v1151 = vld [vmem:[%s3 + $0x30] sm:$0xff]
    %v1152 = vld [vmem:[%s3 + $0x38] sm:$0xff]
    %v1153 = vld [vmem:[%s3 + $0x40] sm:$0xff]
    %v1154 = vld [vmem:[%s3 + $0x48] sm:$0xff]
    %v1155 = vld [vmem:[%s3 + $0x50] sm:$0xff]
    %v1156 = vld [vmem:[%s3 + $0x58] sm:$0xff]
    %v1157 = vld [vmem:[%s3 + $0x60] sm:$0xff]
    %v1158 = vld [vmem:[%s3 + $0x68] sm:$0xff]
    %v1159 = vld [vmem:[%s3 + $0x70] sm:$0xff]
    %v1160 = vld [vmem:[%s3 + $0x78] sm:$0xff]
    %v1162 = vsel %vm489, %v1067, 0
    %v1165 = vsel %vm489, %v1072, 0
    %v1168 = vsel %vm489, %v1077, 0
    %v1171 = vsel %vm489, %v1082, 0
    %v1174 = vsel %vm489, %v1087, 0
    %v1177 = vsel %vm489, %v1092, 0
    %v1180 = vsel %vm489, %v1097, 0
    %v1183 = vsel %vm489, %v1102, 0
    %v1186 = vsel %vm489, %v1107, 0
    %v1189 = vsel %vm489, %v1112, 0
    %v1192 = vsel %vm489, %v1117, 0
    %v1195 = vsel %vm489, %v1122, 0
    %v1198 = vsel %vm489, %v1127, 0
    %v1201 = vsel %vm489, %v1132, 0
    %v1204 = vsel %vm489, %v1137, 0
    %v1207 = vsel %vm489, %v1142, 0
    %1209 = vmatprep.subr.mxu0 0.0
    %1210 = vmatpush1.xpose.msra.mxu0 %v953
    %1211 = vmatprep.subr.mxu0 0.0
    %1212 = vmatpush1.xpose.msra.mxu0 %v956
    %1213 = vmatprep.subr.mxu0 0.0
    %1214 = vmatpush1.xpose.msra.mxu0 %v959
    %1215 = vmatprep.subr.mxu0 0.0
    %1216 = vmatpush1.xpose.msra.mxu0 %v962
    %1217 = vmatprep.subr.mxu0 0.0
    %1218 = vmatpush1.xpose.msra.mxu0 %v965
    %1219 = vmatprep.subr.mxu0 0.0
    %1220 = vmatpush1.xpose.msra.mxu0 %v968
    %1221 = vmatprep.subr.mxu0 0.0
    %1222 = vmatpush1.xpose.msra.mxu0 %v971
    %1223 = vmatprep.subr.mxu0 0.0
    %1224 = vmatpush1.xpose.msra.mxu0 %v974
    %1225 = vmatprep.subr.mxu0 0.0
    %1226 = vmatpush1.xpose.msra.mxu0 %v977
    %1227 = vmatprep.subr.mxu0 0.0
    %1228 = vmatpush1.xpose.msra.mxu0 %v980
    %1229 = vmatprep.subr.mxu0 0.0
    %1230 = vmatpush1.xpose.msra.mxu0 %v983
    %1231 = vmatprep.subr.mxu0 0.0
    %1232 = vmatpush1.xpose.msra.mxu0 %v986
    %1233 = vmatprep.subr.mxu0 0.0
    %1234 = vmatpush1.xpose.msra.mxu0 %v989
    %1235 = vmatprep.subr.mxu0 0.0
    %1236 = vmatpush1.xpose.msra.mxu0 %v992
    %1237 = vmatprep.subr.mxu0 0.0
    %1238 = vmatpush1.xpose.msra.mxu0 %v995
    %1239 = vmatprep.subr.mxu0 0.0
    %1240 = vmatpush1.xpose.msra.mxu0 %v998
    %1241 = vmatprep.subr.mxu0 0.0
    %1242 = vmatpush1.xpose.msra.mxu0 0.0
    %1243 = vmatprep.subr.mxu0 0.0
    %1244 = vmatpush1.xpose.msra.mxu0 0.0
    %1245 = vmatprep.subr.mxu0 0.0
    %1246 = vmatpush1.xpose.msra.mxu0 0.0
    %1247 = vmatprep.subr.mxu0 0.0
    %1248 = vmatpush1.xpose.msra.mxu0 0.0
    %1249 = vmatprep.subr.mxu0 0.0
    %1250 = vmatpush1.xpose.msra.mxu0 0.0
    %1251 = vmatprep.subr.mxu0 0.0
    %1252 = vmatpush1.xpose.msra.mxu0 0.0
    %1253 = vmatprep.subr.mxu0 0.0
    %1254 = vmatpush1.xpose.msra.mxu0 0.0
    %1255 = vmatprep.subr.mxu0 0.0
    %1256 = vmatpush1.xpose.msra.mxu0 0.0
    %1257 = vmatprep.subr.mxu0 0.0
    %1258 = vmatpush1.xpose.msra.mxu0 0.0
    %1259 = vmatprep.subr.mxu0 0.0
    %1260 = vmatpush1.xpose.msra.mxu0 0.0
    %1261 = vmatprep.subr.mxu0 0.0
    %1262 = vmatpush1.xpose.msra.mxu0 0.0
    %1263 = vmatprep.subr.mxu0 0.0
    %1264 = vmatpush1.xpose.msra.mxu0 0.0
    %1265 = vmatprep.subr.mxu0 0.0
    %1266 = vmatpush1.xpose.msra.mxu0 0.0
    %1267 = vmatprep.subr.mxu0 0.0
    %1268 = vmatpush1.xpose.msra.mxu0 0.0
    %1269 = vmatprep.subr.mxu0 0.0
    %1270 = vmatpush1.xpose.msra.mxu0 0.0
    %1271 = vmatprep.subr.mxu0 0.0
    %1272 = vmatpush1.xpose.msra.mxu0 0.0
    %1273 = vmatprep.mubr.f32.mxu0 0.0
    %1274 = vmatmul.mubr.f32.gmra.mrb[0].mxu0 %v1162
    %v1275 = vpop.f32.mrb[0].mxu0
    %v1276 = vadd.f32 %v1145, %v1275
    %v1277 = vpop.f32.mrb[0].mxu0
    %1278 = vmatprep.mubr.f32.mxu0 0.0
    %1279 = vmatmul.mubr.f32.gmra.mrb[0].mxu0 %v1165
    %v1280 = vpop.f32.mrb[0].mxu0
    %v1281 = vadd.f32 %v1146, %v1280
    %v1282 = vpop.f32.mrb[0].mxu0
    %1283 = vmatprep.mubr.f32.mxu0 0.0
    %1284 = vmatmul.mubr.f32.gmra.mrb[0].mxu0 %v1168
    %v1285 = vpop.f32.mrb[0].mxu0
    %v1286 = vadd.f32 %v1147, %v1285
    %v1287 = vpop.f32.mrb[0].mxu0
    %1288 = vmatprep.mubr.f32.mxu0 0.0
    %1289 = vmatmul.mubr.f32.gmra.mrb[0].mxu0 %v1171
    %v1290 = vpop.f32.mrb[0].mxu0
    %v1291 = vadd.f32 %v1148, %v1290
    %v1292 = vpop.f32.mrb[0].mxu0
    %1293 = vmatprep.mubr.f32.mxu0 0.0
    %1294 = vmatmul.mubr.f32.gmra.mrb[0].mxu0 %v1174
    %v1295 = vpop.f32.mrb[0].mxu0
    %v1296 = vadd.f32 %v1149, %v1295
    %v1297 = vpop.f32.mrb[0].mxu0
    %1298 = vmatprep.mubr.f32.mxu0 0.0
    %1299 = vmatmul.mubr.f32.gmra.mrb[0].mxu0 %v1177
    %v1300 = vpop.f32.mrb[0].mxu0
    %v1301 = vadd.f32 %v1150, %v1300
    %v1302 = vpop.f32.mrb[0].mxu0
    %1303 = vmatprep.mubr.f32.mxu0 0.0
    %1304 = vmatmul.mubr.f32.gmra.mrb[0].mxu0 %v1180
    %v1305 = vpop.f32.mrb[0].mxu0
    %v1306 = vadd.f32 %v1151, %v1305
    %v1307 = vpop.f32.mrb[0].mxu0
    %1308 = vmatprep.mubr.f32.mxu0 0.0
    %1309 = vmatmul.mubr.f32.gmra.mrb[0].mxu0 %v1183
    %v1310 = vpop.f32.mrb[0].mxu0
    %v1311 = vadd.f32 %v1152, %v1310
    %v1312 = vpop.f32.mrb[0].mxu0
    %1313 = vmatprep.mubr.f32.mxu0 0.0
    %1314 = vmatmul.mubr.f32.gmra.mrb[0].mxu0 %v1186
    %v1315 = vpop.f32.mrb[0].mxu0
    %v1316 = vadd.f32 %v1153, %v1315
    %v1317 = vpop.f32.mrb[0].mxu0
    %1318 = vmatprep.mubr.f32.mxu0 0.0
    %1319 = vmatmul.mubr.f32.gmra.mrb[0].mxu0 %v1189
    %v1320 = vpop.f32.mrb[0].mxu0
    %v1321 = vadd.f32 %v1154, %v1320
    %v1322 = vpop.f32.mrb[0].mxu0
    %1323 = vmatprep.mubr.f32.mxu0 0.0
    %1324 = vmatmul.mubr.f32.gmra.mrb[0].mxu0 %v1192
    %v1325 = vpop.f32.mrb[0].mxu0
    %v1326 = vadd.f32 %v1155, %v1325
    %v1327 = vpop.f32.mrb[0].mxu0
    %1328 = vmatprep.mubr.f32.mxu0 0.0
    %1329 = vmatmul.mubr.f32.gmra.mrb[0].mxu0 %v1195
    %v1330 = vpop.f32.mrb[0].mxu0
    %v1331 = vadd.f32 %v1156, %v1330
    %v1332 = vpop.f32.mrb[0].mxu0
    %1333 = vmatprep.mubr.f32.mxu0 0.0
    %1334 = vmatmul.mubr.f32.gmra.mrb[0].mxu0 %v1198
    %v1335 = vpop.f32.mrb[0].mxu0
    %v1336 = vadd.f32 %v1157, %v1335
    %v1337 = vpop.f32.mrb[0].mxu0
    %1338 = vmatprep.mubr.f32.mxu0 0.0
    %1339 = vmatmul.mubr.f32.gmra.mrb[0].mxu0 %v1201
    %v1340 = vpop.f32.mrb[0].mxu0
    %v1341 = vadd.f32 %v1158, %v1340
    %v1342 = vpop.f32.mrb[0].mxu0
    %1343 = vmatprep.mubr.f32.mxu0 0.0
    %1344 = vmatmul.mubr.f32.gmra.mrb[0].mxu0 %v1204
    %v1345 = vpop.f32.mrb[0].mxu0
    %v1346 = vadd.f32 %v1159, %v1345
    %v1347 = vpop.f32.mrb[0].mxu0
    %1348 = vmatprep.mubr.f32.mxu0 0.0
    %1349 = vmatmul.mubr.f32.gmra.mrb[0].mxu0 %v1207
    %v1350 = vpop.f32.mrb[0].mxu0
    %v1351 = vadd.f32 %v1160, %v1350
    %v1352 = vpop.f32.mrb[0].mxu0
    %1353 = vdwg.mxu0
    %1354 = vmax.xlane.f32.xlu0 %v1276
    %v1355 = vpop.xlane.xlu0 %1354
    %1356 = vmax.xlane.f32.xlu0 %v1281
    %v1357 = vpop.xlane.xlu0 %1356
    %1358 = vmax.xlane.f32.xlu0 %v1286
    %v1359 = vpop.xlane.xlu0 %1358
    %1360 = vmax.xlane.f32.xlu0 %v1291
    %v1361 = vpop.xlane.xlu0 %1360
    %1362 = vmax.xlane.f32.xlu0 %v1296
    %v1363 = vpop.xlane.xlu0 %1362
    %1364 = vmax.xlane.f32.xlu0 %v1301
    %v1365 = vpop.xlane.xlu0 %1364
    %1366 = vmax.xlane.f32.xlu0 %v1306
    %v1367 = vpop.xlane.xlu0 %1366
    %1368 = vmax.xlane.f32.xlu0 %v1311
    %v1369 = vpop.xlane.xlu0 %1368
    %1370 = vmax.xlane.f32.xlu0 %v1316
    %v1371 = vpop.xlane.xlu0 %1370
    %1372 = vmax.xlane.f32.xlu0 %v1321
    %v1373 = vpop.xlane.xlu0 %1372
    %1374 = vmax.xlane.f32.xlu0 %v1326
    %v1375 = vpop.xlane.xlu0 %1374
    %1376 = vmax.xlane.f32.xlu0 %v1331
    %v1377 = vpop.xlane.xlu0 %1376
    %1378 = vmax.xlane.f32.xlu0 %v1336
    %v1379 = vpop.xlane.xlu0 %1378
    %1380 = vmax.xlane.f32.xlu0 %v1341
    %v1381 = vpop.xlane.xlu0 %1380
    %1382 = vmax.xlane.f32.xlu0 %v1346
    %v1383 = vpop.xlane.xlu0 %1382
    %1384 = vmax.xlane.f32.xlu0 %v1351
    %v1385 = vpop.xlane.xlu0 %1384
    %v1386 = vsub.f32 %v1276, %v1355
    %v1387 = vsub.f32 %v1281, %v1357
    %v1388 = vsub.f32 %v1286, %v1359
    %v1389 = vsub.f32 %v1291, %v1361
    %v1390 = vsub.f32 %v1296, %v1363
    %v1391 = vsub.f32 %v1301, %v1365
    %v1392 = vsub.f32 %v1306, %v1367
    %v1393 = vsub.f32 %v1311, %v1369
    %v1394 = vsub.f32 %v1316, %v1371
    %v1395 = vsub.f32 %v1321, %v1373
    %v1396 = vsub.f32 %v1326, %v1375
    %v1397 = vsub.f32 %v1331, %v1377
    %v1398 = vsub.f32 %v1336, %v1379
    %v1399 = vsub.f32 %v1341, %v1381
    %v1400 = vsub.f32 %v1346, %v1383
    %v1401 = vsub.f32 %v1351, %v1385
    %v1402 = vmul.f32 %v1386, 1.442695
    %v1403 = vpow.pop %v1402
    %v1404 = vmul.f32 %v1387, 1.442695
    %v1405 = vpow.pop %v1404
    %v1406 = vmul.f32 %v1388, 1.442695
    %v1407 = vpow.pop %v1406
    %v1408 = vmul.f32 %v1389, 1.442695
    %v1409 = vpow.pop %v1408
    %v1410 = vmul.f32 %v1390, 1.442695
    %v1411 = vpow.pop %v1410
    %v1412 = vmul.f32 %v1391, 1.442695
    %v1413 = vpow.pop %v1412
    %v1414 = vmul.f32 %v1392, 1.442695
    %v1415 = vpow.pop %v1414
    %v1416 = vmul.f32 %v1393, 1.442695
    %v1417 = vpow.pop %v1416
    %v1418 = vmul.f32 %v1394, 1.442695
    %v1419 = vpow.pop %v1418
    %v1420 = vmul.f32 %v1395, 1.442695
    %v1421 = vpow.pop %v1420
    %v1422 = vmul.f32 %v1396, 1.442695
    %v1423 = vpow.pop %v1422
    %v1424 = vmul.f32 %v1397, 1.442695
    %v1425 = vpow.pop %v1424
    %v1426 = vmul.f32 %v1398, 1.442695
    %v1427 = vpow.pop %v1426
    %v1428 = vmul.f32 %v1399, 1.442695
    %v1429 = vpow.pop %v1428
    %v1430 = vmul.f32 %v1400, 1.442695
    %v1431 = vpow.pop %v1430
    %v1432 = vmul.f32 %v1401, 1.442695
    %v1433 = vpow.pop %v1432
    %1434 = vadd.xlane.f32.xlu0 %v1403
    %v1435 = vpop.xlane.xlu0 %1434
    %1436 = vadd.xlane.f32.xlu0 %v1405
    %v1437 = vpop.xlane.xlu0 %1436
    %1438 = vadd.xlane.f32.xlu0 %v1407
    %v1439 = vpop.xlane.xlu0 %1438
    %1440 = vadd.xlane.f32.xlu0 %v1409
    %v1441 = vpop.xlane.xlu0 %1440
    %1442 = vadd.xlane.f32.xlu0 %v1411
    %v1443 = vpop.xlane.xlu0 %1442
    %1444 = vadd.xlane.f32.xlu0 %v1413
    %v1445 = vpop.xlane.xlu0 %1444
    %1446 = vadd.xlane.f32.xlu0 %v1415
    %v1447 = vpop.xlane.xlu0 %1446
    %1448 = vadd.xlane.f32.xlu0 %v1417
    %v1449 = vpop.xlane.xlu0 %1448
    %1450 = vadd.xlane.f32.xlu0 %v1419
    %v1451 = vpop.xlane.xlu0 %1450
    %1452 = vadd.xlane.f32.xlu0 %v1421
    %v1453 = vpop.xlane.xlu0 %1452
    %1454 = vadd.xlane.f32.xlu0 %v1423
    %v1455 = vpop.xlane.xlu0 %1454
    %1456 = vadd.xlane.f32.xlu0 %v1425
    %v1457 = vpop.xlane.xlu0 %1456
    %1458 = vadd.xlane.f32.xlu0 %v1427
    %v1459 = vpop.xlane.xlu0 %1458
    %1460 = vadd.xlane.f32.xlu0 %v1429
    %v1461 = vpop.xlane.xlu0 %1460
    %1462 = vadd.xlane.f32.xlu0 %v1431
    %v1463 = vpop.xlane.xlu0 %1462
    %1464 = vadd.xlane.f32.xlu0 %v1433
    %v1465 = vpop.xlane.xlu0 %1464
    %v1466 = vrcp.pop %v1435
    %v1467 = vrcp.pop %v1437
    %v1468 = vrcp.pop %v1439
    %v1469 = vrcp.pop %v1441
    %v1470 = vrcp.pop %v1443
    %v1471 = vrcp.pop %v1445
    %v1472 = vrcp.pop %v1447
    %v1473 = vrcp.pop %v1449
    %v1474 = vrcp.pop %v1451
    %v1475 = vrcp.pop %v1453
    %v1476 = vrcp.pop %v1455
    %v1477 = vrcp.pop %v1457
    %v1478 = vrcp.pop %v1459
    %v1479 = vrcp.pop %v1461
    %v1480 = vrcp.pop %v1463
    %v1481 = vrcp.pop %v1465
    %v1482 = vmul.f32 %v1403, %v1466
    %v1483 = vmul.f32 %v1405, %v1467
    %v1484 = vmul.f32 %v1407, %v1468
    %v1485 = vmul.f32 %v1409, %v1469
    %v1486 = vmul.f32 %v1411, %v1470
    %v1487 = vmul.f32 %v1413, %v1471
    %v1488 = vmul.f32 %v1415, %v1472
    %v1489 = vmul.f32 %v1417, %v1473
    %v1490 = vmul.f32 %v1419, %v1474
    %v1491 = vmul.f32 %v1421, %v1475
    %v1492 = vmul.f32 %v1423, %v1476
    %v1493 = vmul.f32 %v1425, %v1477
    %v1494 = vmul.f32 %v1427, %v1478
    %v1495 = vmul.f32 %v1429, %v1479
    %v1496 = vmul.f32 %v1431, %v1480
    %v1497 = vmul.f32 %v1433, %v1481
    %1498 = vmatprep.subr.mxu0 0.0
    %1499 = vmatpush1.msra.mxu0 %v76
    %1500 = vmatprep.subr.mxu0 0.0
    %1501 = vmatpush1.msra.mxu0 %v77
    %1502 = vmatprep.subr.mxu0 0.0
    %1503 = vmatpush1.msra.mxu0 %v78
    %1504 = vmatprep.subr.mxu0 0.0
    %1505 = vmatpush1.msra.mxu0 %v79
    %1506 = vmatprep.subr.mxu0 0.0
    %1507 = vmatpush1.msra.mxu0 0.0
    %1508 = vmatprep.subr.mxu0 0.0
    %1509 = vmatpush1.msra.mxu0 0.0
    %1510 = vmatprep.subr.mxu0 0.0
    %1511 = vmatpush1.msra.mxu0 0.0
    %1512 = vmatprep.subr.mxu0 0.0
    %1513 = vmatpush1.msra.mxu0 0.0
    %1514 = vmatprep.subr.mxu0 0.0
    %1515 = vmatpush1.msra.mxu0 0.0
    %1516 = vmatprep.subr.mxu0 0.0
    %1517 = vmatpush1.msra.mxu0 0.0
    %1518 = vmatprep.subr.mxu0 0.0
    %1519 = vmatpush1.msra.mxu0 0.0
    %1520 = vmatprep.subr.mxu0 0.0
    %1521 = vmatpush1.msra.mxu0 0.0
    %1522 = vmatprep.subr.mxu0 0.0
    %1523 = vmatpush1.msra.mxu0 0.0
    %1524 = vmatprep.subr.mxu0 0.0
    %1525 = vmatpush1.msra.mxu0 0.0
    %1526 = vmatprep.subr.mxu0 0.0
    %1527 = vmatpush1.msra.mxu0 0.0
    %1528 = vmatprep.subr.mxu0 0.0
    %1529 = vmatpush1.msra.mxu0 0.0
    %1530 = vmatprep.subr.mxu0 0.0
    %1531 = vmatpush1.msra.mxu0 0.0
    %1532 = vmatprep.subr.mxu0 0.0
    %1533 = vmatpush1.msra.mxu0 0.0
    %1534 = vmatprep.subr.mxu0 0.0
    %1535 = vmatpush1.msra.mxu0 0.0
    %1536 = vmatprep.subr.mxu0 0.0
    %1537 = vmatpush1.msra.mxu0 0.0
    %1538 = vmatprep.subr.mxu0 0.0
    %1539 = vmatpush1.msra.mxu0 0.0
    %1540 = vmatprep.subr.mxu0 0.0
    %1541 = vmatpush1.msra.mxu0 0.0
    %1542 = vmatprep.subr.mxu0 0.0
    %1543 = vmatpush1.msra.mxu0 0.0
    %1544 = vmatprep.subr.mxu0 0.0
    %1545 = vmatpush1.msra.mxu0 0.0
    %1546 = vmatprep.subr.mxu0 0.0
    %1547 = vmatpush1.msra.mxu0 0.0
    %1548 = vmatprep.subr.mxu0 0.0
    %1549 = vmatpush1.msra.mxu0 0.0
    %1550 = vmatprep.subr.mxu0 0.0
    %1551 = vmatpush1.msra.mxu0 0.0
    %1552 = vmatprep.subr.mxu0 0.0
    %1553 = vmatpush1.msra.mxu0 0.0
    %1554 = vmatprep.subr.mxu0 0.0
    %1555 = vmatpush1.msra.mxu0 0.0
    %1556 = vmatprep.subr.mxu0 0.0
    %1557 = vmatpush1.msra.mxu0 0.0
    %1558 = vmatprep.subr.mxu0 0.0
    %1559 = vmatpush1.msra.mxu0 0.0
    %1560 = vmatprep.subr.mxu0 0.0
    %1561 = vmatpush1.msra.mxu0 0.0
    %1562 = vmatprep.mubr.f32.mxu0 0.0
    %1563 = vmatmul.mubr.f32.gmra.mrb[0].mxu0 %v953
    %v1564 = vpop.f32.mrb[0].mxu0
    %v1565 = vadd.f32 0.0, %v1564
    %v1566 = vpop.f32.mrb[0].mxu0
    %1567 = vmatprep.mubr.f32.mxu0 0.0
    %1568 = vmatmul.mubr.f32.gmra.mrb[0].mxu0 %v956
    %v1569 = vpop.f32.mrb[0].mxu0
    %v1570 = vadd.f32 0.0, %v1569
    %v1571 = vpop.f32.mrb[0].mxu0
    %1572 = vmatprep.mubr.f32.mxu0 0.0
    %1573 = vmatmul.mubr.f32.gmra.mrb[0].mxu0 %v959
    %v1574 = vpop.f32.mrb[0].mxu0
    %v1575 = vadd.f32 0.0, %v1574
    %v1576 = vpop.f32.mrb[0].mxu0
    %1577 = vmatprep.mubr.f32.mxu0 0.0
    %1578 = vmatmul.mubr.f32.gmra.mrb[0].mxu0 %v962
    %v1579 = vpop.f32.mrb[0].mxu0
    %v1580 = vadd.f32 0.0, %v1579
    %v1581 = vpop.f32.mrb[0].mxu0
    %1582 = vmatprep.mubr.f32.mxu0 0.0
    %1583 = vmatmul.mubr.f32.gmra.mrb[0].mxu0 %v965
    %v1584 = vpop.f32.mrb[0].mxu0
    %v1585 = vadd.f32 0.0, %v1584
    %v1586 = vpop.f32.mrb[0].mxu0
    %1587 = vmatprep.mubr.f32.mxu0 0.0
    %1588 = vmatmul.mubr.f32.gmra.mrb[0].mxu0 %v968
    %v1589 = vpop.f32.mrb[0].mxu0
    %v1590 = vadd.f32 0.0, %v1589
    %v1591 = vpop.f32.mrb[0].mxu0
    %1592 = vmatprep.mubr.f32.mxu0 0.0
    %1593 = vmatmul.mubr.f32.gmra.mrb[0].mxu0 %v971
    %v1594 = vpop.f32.mrb[0].mxu0
    %v1595 = vadd.f32 0.0, %v1594
    %v1596 = vpop.f32.mrb[0].mxu0
    %1597 = vmatprep.mubr.f32.mxu0 0.0
    %1598 = vmatmul.mubr.f32.gmra.mrb[0].mxu0 %v974
    %v1599 = vpop.f32.mrb[0].mxu0
    %v1600 = vadd.f32 0.0, %v1599
    %v1601 = vpop.f32.mrb[0].mxu0
    %1602 = vmatprep.mubr.f32.mxu0 0.0
    %1603 = vmatmul.mubr.f32.gmra.mrb[0].mxu0 %v977
    %v1604 = vpop.f32.mrb[0].mxu0
    %v1605 = vadd.f32 0.0, %v1604
    %v1606 = vpop.f32.mrb[0].mxu0
    %1607 = vmatprep.mubr.f32.mxu0 0.0
    %1608 = vmatmul.mubr.f32.gmra.mrb[0].mxu0 %v980
    %v1609 = vpop.f32.mrb[0].mxu0
    %v1610 = vadd.f32 0.0, %v1609
    %v1611 = vpop.f32.mrb[0].mxu0
    %1612 = vmatprep.mubr.f32.mxu0 0.0
    %1613 = vmatmul.mubr.f32.gmra.mrb[0].mxu0 %v983
    %v1614 = vpop.f32.mrb[0].mxu0
    %v1615 = vadd.f32 0.0, %v1614
    %v1616 = vpop.f32.mrb[0].mxu0
    %1617 = vmatprep.mubr.f32.mxu0 0.0
    %1618 = vmatmul.mubr.f32.gmra.mrb[0].mxu0 %v986
    %v1619 = vpop.f32.mrb[0].mxu0
    %v1620 = vadd.f32 0.0, %v1619
    %v1621 = vpop.f32.mrb[0].mxu0
    %1622 = vmatprep.mubr.f32.mxu0 0.0
    %1623 = vmatmul.mubr.f32.gmra.mrb[0].mxu0 %v989
    %v1624 = vpop.f32.mrb[0].mxu0
    %v1625 = vadd.f32 0.0, %v1624
    %v1626 = vpop.f32.mrb[0].mxu0
    %1627 = vmatprep.mubr.f32.mxu0 0.0
    %1628 = vmatmul.mubr.f32.gmra.mrb[0].mxu0 %v992
    %v1629 = vpop.f32.mrb[0].mxu0
    %v1630 = vadd.f32 0.0, %v1629
    %v1631 = vpop.f32.mrb[0].mxu0
    %1632 = vmatprep.mubr.f32.mxu0 0.0
    %1633 = vmatmul.mubr.f32.gmra.mrb[0].mxu0 %v995
    %v1634 = vpop.f32.mrb[0].mxu0
    %v1635 = vadd.f32 0.0, %v1634
    %v1636 = vpop.f32.mrb[0].mxu0
    %1637 = vmatprep.mubr.f32.mxu0 0.0
    %1638 = vmatmul.mubr.f32.gmra.mrb[0].mxu0 %v998
    %v1639 = vpop.f32.mrb[0].mxu0
    %v1640 = vadd.f32 0.0, %v1639
    %v1641 = vpop.f32.mrb[0].mxu0
    %1642 = vdwg.mxu0
    %1643 = vmatprep.subr.mxu0 0.0
    %1644 = vmatpush1.msra.mxu0 %v1565
    %1645 = vmatprep.subr.mxu0 0.0
    %1646 = vmatpush1.msra.mxu0 %v1570
    %1647 = vmatprep.subr.mxu0 0.0
    %1648 = vmatpush1.msra.mxu0 %v1575
    %1649 = vmatprep.subr.mxu0 0.0
    %1650 = vmatpush1.msra.mxu0 %v1580
    %1651 = vmatprep.subr.mxu0 0.0
    %1652 = vmatpush1.msra.mxu0 %v1585
    %1653 = vmatprep.subr.mxu0 0.0
    %1654 = vmatpush1.msra.mxu0 %v1590
    %1655 = vmatprep.subr.mxu0 0.0
    %1656 = vmatpush1.msra.mxu0 %v1595
    %1657 = vmatprep.subr.mxu0 0.0
    %1658 = vmatpush1.msra.mxu0 %v1600
    %1659 = vmatprep.subr.mxu0 0.0
    %1660 = vmatpush1.msra.mxu0 %v1605
    %1661 = vmatprep.subr.mxu0 0.0
    %1662 = vmatpush1.msra.mxu0 %v1610
    %1663 = vmatprep.subr.mxu0 0.0
    %1664 = vmatpush1.msra.mxu0 %v1615
    %1665 = vmatprep.subr.mxu0 0.0
    %1666 = vmatpush1.msra.mxu0 %v1620
    %1667 = vmatprep.subr.mxu0 0.0
    %1668 = vmatpush1.msra.mxu0 %v1625
    %1669 = vmatprep.subr.mxu0 0.0
    %1670 = vmatpush1.msra.mxu0 %v1630
    %1671 = vmatprep.subr.mxu0 0.0
    %1672 = vmatpush1.msra.mxu0 %v1635
    %1673 = vmatprep.subr.mxu0 0.0
    %1674 = vmatpush1.msra.mxu0 %v1640
    %1675 = vmatprep.subr.mxu0 0.0
    %1676 = vmatpush1.msra.mxu0 0.0
    %1677 = vmatprep.subr.mxu0 0.0
    %1678 = vmatpush1.msra.mxu0 0.0
    %1679 = vmatprep.subr.mxu0 0.0
    %1680 = vmatpush1.msra.mxu0 0.0
    %1681 = vmatprep.subr.mxu0 0.0
    %1682 = vmatpush1.msra.mxu0 0.0
    %1683 = vmatprep.subr.mxu0 0.0
    %1684 = vmatpush1.msra.mxu0 0.0
    %1685 = vmatprep.subr.mxu0 0.0
    %1686 = vmatpush1.msra.mxu0 0.0
    %1687 = vmatprep.subr.mxu0 0.0
    %1688 = vmatpush1.msra.mxu0 0.0
    %1689 = vmatprep.subr.mxu0 0.0
    %1690 = vmatpush1.msra.mxu0 0.0
    %1691 = vmatprep.subr.mxu0 0.0
    %1692 = vmatpush1.msra.mxu0 0.0
    %1693 = vmatprep.subr.mxu0 0.0
    %1694 = vmatpush1.msra.mxu0 0.0
    %1695 = vmatprep.subr.mxu0 0.0
    %1696 = vmatpush1.msra.mxu0 0.0
    %1697 = vmatprep.subr.mxu0 0.0
    %1698 = vmatpush1.msra.mxu0 0.0
    %1699 = vmatprep.subr.mxu0 0.0
    %1700 = vmatpush1.msra.mxu0 0.0
    %1701 = vmatprep.subr.mxu0 0.0
    %1702 = vmatpush1.msra.mxu0 0.0
    %1703 = vmatprep.subr.mxu0 0.0
    %1704 = vmatpush1.msra.mxu0 0.0
    %1705 = vmatprep.subr.mxu0 0.0
    %1706 = vmatpush1.msra.mxu0 0.0
    %1707 = vmatprep.mubr.f32.mxu0 0.0
    %1708 = vmatmul.mubr.f32.gmra.mrb[0].mxu0 %v1482
    %v1709 = vpop.f32.mrb[0].mxu0
    %v1710 = vadd.f32 0.0, %v1709
    %v1711 = vpop.f32.mrb[0].mxu0
    %1712 = vmatprep.mubr.f32.mxu0 0.0
    %1713 = vmatmul.mubr.f32.gmra.mrb[0].mxu0 %v1483
    %v1714 = vpop.f32.mrb[0].mxu0
    %v1715 = vadd.f32 0.0, %v1714
    %v1716 = vpop.f32.mrb[0].mxu0
    %1717 = vmatprep.mubr.f32.mxu0 0.0
    %1718 = vmatmul.mubr.f32.gmra.mrb[0].mxu0 %v1484
    %v1719 = vpop.f32.mrb[0].mxu0
    %v1720 = vadd.f32 0.0, %v1719
    %v1721 = vpop.f32.mrb[0].mxu0
    %1722 = vmatprep.mubr.f32.mxu0 0.0
    %1723 = vmatmul.mubr.f32.gmra.mrb[0].mxu0 %v1485
    %v1724 = vpop.f32.mrb[0].mxu0
    %v1725 = vadd.f32 0.0, %v1724
    %v1726 = vpop.f32.mrb[0].mxu0
    %1727 = vmatprep.mubr.f32.mxu0 0.0
    %1728 = vmatmul.mubr.f32.gmra.mrb[0].mxu0 %v1486
    %v1729 = vpop.f32.mrb[0].mxu0
    %v1730 = vadd.f32 0.0, %v1729
    %v1731 = vpop.f32.mrb[0].mxu0
    %1732 = vmatprep.mubr.f32.mxu0 0.0
    %1733 = vmatmul.mubr.f32.gmra.mrb[0].mxu0 %v1487
    %v1734 = vpop.f32.mrb[0].mxu0
    %v1735 = vadd.f32 0.0, %v1734
    %v1736 = vpop.f32.mrb[0].mxu0
    %1737 = vmatprep.mubr.f32.mxu0 0.0
    %1738 = vmatmul.mubr.f32.gmra.mrb[0].mxu0 %v1488
    %v1739 = vpop.f32.mrb[0].mxu0
    %v1740 = vadd.f32 0.0, %v1739
    %v1741 = vpop.f32.mrb[0].mxu0
    %1742 = vmatprep.mubr.f32.mxu0 0.0
    %1743 = vmatmul.mubr.f32.gmra.mrb[0].mxu0 %v1489
    %v1744 = vpop.f32.mrb[0].mxu0
    %v1745 = vadd.f32 0.0, %v1744
    %v1746 = vpop.f32.mrb[0].mxu0
    %1747 = vmatprep.mubr.f32.mxu0 0.0
    %1748 = vmatmul.mubr.f32.gmra.mrb[0].mxu0 %v1490
    %v1749 = vpop.f32.mrb[0].mxu0
    %v1750 = vadd.f32 0.0, %v1749
    %v1751 = vpop.f32.mrb[0].mxu0
    %1752 = vmatprep.mubr.f32.mxu0 0.0
    %1753 = vmatmul.mubr.f32.gmra.mrb[0].mxu0 %v1491
    %v1754 = vpop.f32.mrb[0].mxu0
    %v1755 = vadd.f32 0.0, %v1754
    %v1756 = vpop.f32.mrb[0].mxu0
    %1757 = vmatprep.mubr.f32.mxu0 0.0
    %1758 = vmatmul.mubr.f32.gmra.mrb[0].mxu0 %v1492
    %v1759 = vpop.f32.mrb[0].mxu0
    %v1760 = vadd.f32 0.0, %v1759
    %v1761 = vpop.f32.mrb[0].mxu0
    %1762 = vmatprep.mubr.f32.mxu0 0.0
    %1763 = vmatmul.mubr.f32.gmra.mrb[0].mxu0 %v1493
    %v1764 = vpop.f32.mrb[0].mxu0
    %v1765 = vadd.f32 0.0, %v1764
    %v1766 = vpop.f32.mrb[0].mxu0
    %1767 = vmatprep.mubr.f32.mxu0 0.0
    %1768 = vmatmul.mubr.f32.gmra.mrb[0].mxu0 %v1494
    %v1769 = vpop.f32.mrb[0].mxu0
    %v1770 = vadd.f32 0.0, %v1769
    %v1771 = vpop.f32.mrb[0].mxu0
    %1772 = vmatprep.mubr.f32.mxu0 0.0
    %1773 = vmatmul.mubr.f32.gmra.mrb[0].mxu0 %v1495
    %v1774 = vpop.f32.mrb[0].mxu0
    %v1775 = vadd.f32 0.0, %v1774
    %v1776 = vpop.f32.mrb[0].mxu0
    %1777 = vmatprep.mubr.f32.mxu0 0.0
    %1778 = vmatmul.mubr.f32.gmra.mrb[0].mxu0 %v1496
    %v1779 = vpop.f32.mrb[0].mxu0
    %v1780 = vadd.f32 0.0, %v1779
    %v1781 = vpop.f32.mrb[0].mxu0
    %1782 = vmatprep.mubr.f32.mxu0 0.0
    %1783 = vmatmul.mubr.f32.gmra.mrb[0].mxu0 %v1497
    %v1784 = vpop.f32.mrb[0].mxu0
    %v1785 = vadd.f32 0.0, %v1784
    %v1786 = vpop.f32.mrb[0].mxu0
    %1787 = vdwg.mxu0
    %1788 = vmatprep.subr.mxu0 0.0
    %1789 = vmatpush1.msra.mxu0 %v1710
    %1790 = vmatprep.subr.mxu0 0.0
    %1791 = vmatpush1.msra.mxu0 %v1715
    %1792 = vmatprep.subr.mxu0 0.0
    %1793 = vmatpush1.msra.mxu0 %v1720
    %1794 = vmatprep.subr.mxu0 0.0
    %1795 = vmatpush1.msra.mxu0 %v1725
    %1796 = vmatprep.subr.mxu0 0.0
    %1797 = vmatpush1.msra.mxu0 %v1730
    %1798 = vmatprep.subr.mxu0 0.0
    %1799 = vmatpush1.msra.mxu0 %v1735
    %1800 = vmatprep.subr.mxu0 0.0
    %1801 = vmatpush1.msra.mxu0 %v1740
    %1802 = vmatprep.subr.mxu0 0.0
    %1803 = vmatpush1.msra.mxu0 %v1745
    %1804 = vmatprep.subr.mxu0 0.0
    %1805 = vmatpush1.msra.mxu0 %v1750
    %1806 = vmatprep.subr.mxu0 0.0
    %1807 = vmatpush1.msra.mxu0 %v1755
    %1808 = vmatprep.subr.mxu0 0.0
    %1809 = vmatpush1.msra.mxu0 %v1760
    %1810 = vmatprep.subr.mxu0 0.0
    %1811 = vmatpush1.msra.mxu0 %v1765
    %1812 = vmatprep.subr.mxu0 0.0
    %1813 = vmatpush1.msra.mxu0 %v1770
    %1814 = vmatprep.subr.mxu0 0.0
    %1815 = vmatpush1.msra.mxu0 %v1775
    %1816 = vmatprep.subr.mxu0 0.0
    %1817 = vmatpush1.msra.mxu0 %v1780
    %1818 = vmatprep.subr.mxu0 0.0
    %1819 = vmatpush1.msra.mxu0 %v1785
    %1820 = vmatprep.subr.mxu0 0.0
    %1821 = vmatpush1.msra.mxu0 0.0
    %1822 = vmatprep.subr.mxu0 0.0
    %1823 = vmatpush1.msra.mxu0 0.0
    %1824 = vmatprep.subr.mxu0 0.0
    %1825 = vmatpush1.msra.mxu0 0.0
    %1826 = vmatprep.subr.mxu0 0.0
    %1827 = vmatpush1.msra.mxu0 0.0
    %1828 = vmatprep.subr.mxu0 0.0
    %1829 = vmatpush1.msra.mxu0 0.0
    %1830 = vmatprep.subr.mxu0 0.0
    %1831 = vmatpush1.msra.mxu0 0.0
    %1832 = vmatprep.subr.mxu0 0.0
    %1833 = vmatpush1.msra.mxu0 0.0
    %1834 = vmatprep.subr.mxu0 0.0
    %1835 = vmatpush1.msra.mxu0 0.0
    %1836 = vmatprep.subr.mxu0 0.0
    %1837 = vmatpush1.msra.mxu0 0.0
    %1838 = vmatprep.subr.mxu0 0.0
    %1839 = vmatpush1.msra.mxu0 0.0
    %1840 = vmatprep.subr.mxu0 0.0
    %1841 = vmatpush1.msra.mxu0 0.0
    %1842 = vmatprep.subr.mxu0 0.0
    %1843 = vmatpush1.msra.mxu0 0.0
    %1844 = vmatprep.subr.mxu0 0.0
    %1845 = vmatpush1.msra.mxu0 0.0
    %1846 = vmatprep.subr.mxu0 0.0
    %1847 = vmatpush1.msra.mxu0 0.0
    %1848 = vmatprep.subr.mxu0 0.0
    %1849 = vmatpush1.msra.mxu0 0.0
    %1850 = vmatprep.subr.mxu0 0.0
    %1851 = vmatpush1.msra.mxu0 0.0
    %1852 = vmatprep.mubr.f32.mxu0 0.0
    %1853 = vmatmul.mubr.f32.gmra.mrb[0].mxu0 %v84
    %v1854 = vpop.f32.mrb[0].mxu0
    %v1855 = vadd.f32 0.0, %v1854
    %v1856 = vpop.f32.mrb[0].mxu0
    %1857 = vmatprep.mubr.f32.mxu0 0.0
    %1858 = vmatmul.mubr.f32.gmra.mrb[0].mxu0 %v85
    %v1859 = vpop.f32.mrb[0].mxu0
    %v1860 = vadd.f32 0.0, %v1859
    %v1861 = vpop.f32.mrb[0].mxu0
    %1862 = vmatprep.mubr.f32.mxu0 0.0
    %1863 = vmatmul.mubr.f32.gmra.mrb[0].mxu0 %v86
    %v1864 = vpop.f32.mrb[0].mxu0
    %v1865 = vadd.f32 0.0, %v1864
    %v1866 = vpop.f32.mrb[0].mxu0
    %1867 = vmatprep.mubr.f32.mxu0 0.0
    %1868 = vmatmul.mubr.f32.gmra.mrb[0].mxu0 %v87
    %v1869 = vpop.f32.mrb[0].mxu0
    %v1870 = vadd.f32 0.0, %v1869
    %v1871 = vpop.f32.mrb[0].mxu0
    %1872 = vmatprep.mubr.f32.mxu0 0.0
    %1873 = vmatmul.mubr.f32.gmra.mrb[0].mxu0 %v88
    %v1874 = vpop.f32.mrb[0].mxu0
    %v1875 = vadd.f32 0.0, %v1874
    %v1876 = vpop.f32.mrb[0].mxu0
    %1877 = vmatprep.mubr.f32.mxu0 0.0
    %1878 = vmatmul.mubr.f32.gmra.mrb[0].mxu0 %v89
    %v1879 = vpop.f32.mrb[0].mxu0
    %v1880 = vadd.f32 0.0, %v1879
    %v1881 = vpop.f32.mrb[0].mxu0
    %1882 = vmatprep.mubr.f32.mxu0 0.0
    %1883 = vmatmul.mubr.f32.gmra.mrb[0].mxu0 %v90
    %v1884 = vpop.f32.mrb[0].mxu0
    %v1885 = vadd.f32 0.0, %v1884
    %v1886 = vpop.f32.mrb[0].mxu0
    %1887 = vmatprep.mubr.f32.mxu0 0.0
    %1888 = vmatmul.mubr.f32.gmra.mrb[0].mxu0 %v91
    %v1889 = vpop.f32.mrb[0].mxu0
    %v1890 = vadd.f32 0.0, %v1889
    %v1891 = vpop.f32.mrb[0].mxu0
    %1892 = vmatprep.mubr.f32.mxu0 0.0
    %1893 = vmatmul.mubr.f32.gmra.mrb[0].mxu0 %v92
    %v1894 = vpop.f32.mrb[0].mxu0
    %v1895 = vadd.f32 0.0, %v1894
    %v1896 = vpop.f32.mrb[0].mxu0
    %1897 = vmatprep.mubr.f32.mxu0 0.0
    %1898 = vmatmul.mubr.f32.gmra.mrb[0].mxu0 %v93
    %v1899 = vpop.f32.mrb[0].mxu0
    %v1900 = vadd.f32 0.0, %v1899
    %v1901 = vpop.f32.mrb[0].mxu0
    %1902 = vmatprep.mubr.f32.mxu0 0.0
    %1903 = vmatmul.mubr.f32.gmra.mrb[0].mxu0 %v94
    %v1904 = vpop.f32.mrb[0].mxu0
    %v1905 = vadd.f32 0.0, %v1904
    %v1906 = vpop.f32.mrb[0].mxu0
    %1907 = vmatprep.mubr.f32.mxu0 0.0
    %1908 = vmatmul.mubr.f32.gmra.mrb[0].mxu0 %v95
    %v1909 = vpop.f32.mrb[0].mxu0
    %v1910 = vadd.f32 0.0, %v1909
    %v1911 = vpop.f32.mrb[0].mxu0
    %1912 = vmatprep.mubr.f32.mxu0 0.0
    %1913 = vmatmul.mubr.f32.gmra.mrb[0].mxu0 %v96
    %v1914 = vpop.f32.mrb[0].mxu0
    %v1915 = vadd.f32 0.0, %v1914
    %v1916 = vpop.f32.mrb[0].mxu0
    %1917 = vmatprep.mubr.f32.mxu0 0.0
    %1918 = vmatmul.mubr.f32.gmra.mrb[0].mxu0 %v97
    %v1919 = vpop.f32.mrb[0].mxu0
    %v1920 = vadd.f32 0.0, %v1919
    %v1921 = vpop.f32.mrb[0].mxu0
    %1922 = vmatprep.mubr.f32.mxu0 0.0
    %1923 = vmatmul.mubr.f32.gmra.mrb[0].mxu0 %v98
    %v1924 = vpop.f32.mrb[0].mxu0
    %v1925 = vadd.f32 0.0, %v1924
    %v1926 = vpop.f32.mrb[0].mxu0
    %1927 = vmatprep.mubr.f32.mxu0 0.0
    %1928 = vmatmul.mubr.f32.gmra.mrb[0].mxu0 %v99
    %v1929 = vpop.f32.mrb[0].mxu0
    %v1930 = vadd.f32 0.0, %v1929
    %v1931 = vpop.f32.mrb[0].mxu0
    %1932 = vdwg.mxu0
    %v1933 = vlaneseq
    %v1934 = vshrl.u32 %v1933, 7
    %v1935 = vsub.s32 3, %v1934
    %v1936 = vrot.slane %v18, %v1935
    %1937 = vmatprep.subr.mxu0 0.0
    %1938 = vmatpush1.msra.mxu0 %v56
    %1939 = vmatprep.subr.mxu0 0.0
    %1940 = vmatpush1.msra.mxu0 %v57
    %1941 = vmatprep.subr.mxu0 0.0
    %1942 = vmatpush1.msra.mxu0 %v58
    %1943 = vmatprep.subr.mxu0 0.0
    %1944 = vmatpush1.msra.mxu0 %v59
    %1945 = vmatprep.subr.mxu0 0.0
    %1946 = vmatpush1.msra.mxu0 0.0
    %1947 = vmatprep.subr.mxu0 0.0
    %1948 = vmatpush1.msra.mxu0 0.0
    %1949 = vmatprep.subr.mxu0 0.0
    %1950 = vmatpush1.msra.mxu0 0.0
    %1951 = vmatprep.subr.mxu0 0.0
    %1952 = vmatpush1.msra.mxu0 0.0
    %1953 = vmatprep.subr.mxu0 0.0
    %1954 = vmatpush1.msra.mxu0 0.0
    %1955 = vmatprep.subr.mxu0 0.0
    %1956 = vmatpush1.msra.mxu0 0.0
    %1957 = vmatprep.subr.mxu0 0.0
    %1958 = vmatpush1.msra.mxu0 0.0
    %1959 = vmatprep.subr.mxu0 0.0
    %1960 = vmatpush1.msra.mxu0 0.0
    %1961 = vmatprep.subr.mxu0 0.0
    %1962 = vmatpush1.msra.mxu0 0.0
    %1963 = vmatprep.subr.mxu0 0.0
    %1964 = vmatpush1.msra.mxu0 0.0
    %1965 = vmatprep.subr.mxu0 0.0
    %1966 = vmatpush1.msra.mxu0 0.0
    %1967 = vmatprep.subr.mxu0 0.0
    %1968 = vmatpush1.msra.mxu0 0.0
    %1969 = vmatprep.subr.mxu0 0.0
    %1970 = vmatpush1.msra.mxu0 0.0
    %1971 = vmatprep.subr.mxu0 0.0
    %1972 = vmatpush1.msra.mxu0 0.0
    %1973 = vmatprep.subr.mxu0 0.0
    %1974 = vmatpush1.msra.mxu0 0.0
    %1975 = vmatprep.subr.mxu0 0.0
    %1976 = vmatpush1.msra.mxu0 0.0
    %1977 = vmatprep.subr.mxu0 0.0
    %1978 = vmatpush1.msra.mxu0 0.0
    %1979 = vmatprep.subr.mxu0 0.0
    %1980 = vmatpush1.msra.mxu0 0.0
    %1981 = vmatprep.subr.mxu0 0.0
    %1982 = vmatpush1.msra.mxu0 0.0
    %1983 = vmatprep.subr.mxu0 0.0
    %1984 = vmatpush1.msra.mxu0 0.0
    %1985 = vmatprep.subr.mxu0 0.0
    %1986 = vmatpush1.msra.mxu0 0.0
    %1987 = vmatprep.subr.mxu0 0.0
    %1988 = vmatpush1.msra.mxu0 0.0
    %1989 = vmatprep.subr.mxu0 0.0
    %1990 = vmatpush1.msra.mxu0 0.0
    %1991 = vmatprep.subr.mxu0 0.0
    %1992 = vmatpush1.msra.mxu0 0.0
    %1993 = vmatprep.subr.mxu0 0.0
    %1994 = vmatpush1.msra.mxu0 0.0
    %1995 = vmatprep.subr.mxu0 0.0
    %1996 = vmatpush1.msra.mxu0 0.0
    %1997 = vmatprep.subr.mxu0 0.0
    %1998 = vmatpush1.msra.mxu0 0.0
    %1999 = vmatprep.subr.mxu0 0.0
    %2000 = vmatpush1.msra.mxu0 0.0
    %2001 = vmatprep.mubr.f32.mxu0 0.0
    %2002 = vmatmul.mubr.f32.gmra.mrb[0].mxu0 %v953
    %v2003 = vpop.f32.mrb[0].mxu0
    %v2004 = vadd.f32 %v1936, %v2003
    %v2005 = vpop.f32.mrb[0].mxu0
    %2006 = vmatprep.mubr.f32.mxu0 0.0
    %2007 = vmatmul.mubr.f32.gmra.mrb[0].mxu0 %v956
    %v2008 = vpop.f32.mrb[0].mxu0
    %v2009 = vadd.f32 %v1936, %v2008
    %v2010 = vpop.f32.mrb[0].mxu0
    %2011 = vmatprep.mubr.f32.mxu0 0.0
    %2012 = vmatmul.mubr.f32.gmra.mrb[0].mxu0 %v959
    %v2013 = vpop.f32.mrb[0].mxu0
    %v2014 = vadd.f32 %v1936, %v2013
    %v2015 = vpop.f32.mrb[0].mxu0
    %2016 = vmatprep.mubr.f32.mxu0 0.0
    %2017 = vmatmul.mubr.f32.gmra.mrb[0].mxu0 %v962
    %v2018 = vpop.f32.mrb[0].mxu0
    %v2019 = vadd.f32 %v1936, %v2018
    %v2020 = vpop.f32.mrb[0].mxu0
    %2021 = vmatprep.mubr.f32.mxu0 0.0
    %2022 = vmatmul.mubr.f32.gmra.mrb[0].mxu0 %v965
    %v2023 = vpop.f32.mrb[0].mxu0
    %v2024 = vadd.f32 %v1936, %v2023
    %v2025 = vpop.f32.mrb[0].mxu0
    %2026 = vmatprep.mubr.f32.mxu0 0.0
    %2027 = vmatmul.mubr.f32.gmra.mrb[0].mxu0 %v968
    %v2028 = vpop.f32.mrb[0].mxu0
    %v2029 = vadd.f32 %v1936, %v2028
    %v2030 = vpop.f32.mrb[0].mxu0
    %2031 = vmatprep.mubr.f32.mxu0 0.0
    %2032 = vmatmul.mubr.f32.gmra.mrb[0].mxu0 %v971
    %v2033 = vpop.f32.mrb[0].mxu0
    %v2034 = vadd.f32 %v1936, %v2033
    %v2035 = vpop.f32.mrb[0].mxu0
    %2036 = vmatprep.mubr.f32.mxu0 0.0
    %2037 = vmatmul.mubr.f32.gmra.mrb[0].mxu0 %v974
    %v2038 = vpop.f32.mrb[0].mxu0
    %v2039 = vadd.f32 %v1936, %v2038
    %v2040 = vpop.f32.mrb[0].mxu0
    %2041 = vmatprep.mubr.f32.mxu0 0.0
    %2042 = vmatmul.mubr.f32.gmra.mrb[0].mxu0 %v977
    %v2043 = vpop.f32.mrb[0].mxu0
    %v2044 = vadd.f32 %v1936, %v2043
    %v2045 = vpop.f32.mrb[0].mxu0
    %2046 = vmatprep.mubr.f32.mxu0 0.0
    %2047 = vmatmul.mubr.f32.gmra.mrb[0].mxu0 %v980
    %v2048 = vpop.f32.mrb[0].mxu0
    %v2049 = vadd.f32 %v1936, %v2048
    %v2050 = vpop.f32.mrb[0].mxu0
    %2051 = vmatprep.mubr.f32.mxu0 0.0
    %2052 = vmatmul.mubr.f32.gmra.mrb[0].mxu0 %v983
    %v2053 = vpop.f32.mrb[0].mxu0
    %v2054 = vadd.f32 %v1936, %v2053
    %v2055 = vpop.f32.mrb[0].mxu0
    %2056 = vmatprep.mubr.f32.mxu0 0.0
    %2057 = vmatmul.mubr.f32.gmra.mrb[0].mxu0 %v986
    %v2058 = vpop.f32.mrb[0].mxu0
    %v2059 = vadd.f32 %v1936, %v2058
    %v2060 = vpop.f32.mrb[0].mxu0
    %2061 = vmatprep.mubr.f32.mxu0 0.0
    %2062 = vmatmul.mubr.f32.gmra.mrb[0].mxu0 %v989
    %v2063 = vpop.f32.mrb[0].mxu0
    %v2064 = vadd.f32 %v1936, %v2063
    %v2065 = vpop.f32.mrb[0].mxu0
    %2066 = vmatprep.mubr.f32.mxu0 0.0
    %2067 = vmatmul.mubr.f32.gmra.mrb[0].mxu0 %v992
    %v2068 = vpop.f32.mrb[0].mxu0
    %v2069 = vadd.f32 %v1936, %v2068
    %v2070 = vpop.f32.mrb[0].mxu0
    %2071 = vmatprep.mubr.f32.mxu0 0.0
    %2072 = vmatmul.mubr.f32.gmra.mrb[0].mxu0 %v995
    %v2073 = vpop.f32.mrb[0].mxu0
    %v2074 = vadd.f32 %v1936, %v2073
    %v2075 = vpop.f32.mrb[0].mxu0
    %2076 = vmatprep.mubr.f32.mxu0 0.0
    %2077 = vmatmul.mubr.f32.gmra.mrb[0].mxu0 %v998
    %v2078 = vpop.f32.mrb[0].mxu0
    %v2079 = vadd.f32 %v1936, %v2078
    %v2080 = vpop.f32.mrb[0].mxu0
    %2081 = vdwg.mxu0
    %v2083 = vsel %vm489, %v2004, 0
    %v2086 = vsel %vm489, %v2009, 0
    %v2089 = vsel %vm489, %v2014, 0
    %v2092 = vsel %vm489, %v2019, 0
    %v2095 = vsel %vm489, %v2024, 0
    %v2098 = vsel %vm489, %v2029, 0
    %v2101 = vsel %vm489, %v2034, 0
    %v2104 = vsel %vm489, %v2039, 0
    %v2107 = vsel %vm489, %v2044, 0
    %v2110 = vsel %vm489, %v2049, 0
    %v2113 = vsel %vm489, %v2054, 0
    %v2116 = vsel %vm489, %v2059, 0
    %v2119 = vsel %vm489, %v2064, 0
    %v2122 = vsel %vm489, %v2069, 0
    %v2125 = vsel %vm489, %v2074, 0
    %v2128 = vsel %vm489, %v2079, 0
    %2130 = vmatprep.subr.mxu0 0.0
    %2131 = vmatpush1.xpose.msra.mxu0 %v953
    %2132 = vmatprep.subr.mxu0 0.0
    %2133 = vmatpush1.xpose.msra.mxu0 %v956
    %2134 = vmatprep.subr.mxu0 0.0
    %2135 = vmatpush1.xpose.msra.mxu0 %v959
    %2136 = vmatprep.subr.mxu0 0.0
    %2137 = vmatpush1.xpose.msra.mxu0 %v962
    %2138 = vmatprep.subr.mxu0 0.0
    %2139 = vmatpush1.xpose.msra.mxu0 %v965
    %2140 = vmatprep.subr.mxu0 0.0
    %2141 = vmatpush1.xpose.msra.mxu0 %v968
    %2142 = vmatprep.subr.mxu0 0.0
    %2143 = vmatpush1.xpose.msra.mxu0 %v971
    %2144 = vmatprep.subr.mxu0 0.0
    %2145 = vmatpush1.xpose.msra.mxu0 %v974
    %2146 = vmatprep.subr.mxu0 0.0
    %2147 = vmatpush1.xpose.msra.mxu0 %v977
    %2148 = vmatprep.subr.mxu0 0.0
    %2149 = vmatpush1.xpose.msra.mxu0 %v980
    %2150 = vmatprep.subr.mxu0 0.0
    %2151 = vmatpush1.xpose.msra.mxu0 %v983
    %2152 = vmatprep.subr.mxu0 0.0
    %2153 = vmatpush1.xpose.msra.mxu0 %v986
    %2154 = vmatprep.subr.mxu0 0.0
    %2155 = vmatpush1.xpose.msra.mxu0 %v989
    %2156 = vmatprep.subr.mxu0 0.0
    %2157 = vmatpush1.xpose.msra.mxu0 %v992
    %2158 = vmatprep.subr.mxu0 0.0
    %2159 = vmatpush1.xpose.msra.mxu0 %v995
    %2160 = vmatprep.subr.mxu0 0.0
    %2161 = vmatpush1.xpose.msra.mxu0 %v998
    %2162 = vmatprep.subr.mxu0 0.0
    %2163 = vmatpush1.xpose.msra.mxu0 0.0
    %2164 = vmatprep.subr.mxu0 0.0
    %2165 = vmatpush1.xpose.msra.mxu0 0.0
    %2166 = vmatprep.subr.mxu0 0.0
    %2167 = vmatpush1.xpose.msra.mxu0 0.0
    %2168 = vmatprep.subr.mxu0 0.0
    %2169 = vmatpush1.xpose.msra.mxu0 0.0
    %2170 = vmatprep.subr.mxu0 0.0
    %2171 = vmatpush1.xpose.msra.mxu0 0.0
    %2172 = vmatprep.subr.mxu0 0.0
    %2173 = vmatpush1.xpose.msra.mxu0 0.0
    %2174 = vmatprep.subr.mxu0 0.0
    %2175 = vmatpush1.xpose.msra.mxu0 0.0
    %2176 = vmatprep.subr.mxu0 0.0
    %2177 = vmatpush1.xpose.msra.mxu0 0.0
    %2178 = vmatprep.subr.mxu0 0.0
    %2179 = vmatpush1.xpose.msra.mxu0 0.0
    %2180 = vmatprep.subr.mxu0 0.0
    %2181 = vmatpush1.xpose.msra.mxu0 0.0
    %2182 = vmatprep.subr.mxu0 0.0
    %2183 = vmatpush1.xpose.msra.mxu0 0.0
    %2184 = vmatprep.subr.mxu0 0.0
    %2185 = vmatpush1.xpose.msra.mxu0 0.0
    %2186 = vmatprep.subr.mxu0 0.0
    %2187 = vmatpush1.xpose.msra.mxu0 0.0
    %2188 = vmatprep.subr.mxu0 0.0
    %2189 = vmatpush1.xpose.msra.mxu0 0.0
    %2190 = vmatprep.subr.mxu0 0.0
    %2191 = vmatpush1.xpose.msra.mxu0 0.0
    %2192 = vmatprep.subr.mxu0 0.0
    %2193 = vmatpush1.xpose.msra.mxu0 0.0
    %2194 = vmatprep.mubr.f32.mxu0 0.0
    %2195 = vmatmul.mubr.f32.gmra.mrb[0].mxu0 %v2083
    %v2196 = vpop.f32.mrb[0].mxu0
    %v2197 = vadd.f32 %v1145, %v2196
    %v2198 = vpop.f32.mrb[0].mxu0
    %2199 = vmatprep.mubr.f32.mxu0 0.0
    %2200 = vmatmul.mubr.f32.gmra.mrb[0].mxu0 %v2086
    %v2201 = vpop.f32.mrb[0].mxu0
    %v2202 = vadd.f32 %v1146, %v2201
    %v2203 = vpop.f32.mrb[0].mxu0
    %2204 = vmatprep.mubr.f32.mxu0 0.0
    %2205 = vmatmul.mubr.f32.gmra.mrb[0].mxu0 %v2089
    %v2206 = vpop.f32.mrb[0].mxu0
    %v2207 = vadd.f32 %v1147, %v2206
    %v2208 = vpop.f32.mrb[0].mxu0
    %2209 = vmatprep.mubr.f32.mxu0 0.0
    %2210 = vmatmul.mubr.f32.gmra.mrb[0].mxu0 %v2092
    %v2211 = vpop.f32.mrb[0].mxu0
    %v2212 = vadd.f32 %v1148, %v2211
    %v2213 = vpop.f32.mrb[0].mxu0
    %2214 = vmatprep.mubr.f32.mxu0 0.0
    %2215 = vmatmul.mubr.f32.gmra.mrb[0].mxu0 %v2095
    %v2216 = vpop.f32.mrb[0].mxu0
    %v2217 = vadd.f32 %v1149, %v2216
    %v2218 = vpop.f32.mrb[0].mxu0
    %2219 = vmatprep.mubr.f32.mxu0 0.0
    %2220 = vmatmul.mubr.f32.gmra.mrb[0].mxu0 %v2098
    %v2221 = vpop.f32.mrb[0].mxu0
    %v2222 = vadd.f32 %v1150, %v2221
    %v2223 = vpop.f32.mrb[0].mxu0
    %2224 = vmatprep.mubr.f32.mxu0 0.0
    %2225 = vmatmul.mubr.f32.gmra.mrb[0].mxu0 %v2101
    %v2226 = vpop.f32.mrb[0].mxu0
    %v2227 = vadd.f32 %v1151, %v2226
    %v2228 = vpop.f32.mrb[0].mxu0
    %2229 = vmatprep.mubr.f32.mxu0 0.0
    %2230 = vmatmul.mubr.f32.gmra.mrb[0].mxu0 %v2104
    %v2231 = vpop.f32.mrb[0].mxu0
    %v2232 = vadd.f32 %v1152, %v2231
    %v2233 = vpop.f32.mrb[0].mxu0
    %2234 = vmatprep.mubr.f32.mxu0 0.0
    %2235 = vmatmul.mubr.f32.gmra.mrb[0].mxu0 %v2107
    %v2236 = vpop.f32.mrb[0].mxu0
    %v2237 = vadd.f32 %v1153, %v2236
    %v2238 = vpop.f32.mrb[0].mxu0
    %2239 = vmatprep.mubr.f32.mxu0 0.0
    %2240 = vmatmul.mubr.f32.gmra.mrb[0].mxu0 %v2110
    %v2241 = vpop.f32.mrb[0].mxu0
    %v2242 = vadd.f32 %v1154, %v2241
    %v2243 = vpop.f32.mrb[0].mxu0
    %2244 = vmatprep.mubr.f32.mxu0 0.0
    %2245 = vmatmul.mubr.f32.gmra.mrb[0].mxu0 %v2113
    %v2246 = vpop.f32.mrb[0].mxu0
    %v2247 = vadd.f32 %v1155, %v2246
    %v2248 = vpop.f32.mrb[0].mxu0
    %2249 = vmatprep.mubr.f32.mxu0 0.0
    %2250 = vmatmul.mubr.f32.gmra.mrb[0].mxu0 %v2116
    %v2251 = vpop.f32.mrb[0].mxu0
    %v2252 = vadd.f32 %v1156, %v2251
    %v2253 = vpop.f32.mrb[0].mxu0
    %2254 = vmatprep.mubr.f32.mxu0 0.0
    %2255 = vmatmul.mubr.f32.gmra.mrb[0].mxu0 %v2119
    %v2256 = vpop.f32.mrb[0].mxu0
    %v2257 = vadd.f32 %v1157, %v2256
    %v2258 = vpop.f32.mrb[0].mxu0
    %2259 = vmatprep.mubr.f32.mxu0 0.0
    %2260 = vmatmul.mubr.f32.gmra.mrb[0].mxu0 %v2122
    %v2261 = vpop.f32.mrb[0].mxu0
    %v2262 = vadd.f32 %v1158, %v2261
    %v2263 = vpop.f32.mrb[0].mxu0
    %2264 = vmatprep.mubr.f32.mxu0 0.0
    %2265 = vmatmul.mubr.f32.gmra.mrb[0].mxu0 %v2125
    %v2266 = vpop.f32.mrb[0].mxu0
    %v2267 = vadd.f32 %v1159, %v2266
    %v2268 = vpop.f32.mrb[0].mxu0
    %2269 = vmatprep.mubr.f32.mxu0 0.0
    %2270 = vmatmul.mubr.f32.gmra.mrb[0].mxu0 %v2128
    %v2271 = vpop.f32.mrb[0].mxu0
    %v2272 = vadd.f32 %v1160, %v2271
    %v2273 = vpop.f32.mrb[0].mxu0
    %2274 = vdwg.mxu0
    %2275 = vmax.xlane.f32.xlu0 %v2197
    %v2276 = vpop.xlane.xlu0 %2275
    %2277 = vmax.xlane.f32.xlu0 %v2202
    %v2278 = vpop.xlane.xlu0 %2277
    %2279 = vmax.xlane.f32.xlu0 %v2207
    %v2280 = vpop.xlane.xlu0 %2279
    %2281 = vmax.xlane.f32.xlu0 %v2212
    %v2282 = vpop.xlane.xlu0 %2281
    %2283 = vmax.xlane.f32.xlu0 %v2217
    %v2284 = vpop.xlane.xlu0 %2283
    %2285 = vmax.xlane.f32.xlu0 %v2222
    %v2286 = vpop.xlane.xlu0 %2285
    %2287 = vmax.xlane.f32.xlu0 %v2227
    %v2288 = vpop.xlane.xlu0 %2287
    %2289 = vmax.xlane.f32.xlu0 %v2232
    %v2290 = vpop.xlane.xlu0 %2289
    %2291 = vmax.xlane.f32.xlu0 %v2237
    %v2292 = vpop.xlane.xlu0 %2291
    %2293 = vmax.xlane.f32.xlu0 %v2242
    %v2294 = vpop.xlane.xlu0 %2293
    %2295 = vmax.xlane.f32.xlu0 %v2247
    %v2296 = vpop.xlane.xlu0 %2295
    %2297 = vmax.xlane.f32.xlu0 %v2252
    %v2298 = vpop.xlane.xlu0 %2297
    %2299 = vmax.xlane.f32.xlu0 %v2257
    %v2300 = vpop.xlane.xlu0 %2299
    %2301 = vmax.xlane.f32.xlu0 %v2262
    %v2302 = vpop.xlane.xlu0 %2301
    %2303 = vmax.xlane.f32.xlu0 %v2267
    %v2304 = vpop.xlane.xlu0 %2303
    %2305 = vmax.xlane.f32.xlu0 %v2272
    %v2306 = vpop.xlane.xlu0 %2305
    %v2307 = vsub.f32 %v2197, %v2276
    %v2308 = vsub.f32 %v2202, %v2278
    %v2309 = vsub.f32 %v2207, %v2280
    %v2310 = vsub.f32 %v2212, %v2282
    %v2311 = vsub.f32 %v2217, %v2284
    %v2312 = vsub.f32 %v2222, %v2286
    %v2313 = vsub.f32 %v2227, %v2288
    %v2314 = vsub.f32 %v2232, %v2290
    %v2315 = vsub.f32 %v2237, %v2292
    %v2316 = vsub.f32 %v2242, %v2294
    %v2317 = vsub.f32 %v2247, %v2296
    %v2318 = vsub.f32 %v2252, %v2298
    %v2319 = vsub.f32 %v2257, %v2300
    %v2320 = vsub.f32 %v2262, %v2302
    %v2321 = vsub.f32 %v2267, %v2304
    %v2322 = vsub.f32 %v2272, %v2306
    %v2323 = vmul.f32 %v2307, 1.442695
    %v2324 = vpow.pop %v2323
    %v2325 = vmul.f32 %v2308, 1.442695
    %v2326 = vpow.pop %v2325
    %v2327 = vmul.f32 %v2309, 1.442695
    %v2328 = vpow.pop %v2327
    %v2329 = vmul.f32 %v2310, 1.442695
    %v2330 = vpow.pop %v2329
    %v2331 = vmul.f32 %v2311, 1.442695
    %v2332 = vpow.pop %v2331
    %v2333 = vmul.f32 %v2312, 1.442695
    %v2334 = vpow.pop %v2333
    %v2335 = vmul.f32 %v2313, 1.442695
    %v2336 = vpow.pop %v2335
    %v2337 = vmul.f32 %v2314, 1.442695
    %v2338 = vpow.pop %v2337
    %v2339 = vmul.f32 %v2315, 1.442695
    %v2340 = vpow.pop %v2339
    %v2341 = vmul.f32 %v2316, 1.442695
    %v2342 = vpow.pop %v2341
    %v2343 = vmul.f32 %v2317, 1.442695
    %v2344 = vpow.pop %v2343
    %v2345 = vmul.f32 %v2318, 1.442695
    %v2346 = vpow.pop %v2345
    %v2347 = vmul.f32 %v2319, 1.442695
    %v2348 = vpow.pop %v2347
    %v2349 = vmul.f32 %v2320, 1.442695
    %v2350 = vpow.pop %v2349
    %v2351 = vmul.f32 %v2321, 1.442695
    %v2352 = vpow.pop %v2351
    %v2353 = vmul.f32 %v2322, 1.442695
    %v2354 = vpow.pop %v2353
    %2355 = vadd.xlane.f32.xlu0 %v2324
    %v2356 = vpop.xlane.xlu0 %2355
    %2357 = vadd.xlane.f32.xlu0 %v2326
    %v2358 = vpop.xlane.xlu0 %2357
    %2359 = vadd.xlane.f32.xlu0 %v2328
    %v2360 = vpop.xlane.xlu0 %2359
    %2361 = vadd.xlane.f32.xlu0 %v2330
    %v2362 = vpop.xlane.xlu0 %2361
    %2363 = vadd.xlane.f32.xlu0 %v2332
    %v2364 = vpop.xlane.xlu0 %2363
    %2365 = vadd.xlane.f32.xlu0 %v2334
    %v2366 = vpop.xlane.xlu0 %2365
    %2367 = vadd.xlane.f32.xlu0 %v2336
    %v2368 = vpop.xlane.xlu0 %2367
    %2369 = vadd.xlane.f32.xlu0 %v2338
    %v2370 = vpop.xlane.xlu0 %2369
    %2371 = vadd.xlane.f32.xlu0 %v2340
    %v2372 = vpop.xlane.xlu0 %2371
    %2373 = vadd.xlane.f32.xlu0 %v2342
    %v2374 = vpop.xlane.xlu0 %2373
    %2375 = vadd.xlane.f32.xlu0 %v2344
    %v2376 = vpop.xlane.xlu0 %2375
    %2377 = vadd.xlane.f32.xlu0 %v2346
    %v2378 = vpop.xlane.xlu0 %2377
    %2379 = vadd.xlane.f32.xlu0 %v2348
    %v2380 = vpop.xlane.xlu0 %2379
    %2381 = vadd.xlane.f32.xlu0 %v2350
    %v2382 = vpop.xlane.xlu0 %2381
    %2383 = vadd.xlane.f32.xlu0 %v2352
    %v2384 = vpop.xlane.xlu0 %2383
    %2385 = vadd.xlane.f32.xlu0 %v2354
    %v2386 = vpop.xlane.xlu0 %2385
    %v2387 = vrcp.pop %v2356
    %v2388 = vrcp.pop %v2358
    %v2389 = vrcp.pop %v2360
    %v2390 = vrcp.pop %v2362
    %v2391 = vrcp.pop %v2364
    %v2392 = vrcp.pop %v2366
    %v2393 = vrcp.pop %v2368
    %v2394 = vrcp.pop %v2370
    %v2395 = vrcp.pop %v2372
    %v2396 = vrcp.pop %v2374
    %v2397 = vrcp.pop %v2376
    %v2398 = vrcp.pop %v2378
    %v2399 = vrcp.pop %v2380
    %v2400 = vrcp.pop %v2382
    %v2401 = vrcp.pop %v2384
    %v2402 = vrcp.pop %v2386
    %v2403 = vmul.f32 %v2324, %v2387
    %v2404 = vmul.f32 %v2326, %v2388
    %v2405 = vmul.f32 %v2328, %v2389
    %v2406 = vmul.f32 %v2330, %v2390
    %v2407 = vmul.f32 %v2332, %v2391
    %v2408 = vmul.f32 %v2334, %v2392
    %v2409 = vmul.f32 %v2336, %v2393
    %v2410 = vmul.f32 %v2338, %v2394
    %v2411 = vmul.f32 %v2340, %v2395
    %v2412 = vmul.f32 %v2342, %v2396
    %v2413 = vmul.f32 %v2344, %v2397
    %v2414 = vmul.f32 %v2346, %v2398
    %v2415 = vmul.f32 %v2348, %v2399
    %v2416 = vmul.f32 %v2350, %v2400
    %v2417 = vmul.f32 %v2352, %v2401
    %v2418 = vmul.f32 %v2354, %v2402
    %v2419 = vlaneseq
    %v2420 = vshrl.u32 %v2419, 7
    %v2421 = vsub.s32 4, %v2420
    %v2422 = vrot.slane %v18, %v2421
    %2423 = vmatprep.subr.mxu0 0.0
    %2424 = vmatpush1.msra.mxu0 %v60
    %2425 = vmatprep.subr.mxu0 0.0
    %2426 = vmatpush1.msra.mxu0 %v61
    %2427 = vmatprep.subr.mxu0 0.0
    %2428 = vmatpush1.msra.mxu0 %v62
    %2429 = vmatprep.subr.mxu0 0.0
    %2430 = vmatpush1.msra.mxu0 %v63
    %2431 = vmatprep.subr.mxu0 0.0
    %2432 = vmatpush1.msra.mxu0 0.0
    %2433 = vmatprep.subr.mxu0 0.0
    %2434 = vmatpush1.msra.mxu0 0.0
    %2435 = vmatprep.subr.mxu0 0.0
    %2436 = vmatpush1.msra.mxu0 0.0
    %2437 = vmatprep.subr.mxu0 0.0
    %2438 = vmatpush1.msra.mxu0 0.0
    %2439 = vmatprep.subr.mxu0 0.0
    %2440 = vmatpush1.msra.mxu0 0.0
    %2441 = vmatprep.subr.mxu0 0.0
    %2442 = vmatpush1.msra.mxu0 0.0
    %2443 = vmatprep.subr.mxu0 0.0
    %2444 = vmatpush1.msra.mxu0 0.0
    %2445 = vmatprep.subr.mxu0 0.0
    %2446 = vmatpush1.msra.mxu0 0.0
    %2447 = vmatprep.subr.mxu0 0.0
    %2448 = vmatpush1.msra.mxu0 0.0
    %2449 = vmatprep.subr.mxu0 0.0
    %2450 = vmatpush1.msra.mxu0 0.0
    %2451 = vmatprep.subr.mxu0 0.0
    %2452 = vmatpush1.msra.mxu0 0.0
    %2453 = vmatprep.subr.mxu0 0.0
    %2454 = vmatpush1.msra.mxu0 0.0
    %2455 = vmatprep.subr.mxu0 0.0
    %2456 = vmatpush1.msra.mxu0 0.0
    %2457 = vmatprep.subr.mxu0 0.0
    %2458 = vmatpush1.msra.mxu0 0.0
    %2459 = vmatprep.subr.mxu0 0.0
    %2460 = vmatpush1.msra.mxu0 0.0
    %2461 = vmatprep.subr.mxu0 0.0
    %2462 = vmatpush1.msra.mxu0 0.0
    %2463 = vmatprep.subr.mxu0 0.0
    %2464 = vmatpush1.msra.mxu0 0.0
    %2465 = vmatprep.subr.mxu0 0.0
    %2466 = vmatpush1.msra.mxu0 0.0
    %2467 = vmatprep.subr.mxu0 0.0
    %2468 = vmatpush1.msra.mxu0 0.0
    %2469 = vmatprep.subr.mxu0 0.0
    %2470 = vmatpush1.msra.mxu0 0.0
    %2471 = vmatprep.subr.mxu0 0.0
    %2472 = vmatpush1.msra.mxu0 0.0
    %2473 = vmatprep.subr.mxu0 0.0
    %2474 = vmatpush1.msra.mxu0 0.0
    %2475 = vmatprep.subr.mxu0 0.0
    %2476 = vmatpush1.msra.mxu0 0.0
    %2477 = vmatprep.subr.mxu0 0.0
    %2478 = vmatpush1.msra.mxu0 0.0
    %2479 = vmatprep.subr.mxu0 0.0
    %2480 = vmatpush1.msra.mxu0 0.0
    %2481 = vmatprep.subr.mxu0 0.0
    %2482 = vmatpush1.msra.mxu0 0.0
    %2483 = vmatprep.subr.mxu0 0.0
    %2484 = vmatpush1.msra.mxu0 0.0
    %2485 = vmatprep.subr.mxu0 0.0
    %2486 = vmatpush1.msra.mxu0 0.0
    %2487 = vmatprep.mubr.f32.mxu0 0.0
    %2488 = vmatmul.mubr.f32.gmra.mrb[0].mxu0 %v953
    %v2489 = vpop.f32.mrb[0].mxu0
    %v2490 = vadd.f32 %v2422, %v2489
    %v2491 = vpop.f32.mrb[0].mxu0
    %2492 = vmatprep.mubr.f32.mxu0 0.0
    %2493 = vmatmul.mubr.f32.gmra.mrb[0].mxu0 %v956
    %v2494 = vpop.f32.mrb[0].mxu0
    %v2495 = vadd.f32 %v2422, %v2494
    %v2496 = vpop.f32.mrb[0].mxu0
    %2497 = vmatprep.mubr.f32.mxu0 0.0
    %2498 = vmatmul.mubr.f32.gmra.mrb[0].mxu0 %v959
    %v2499 = vpop.f32.mrb[0].mxu0
    %v2500 = vadd.f32 %v2422, %v2499
    %v2501 = vpop.f32.mrb[0].mxu0
    %2502 = vmatprep.mubr.f32.mxu0 0.0
    %2503 = vmatmul.mubr.f32.gmra.mrb[0].mxu0 %v962
    %v2504 = vpop.f32.mrb[0].mxu0
    %v2505 = vadd.f32 %v2422, %v2504
    %v2506 = vpop.f32.mrb[0].mxu0
    %2507 = vmatprep.mubr.f32.mxu0 0.0
    %2508 = vmatmul.mubr.f32.gmra.mrb[0].mxu0 %v965
    %v2509 = vpop.f32.mrb[0].mxu0
    %v2510 = vadd.f32 %v2422, %v2509
    %v2511 = vpop.f32.mrb[0].mxu0
    %2512 = vmatprep.mubr.f32.mxu0 0.0
    %2513 = vmatmul.mubr.f32.gmra.mrb[0].mxu0 %v968
    %v2514 = vpop.f32.mrb[0].mxu0
    %v2515 = vadd.f32 %v2422, %v2514
    %v2516 = vpop.f32.mrb[0].mxu0
    %2517 = vmatprep.mubr.f32.mxu0 0.0
    %2518 = vmatmul.mubr.f32.gmra.mrb[0].mxu0 %v971
    %v2519 = vpop.f32.mrb[0].mxu0
    %v2520 = vadd.f32 %v2422, %v2519
    %v2521 = vpop.f32.mrb[0].mxu0
    %2522 = vmatprep.mubr.f32.mxu0 0.0
    %2523 = vmatmul.mubr.f32.gmra.mrb[0].mxu0 %v974
    %v2524 = vpop.f32.mrb[0].mxu0
    %v2525 = vadd.f32 %v2422, %v2524
    %v2526 = vpop.f32.mrb[0].mxu0
    %2527 = vmatprep.mubr.f32.mxu0 0.0
    %2528 = vmatmul.mubr.f32.gmra.mrb[0].mxu0 %v977
    %v2529 = vpop.f32.mrb[0].mxu0
    %v2530 = vadd.f32 %v2422, %v2529
    %v2531 = vpop.f32.mrb[0].mxu0
    %2532 = vmatprep.mubr.f32.mxu0 0.0
    %2533 = vmatmul.mubr.f32.gmra.mrb[0].mxu0 %v980
    %v2534 = vpop.f32.mrb[0].mxu0
    %v2535 = vadd.f32 %v2422, %v2534
    %v2536 = vpop.f32.mrb[0].mxu0
    %2537 = vmatprep.mubr.f32.mxu0 0.0
    %2538 = vmatmul.mubr.f32.gmra.mrb[0].mxu0 %v983
    %v2539 = vpop.f32.mrb[0].mxu0
    %v2540 = vadd.f32 %v2422, %v2539
    %v2541 = vpop.f32.mrb[0].mxu0
    %2542 = vmatprep.mubr.f32.mxu0 0.0
    %2543 = vmatmul.mubr.f32.gmra.mrb[0].mxu0 %v986
    %v2544 = vpop.f32.mrb[0].mxu0
    %v2545 = vadd.f32 %v2422, %v2544
    %v2546 = vpop.f32.mrb[0].mxu0
    %2547 = vmatprep.mubr.f32.mxu0 0.0
    %2548 = vmatmul.mubr.f32.gmra.mrb[0].mxu0 %v989
    %v2549 = vpop.f32.mrb[0].mxu0
    %v2550 = vadd.f32 %v2422, %v2549
    %v2551 = vpop.f32.mrb[0].mxu0
    %2552 = vmatprep.mubr.f32.mxu0 0.0
    %2553 = vmatmul.mubr.f32.gmra.mrb[0].mxu0 %v992
    %v2554 = vpop.f32.mrb[0].mxu0
    %v2555 = vadd.f32 %v2422, %v2554
    %v2556 = vpop.f32.mrb[0].mxu0
    %2557 = vmatprep.mubr.f32.mxu0 0.0
    %2558 = vmatmul.mubr.f32.gmra.mrb[0].mxu0 %v995
    %v2559 = vpop.f32.mrb[0].mxu0
    %v2560 = vadd.f32 %v2422, %v2559
    %v2561 = vpop.f32.mrb[0].mxu0
    %2562 = vmatprep.mubr.f32.mxu0 0.0
    %2563 = vmatmul.mubr.f32.gmra.mrb[0].mxu0 %v998
    %v2564 = vpop.f32.mrb[0].mxu0
    %v2565 = vadd.f32 %v2422, %v2564
    %v2566 = vpop.f32.mrb[0].mxu0
    %2567 = vdwg.mxu0
    %2568 = vmatprep.subr.mxu0 0.0
    %2569 = vmatpush1.msra.mxu0 %v2490
    %2570 = vmatprep.subr.mxu0 0.0
    %2571 = vmatpush1.msra.mxu0 %v2495
    %2572 = vmatprep.subr.mxu0 0.0
    %2573 = vmatpush1.msra.mxu0 %v2500
    %2574 = vmatprep.subr.mxu0 0.0
    %2575 = vmatpush1.msra.mxu0 %v2505
    %2576 = vmatprep.subr.mxu0 0.0
    %2577 = vmatpush1.msra.mxu0 %v2510
    %2578 = vmatprep.subr.mxu0 0.0
    %2579 = vmatpush1.msra.mxu0 %v2515
    %2580 = vmatprep.subr.mxu0 0.0
    %2581 = vmatpush1.msra.mxu0 %v2520
    %2582 = vmatprep.subr.mxu0 0.0
    %2583 = vmatpush1.msra.mxu0 %v2525
    %2584 = vmatprep.subr.mxu0 0.0
    %2585 = vmatpush1.msra.mxu0 %v2530
    %2586 = vmatprep.subr.mxu0 0.0
    %2587 = vmatpush1.msra.mxu0 %v2535
    %2588 = vmatprep.subr.mxu0 0.0
    %2589 = vmatpush1.msra.mxu0 %v2540
    %2590 = vmatprep.subr.mxu0 0.0
    %2591 = vmatpush1.msra.mxu0 %v2545
    %2592 = vmatprep.subr.mxu0 0.0
    %2593 = vmatpush1.msra.mxu0 %v2550
    %2594 = vmatprep.subr.mxu0 0.0
    %2595 = vmatpush1.msra.mxu0 %v2555
    %2596 = vmatprep.subr.mxu0 0.0
    %2597 = vmatpush1.msra.mxu0 %v2560
    %2598 = vmatprep.subr.mxu0 0.0
    %2599 = vmatpush1.msra.mxu0 %v2565
    %2600 = vmatprep.subr.mxu0 0.0
    %2601 = vmatpush1.msra.mxu0 0.0
    %2602 = vmatprep.subr.mxu0 0.0
    %2603 = vmatpush1.msra.mxu0 0.0
    %2604 = vmatprep.subr.mxu0 0.0
    %2605 = vmatpush1.msra.mxu0 0.0
    %2606 = vmatprep.subr.mxu0 0.0
    %2607 = vmatpush1.msra.mxu0 0.0
    %2608 = vmatprep.subr.mxu0 0.0
    %2609 = vmatpush1.msra.mxu0 0.0
    %2610 = vmatprep.subr.mxu0 0.0
    %2611 = vmatpush1.msra.mxu0 0.0
    %2612 = vmatprep.subr.mxu0 0.0
    %2613 = vmatpush1.msra.mxu0 0.0
    %2614 = vmatprep.subr.mxu0 0.0
    %2615 = vmatpush1.msra.mxu0 0.0
    %2616 = vmatprep.subr.mxu0 0.0
    %2617 = vmatpush1.msra.mxu0 0.0
    %2618 = vmatprep.subr.mxu0 0.0
    %2619 = vmatpush1.msra.mxu0 0.0
    %2620 = vmatprep.subr.mxu0 0.0
    %2621 = vmatpush1.msra.mxu0 0.0
    %2622 = vmatprep.subr.mxu0 0.0
    %2623 = vmatpush1.msra.mxu0 0.0
    %2624 = vmatprep.subr.mxu0 0.0
    %2625 = vmatpush1.msra.mxu0 0.0
    %2626 = vmatprep.subr.mxu0 0.0
    %2627 = vmatpush1.msra.mxu0 0.0
    %2628 = vmatprep.subr.mxu0 0.0
    %2629 = vmatpush1.msra.mxu0 0.0
    %2630 = vmatprep.subr.mxu0 0.0
    %2631 = vmatpush1.msra.mxu0 0.0
    %2632 = vmatprep.mubr.f32.mxu0 0.0
    %2633 = vmatmul.mubr.f32.gmra.mrb[0].mxu0 %v2403
    %v2634 = vpop.f32.mrb[0].mxu0
    %v2635 = vadd.f32 0.0, %v2634
    %v2636 = vpop.f32.mrb[0].mxu0
    %2637 = vmatprep.mubr.f32.mxu0 0.0
    %2638 = vmatmul.mubr.f32.gmra.mrb[0].mxu0 %v2404
    %v2639 = vpop.f32.mrb[0].mxu0
    %v2640 = vadd.f32 0.0, %v2639
    %v2641 = vpop.f32.mrb[0].mxu0
    %2642 = vmatprep.mubr.f32.mxu0 0.0
    %2643 = vmatmul.mubr.f32.gmra.mrb[0].mxu0 %v2405
    %v2644 = vpop.f32.mrb[0].mxu0
    %v2645 = vadd.f32 0.0, %v2644
    %v2646 = vpop.f32.mrb[0].mxu0
    %2647 = vmatprep.mubr.f32.mxu0 0.0
    %2648 = vmatmul.mubr.f32.gmra.mrb[0].mxu0 %v2406
    %v2649 = vpop.f32.mrb[0].mxu0
    %v2650 = vadd.f32 0.0, %v2649
    %v2651 = vpop.f32.mrb[0].mxu0
    %2652 = vmatprep.mubr.f32.mxu0 0.0
    %2653 = vmatmul.mubr.f32.gmra.mrb[0].mxu0 %v2407
    %v2654 = vpop.f32.mrb[0].mxu0
    %v2655 = vadd.f32 0.0, %v2654
    %v2656 = vpop.f32.mrb[0].mxu0
    %2657 = vmatprep.mubr.f32.mxu0 0.0
    %2658 = vmatmul.mubr.f32.gmra.mrb[0].mxu0 %v2408
    %v2659 = vpop.f32.mrb[0].mxu0
    %v2660 = vadd.f32 0.0, %v2659
    %v2661 = vpop.f32.mrb[0].mxu0
    %2662 = vmatprep.mubr.f32.mxu0 0.0
    %2663 = vmatmul.mubr.f32.gmra.mrb[0].mxu0 %v2409
    %v2664 = vpop.f32.mrb[0].mxu0
    %v2665 = vadd.f32 0.0, %v2664
    %v2666 = vpop.f32.mrb[0].mxu0
    %2667 = vmatprep.mubr.f32.mxu0 0.0
    %2668 = vmatmul.mubr.f32.gmra.mrb[0].mxu0 %v2410
    %v2669 = vpop.f32.mrb[0].mxu0
    %v2670 = vadd.f32 0.0, %v2669
    %v2671 = vpop.f32.mrb[0].mxu0
    %2672 = vmatprep.mubr.f32.mxu0 0.0
    %2673 = vmatmul.mubr.f32.gmra.mrb[0].mxu0 %v2411
    %v2674 = vpop.f32.mrb[0].mxu0
    %v2675 = vadd.f32 0.0, %v2674
    %v2676 = vpop.f32.mrb[0].mxu0
    %2677 = vmatprep.mubr.f32.mxu0 0.0
    %2678 = vmatmul.mubr.f32.gmra.mrb[0].mxu0 %v2412
    %v2679 = vpop.f32.mrb[0].mxu0
    %v2680 = vadd.f32 0.0, %v2679
    %v2681 = vpop.f32.mrb[0].mxu0
    %2682 = vmatprep.mubr.f32.mxu0 0.0
    %2683 = vmatmul.mubr.f32.gmra.mrb[0].mxu0 %v2413
    %v2684 = vpop.f32.mrb[0].mxu0
    %v2685 = vadd.f32 0.0, %v2684
    %v2686 = vpop.f32.mrb[0].mxu0
    %2687 = vmatprep.mubr.f32.mxu0 0.0
    %2688 = vmatmul.mubr.f32.gmra.mrb[0].mxu0 %v2414
    %v2689 = vpop.f32.mrb[0].mxu0
    %v2690 = vadd.f32 0.0, %v2689
    %v2691 = vpop.f32.mrb[0].mxu0
    %2692 = vmatprep.mubr.f32.mxu0 0.0
    %2693 = vmatmul.mubr.f32.gmra.mrb[0].mxu0 %v2415
    %v2694 = vpop.f32.mrb[0].mxu0
    %v2695 = vadd.f32 0.0, %v2694
    %v2696 = vpop.f32.mrb[0].mxu0
    %2697 = vmatprep.mubr.f32.mxu0 0.0
    %2698 = vmatmul.mubr.f32.gmra.mrb[0].mxu0 %v2416
    %v2699 = vpop.f32.mrb[0].mxu0
    %v2700 = vadd.f32 0.0, %v2699
    %v2701 = vpop.f32.mrb[0].mxu0
    %2702 = vmatprep.mubr.f32.mxu0 0.0
    %2703 = vmatmul.mubr.f32.gmra.mrb[0].mxu0 %v2417
    %v2704 = vpop.f32.mrb[0].mxu0
    %v2705 = vadd.f32 0.0, %v2704
    %v2706 = vpop.f32.mrb[0].mxu0
    %2707 = vmatprep.mubr.f32.mxu0 0.0
    %2708 = vmatmul.mubr.f32.gmra.mrb[0].mxu0 %v2418
    %v2709 = vpop.f32.mrb[0].mxu0
    %v2710 = vadd.f32 0.0, %v2709
    %v2711 = vpop.f32.mrb[0].mxu0
    %2712 = vdwg.mxu0
    %2713 = vmatprep.subr.mxu0 0.0
    %2714 = vmatpush1.msra.mxu0 %v2635
    %2715 = vmatprep.subr.mxu0 0.0
    %2716 = vmatpush1.msra.mxu0 %v2640
    %2717 = vmatprep.subr.mxu0 0.0
    %2718 = vmatpush1.msra.mxu0 %v2645
    %2719 = vmatprep.subr.mxu0 0.0
    %2720 = vmatpush1.msra.mxu0 %v2650
    %2721 = vmatprep.subr.mxu0 0.0
    %2722 = vmatpush1.msra.mxu0 %v2655
    %2723 = vmatprep.subr.mxu0 0.0
    %2724 = vmatpush1.msra.mxu0 %v2660
    %2725 = vmatprep.subr.mxu0 0.0
    %2726 = vmatpush1.msra.mxu0 %v2665
    %2727 = vmatprep.subr.mxu0 0.0
    %2728 = vmatpush1.msra.mxu0 %v2670
    %2729 = vmatprep.subr.mxu0 0.0
    %2730 = vmatpush1.msra.mxu0 %v2675
    %2731 = vmatprep.subr.mxu0 0.0
    %2732 = vmatpush1.msra.mxu0 %v2680
    %2733 = vmatprep.subr.mxu0 0.0
    %2734 = vmatpush1.msra.mxu0 %v2685
    %2735 = vmatprep.subr.mxu0 0.0
    %2736 = vmatpush1.msra.mxu0 %v2690
    %2737 = vmatprep.subr.mxu0 0.0
    %2738 = vmatpush1.msra.mxu0 %v2695
    %2739 = vmatprep.subr.mxu0 0.0
    %2740 = vmatpush1.msra.mxu0 %v2700
    %2741 = vmatprep.subr.mxu0 0.0
    %2742 = vmatpush1.msra.mxu0 %v2705
    %2743 = vmatprep.subr.mxu0 0.0
    %2744 = vmatpush1.msra.mxu0 %v2710
    %2745 = vmatprep.subr.mxu0 0.0
    %2746 = vmatpush1.msra.mxu0 0.0
    %2747 = vmatprep.subr.mxu0 0.0
    %2748 = vmatpush1.msra.mxu0 0.0
    %2749 = vmatprep.subr.mxu0 0.0
    %2750 = vmatpush1.msra.mxu0 0.0
    %2751 = vmatprep.subr.mxu0 0.0
    %2752 = vmatpush1.msra.mxu0 0.0
    %2753 = vmatprep.subr.mxu0 0.0
    %2754 = vmatpush1.msra.mxu0 0.0
    %2755 = vmatprep.subr.mxu0 0.0
    %2756 = vmatpush1.msra.mxu0 0.0
    %2757 = vmatprep.subr.mxu0 0.0
    %2758 = vmatpush1.msra.mxu0 0.0
    %2759 = vmatprep.subr.mxu0 0.0
    %2760 = vmatpush1.msra.mxu0 0.0
    %2761 = vmatprep.subr.mxu0 0.0
    %2762 = vmatpush1.msra.mxu0 0.0
    %2763 = vmatprep.subr.mxu0 0.0
    %2764 = vmatpush1.msra.mxu0 0.0
    %2765 = vmatprep.subr.mxu0 0.0
    %2766 = vmatpush1.msra.mxu0 0.0
    %2767 = vmatprep.subr.mxu0 0.0
    %2768 = vmatpush1.msra.mxu0 0.0
    %2769 = vmatprep.subr.mxu0 0.0
    %2770 = vmatpush1.msra.mxu0 0.0
    %2771 = vmatprep.subr.mxu0 0.0
    %2772 = vmatpush1.msra.mxu0 0.0
    %2773 = vmatprep.subr.mxu0 0.0
    %2774 = vmatpush1.msra.mxu0 0.0
    %2775 = vmatprep.subr.mxu0 0.0
    %2776 = vmatpush1.msra.mxu0 0.0
    %2777 = vmatprep.mubr.f32.mxu0 0.0
    %2778 = vmatmul.mubr.f32.gmra.mrb[0].mxu0 %v84
    %v2779 = vpop.f32.mrb[0].mxu0
    %v2780 = vadd.f32 0.0, %v2779
    %v2781 = vpop.f32.mrb[0].mxu0
    %2782 = vmatprep.mubr.f32.mxu0 0.0
    %2783 = vmatmul.mubr.f32.gmra.mrb[0].mxu0 %v85
    %v2784 = vpop.f32.mrb[0].mxu0
    %v2785 = vadd.f32 0.0, %v2784
    %v2786 = vpop.f32.mrb[0].mxu0
    %2787 = vmatprep.mubr.f32.mxu0 0.0
    %2788 = vmatmul.mubr.f32.gmra.mrb[0].mxu0 %v86
    %v2789 = vpop.f32.mrb[0].mxu0
    %v2790 = vadd.f32 0.0, %v2789
    %v2791 = vpop.f32.mrb[0].mxu0
    %2792 = vmatprep.mubr.f32.mxu0 0.0
    %2793 = vmatmul.mubr.f32.gmra.mrb[0].mxu0 %v87
    %v2794 = vpop.f32.mrb[0].mxu0
    %v2795 = vadd.f32 0.0, %v2794
    %v2796 = vpop.f32.mrb[0].mxu0
    %2797 = vmatprep.mubr.f32.mxu0 0.0
    %2798 = vmatmul.mubr.f32.gmra.mrb[0].mxu0 %v88
    %v2799 = vpop.f32.mrb[0].mxu0
    %v2800 = vadd.f32 0.0, %v2799
    %v2801 = vpop.f32.mrb[0].mxu0
    %2802 = vmatprep.mubr.f32.mxu0 0.0
    %2803 = vmatmul.mubr.f32.gmra.mrb[0].mxu0 %v89
    %v2804 = vpop.f32.mrb[0].mxu0
    %v2805 = vadd.f32 0.0, %v2804
    %v2806 = vpop.f32.mrb[0].mxu0
    %2807 = vmatprep.mubr.f32.mxu0 0.0
    %2808 = vmatmul.mubr.f32.gmra.mrb[0].mxu0 %v90
    %v2809 = vpop.f32.mrb[0].mxu0
    %v2810 = vadd.f32 0.0, %v2809
    %v2811 = vpop.f32.mrb[0].mxu0
    %2812 = vmatprep.mubr.f32.mxu0 0.0
    %2813 = vmatmul.mubr.f32.gmra.mrb[0].mxu0 %v91
    %v2814 = vpop.f32.mrb[0].mxu0
    %v2815 = vadd.f32 0.0, %v2814
    %v2816 = vpop.f32.mrb[0].mxu0
    %2817 = vmatprep.mubr.f32.mxu0 0.0
    %2818 = vmatmul.mubr.f32.gmra.mrb[0].mxu0 %v92
    %v2819 = vpop.f32.mrb[0].mxu0
    %v2820 = vadd.f32 0.0, %v2819
    %v2821 = vpop.f32.mrb[0].mxu0
    %2822 = vmatprep.mubr.f32.mxu0 0.0
    %2823 = vmatmul.mubr.f32.gmra.mrb[0].mxu0 %v93
    %v2824 = vpop.f32.mrb[0].mxu0
    %v2825 = vadd.f32 0.0, %v2824
    %v2826 = vpop.f32.mrb[0].mxu0
    %2827 = vmatprep.mubr.f32.mxu0 0.0
    %2828 = vmatmul.mubr.f32.gmra.mrb[0].mxu0 %v94
    %v2829 = vpop.f32.mrb[0].mxu0
    %v2830 = vadd.f32 0.0, %v2829
    %v2831 = vpop.f32.mrb[0].mxu0
    %2832 = vmatprep.mubr.f32.mxu0 0.0
    %2833 = vmatmul.mubr.f32.gmra.mrb[0].mxu0 %v95
    %v2834 = vpop.f32.mrb[0].mxu0
    %v2835 = vadd.f32 0.0, %v2834
    %v2836 = vpop.f32.mrb[0].mxu0
    %2837 = vmatprep.mubr.f32.mxu0 0.0
    %2838 = vmatmul.mubr.f32.gmra.mrb[0].mxu0 %v96
    %v2839 = vpop.f32.mrb[0].mxu0
    %v2840 = vadd.f32 0.0, %v2839
    %v2841 = vpop.f32.mrb[0].mxu0
    %2842 = vmatprep.mubr.f32.mxu0 0.0
    %2843 = vmatmul.mubr.f32.gmra.mrb[0].mxu0 %v97
    %v2844 = vpop.f32.mrb[0].mxu0
    %v2845 = vadd.f32 0.0, %v2844
    %v2846 = vpop.f32.mrb[0].mxu0
    %2847 = vmatprep.mubr.f32.mxu0 0.0
    %2848 = vmatmul.mubr.f32.gmra.mrb[0].mxu0 %v98
    %v2849 = vpop.f32.mrb[0].mxu0
    %v2850 = vadd.f32 0.0, %v2849
    %v2851 = vpop.f32.mrb[0].mxu0
    %2852 = vmatprep.mubr.f32.mxu0 0.0
    %2853 = vmatmul.mubr.f32.gmra.mrb[0].mxu0 %v99
    %v2854 = vpop.f32.mrb[0].mxu0
    %v2855 = vadd.f32 0.0, %v2854
    %v2856 = vpop.f32.mrb[0].mxu0
    %2857 = vdwg.mxu0
    %v2858 = vlaneseq
    %v2859 = vshrl.u32 %v2858, 7
    %v2860 = vsub.s32 5, %v2859
    %v2861 = vrot.slane %v18, %v2860
    %v2863 = vsel %vm489, %v2780, 0
    %v2866 = vsel %vm489, %v2785, 0
    %v2869 = vsel %vm489, %v2790, 0
    %v2872 = vsel %vm489, %v2795, 0
    %v2875 = vsel %vm489, %v2800, 0
    %v2878 = vsel %vm489, %v2805, 0
    %v2881 = vsel %vm489, %v2810, 0
    %v2884 = vsel %vm489, %v2815, 0
    %v2887 = vsel %vm489, %v2820, 0
    %v2890 = vsel %vm489, %v2825, 0
    %v2893 = vsel %vm489, %v2830, 0
    %v2896 = vsel %vm489, %v2835, 0
    %v2899 = vsel %vm489, %v2840, 0
    %v2902 = vsel %vm489, %v2845, 0
    %v2905 = vsel %vm489, %v2850, 0
    %v2908 = vsel %vm489, %v2855, 0
    %2910 = vmatprep.subr.mxu0 0.0
    %2911 = vmatpush1.msra.mxu0 %v64
    %2912 = vmatprep.subr.mxu0 0.0
    %2913 = vmatpush1.msra.mxu0 %v65
    %2914 = vmatprep.subr.mxu0 0.0
    %2915 = vmatpush1.msra.mxu0 %v66
    %2916 = vmatprep.subr.mxu0 0.0
    %2917 = vmatpush1.msra.mxu0 %v67
    %2918 = vmatprep.subr.mxu0 0.0
    %2919 = vmatpush1.msra.mxu0 0.0
    %2920 = vmatprep.subr.mxu0 0.0
    %2921 = vmatpush1.msra.mxu0 0.0
    %2922 = vmatprep.subr.mxu0 0.0
    %2923 = vmatpush1.msra.mxu0 0.0
    %2924 = vmatprep.subr.mxu0 0.0
    %2925 = vmatpush1.msra.mxu0 0.0
    %2926 = vmatprep.subr.mxu0 0.0
    %2927 = vmatpush1.msra.mxu0 0.0
    %2928 = vmatprep.subr.mxu0 0.0
    %2929 = vmatpush1.msra.mxu0 0.0
    %2930 = vmatprep.subr.mxu0 0.0
    %2931 = vmatpush1.msra.mxu0 0.0
    %2932 = vmatprep.subr.mxu0 0.0
    %2933 = vmatpush1.msra.mxu0 0.0
    %2934 = vmatprep.subr.mxu0 0.0
    %2935 = vmatpush1.msra.mxu0 0.0
    %2936 = vmatprep.subr.mxu0 0.0
    %2937 = vmatpush1.msra.mxu0 0.0
    %2938 = vmatprep.subr.mxu0 0.0
    %2939 = vmatpush1.msra.mxu0 0.0
    %2940 = vmatprep.subr.mxu0 0.0
    %2941 = vmatpush1.msra.mxu0 0.0
    %2942 = vmatprep.subr.mxu0 0.0
    %2943 = vmatpush1.msra.mxu0 0.0
    %2944 = vmatprep.subr.mxu0 0.0
    %2945 = vmatpush1.msra.mxu0 0.0
    %2946 = vmatprep.subr.mxu0 0.0
    %2947 = vmatpush1.msra.mxu0 0.0
    %2948 = vmatprep.subr.mxu0 0.0
    %2949 = vmatpush1.msra.mxu0 0.0
    %2950 = vmatprep.subr.mxu0 0.0
    %2951 = vmatpush1.msra.mxu0 0.0
    %2952 = vmatprep.subr.mxu0 0.0
    %2953 = vmatpush1.msra.mxu0 0.0
    %2954 = vmatprep.subr.mxu0 0.0
    %2955 = vmatpush1.msra.mxu0 0.0
    %2956 = vmatprep.subr.mxu0 0.0
    %2957 = vmatpush1.msra.mxu0 0.0
    %2958 = vmatprep.subr.mxu0 0.0
    %2959 = vmatpush1.msra.mxu0 0.0
    %2960 = vmatprep.subr.mxu0 0.0
    %2961 = vmatpush1.msra.mxu0 0.0
    %2962 = vmatprep.subr.mxu0 0.0
    %2963 = vmatpush1.msra.mxu0 0.0
    %2964 = vmatprep.subr.mxu0 0.0
    %2965 = vmatpush1.msra.mxu0 0.0
    %2966 = vmatprep.subr.mxu0 0.0
    %2967 = vmatpush1.msra.mxu0 0.0
    %2968 = vmatprep.subr.mxu0 0.0
    %2969 = vmatpush1.msra.mxu0 0.0
    %2970 = vmatprep.subr.mxu0 0.0
    %2971 = vmatpush1.msra.mxu0 0.0
    %2972 = vmatprep.subr.mxu0 0.0
    %2973 = vmatpush1.msra.mxu0 0.0
    %2974 = vmatprep.mubr.f32.mxu0 0.0
    %2975 = vmatmul.mubr.f32.gmra.mrb[0].mxu0 %v2863
    %v2976 = vpop.f32.mrb[0].mxu0
    %v2977 = vadd.f32 %v2861, %v2976
    %v2978 = vpop.f32.mrb[0].mxu0
    %2979 = vmatprep.mubr.f32.mxu0 0.0
    %2980 = vmatmul.mubr.f32.gmra.mrb[0].mxu0 %v2866
    %v2981 = vpop.f32.mrb[0].mxu0
    %v2982 = vadd.f32 %v2861, %v2981
    %v2983 = vpop.f32.mrb[0].mxu0
    %2984 = vmatprep.mubr.f32.mxu0 0.0
    %2985 = vmatmul.mubr.f32.gmra.mrb[0].mxu0 %v2869
    %v2986 = vpop.f32.mrb[0].mxu0
    %v2987 = vadd.f32 %v2861, %v2986
    %v2988 = vpop.f32.mrb[0].mxu0
    %2989 = vmatprep.mubr.f32.mxu0 0.0
    %2990 = vmatmul.mubr.f32.gmra.mrb[0].mxu0 %v2872
    %v2991 = vpop.f32.mrb[0].mxu0
    %v2992 = vadd.f32 %v2861, %v2991
    %v2993 = vpop.f32.mrb[0].mxu0
    %2994 = vmatprep.mubr.f32.mxu0 0.0
    %2995 = vmatmul.mubr.f32.gmra.mrb[0].mxu0 %v2875
    %v2996 = vpop.f32.mrb[0].mxu0
    %v2997 = vadd.f32 %v2861, %v2996
    %v2998 = vpop.f32.mrb[0].mxu0
    %2999 = vmatprep.mubr.f32.mxu0 0.0
    %3000 = vmatmul.mubr.f32.gmra.mrb[0].mxu0 %v2878
    %v3001 = vpop.f32.mrb[0].mxu0
    %v3002 = vadd.f32 %v2861, %v3001
    %v3003 = vpop.f32.mrb[0].mxu0
    %3004 = vmatprep.mubr.f32.mxu0 0.0
    %3005 = vmatmul.mubr.f32.gmra.mrb[0].mxu0 %v2881
    %v3006 = vpop.f32.mrb[0].mxu0
    %v3007 = vadd.f32 %v2861, %v3006
    %v3008 = vpop.f32.mrb[0].mxu0
    %3009 = vmatprep.mubr.f32.mxu0 0.0
    %3010 = vmatmul.mubr.f32.gmra.mrb[0].mxu0 %v2884
    %v3011 = vpop.f32.mrb[0].mxu0
    %v3012 = vadd.f32 %v2861, %v3011
    %v3013 = vpop.f32.mrb[0].mxu0
    %3014 = vmatprep.mubr.f32.mxu0 0.0
    %3015 = vmatmul.mubr.f32.gmra.mrb[0].mxu0 %v2887
    %v3016 = vpop.f32.mrb[0].mxu0
    %v3017 = vadd.f32 %v2861, %v3016
    %v3018 = vpop.f32.mrb[0].mxu0
    %3019 = vmatprep.mubr.f32.mxu0 0.0
    %3020 = vmatmul.mubr.f32.gmra.mrb[0].mxu0 %v2890
    %v3021 = vpop.f32.mrb[0].mxu0
    %v3022 = vadd.f32 %v2861, %v3021
    %v3023 = vpop.f32.mrb[0].mxu0
    %3024 = vmatprep.mubr.f32.mxu0 0.0
    %3025 = vmatmul.mubr.f32.gmra.mrb[0].mxu0 %v2893
    %v3026 = vpop.f32.mrb[0].mxu0
    %v3027 = vadd.f32 %v2861, %v3026
    %v3028 = vpop.f32.mrb[0].mxu0
    %3029 = vmatprep.mubr.f32.mxu0 0.0
    %3030 = vmatmul.mubr.f32.gmra.mrb[0].mxu0 %v2896
    %v3031 = vpop.f32.mrb[0].mxu0
    %v3032 = vadd.f32 %v2861, %v3031
    %v3033 = vpop.f32.mrb[0].mxu0
    %3034 = vmatprep.mubr.f32.mxu0 0.0
    %3035 = vmatmul.mubr.f32.gmra.mrb[0].mxu0 %v2899
    %v3036 = vpop.f32.mrb[0].mxu0
    %v3037 = vadd.f32 %v2861, %v3036
    %v3038 = vpop.f32.mrb[0].mxu0
    %3039 = vmatprep.mubr.f32.mxu0 0.0
    %3040 = vmatmul.mubr.f32.gmra.mrb[0].mxu0 %v2902
    %v3041 = vpop.f32.mrb[0].mxu0
    %v3042 = vadd.f32 %v2861, %v3041
    %v3043 = vpop.f32.mrb[0].mxu0
    %3044 = vmatprep.mubr.f32.mxu0 0.0
    %3045 = vmatmul.mubr.f32.gmra.mrb[0].mxu0 %v2905
    %v3046 = vpop.f32.mrb[0].mxu0
    %v3047 = vadd.f32 %v2861, %v3046
    %v3048 = vpop.f32.mrb[0].mxu0
    %3049 = vmatprep.mubr.f32.mxu0 0.0
    %3050 = vmatmul.mubr.f32.gmra.mrb[0].mxu0 %v2908
    %v3051 = vpop.f32.mrb[0].mxu0
    %v3052 = vadd.f32 %v2861, %v3051
    %v3053 = vpop.f32.mrb[0].mxu0
    %3054 = vdwg.mxu0
    %v3055 = vsel %vm489, %v1855, -inf
    %v3056 = vrot.slane %v3055, 4
    %v3057 = vmax.f32 %v3055, %v3056
    %v3058 = vrot.slane %v3057, 2
    %v3059 = vmax.f32 %v3057, %v3058
    %v3060 = vrot.slane %v3059, 1
    %v3061 = vmax.f32 %v3059, %v3060
    %v3062 = vsel %vm489, %v1860, -inf
    %v3063 = vrot.slane %v3062, 4
    %v3064 = vmax.f32 %v3062, %v3063
    %v3065 = vrot.slane %v3064, 2
    %v3066 = vmax.f32 %v3064, %v3065
    %v3067 = vrot.slane %v3066, 1
    %v3068 = vmax.f32 %v3066, %v3067
    %v3069 = vsel %vm489, %v1865, -inf
    %v3070 = vrot.slane %v3069, 4
    %v3071 = vmax.f32 %v3069, %v3070
    %v3072 = vrot.slane %v3071, 2
    %v3073 = vmax.f32 %v3071, %v3072
    %v3074 = vrot.slane %v3073, 1
    %v3075 = vmax.f32 %v3073, %v3074
    %v3076 = vsel %vm489, %v1870, -inf
    %v3077 = vrot.slane %v3076, 4
    %v3078 = vmax.f32 %v3076, %v3077
    %v3079 = vrot.slane %v3078, 2
    %v3080 = vmax.f32 %v3078, %v3079
    %v3081 = vrot.slane %v3080, 1
    %v3082 = vmax.f32 %v3080, %v3081
    %v3083 = vsel %vm489, %v1875, -inf
    %v3084 = vrot.slane %v3083, 4
    %v3085 = vmax.f32 %v3083, %v3084
    %v3086 = vrot.slane %v3085, 2
    %v3087 = vmax.f32 %v3085, %v3086
    %v3088 = vrot.slane %v3087, 1
    %v3089 = vmax.f32 %v3087, %v3088
    %v3090 = vsel %vm489, %v1880, -inf
    %v3091 = vrot.slane %v3090, 4
    %v3092 = vmax.f32 %v3090, %v3091
    %v3093 = vrot.slane %v3092, 2
    %v3094 = vmax.f32 %v3092, %v3093
    %v3095 = vrot.slane %v3094, 1
    %v3096 = vmax.f32 %v3094, %v3095
    %v3097 = vsel %vm489, %v1885, -inf
    %v3098 = vrot.slane %v3097, 4
    %v3099 = vmax.f32 %v3097, %v3098
    %v3100 = vrot.slane %v3099, 2
    %v3101 = vmax.f32 %v3099, %v3100
    %v3102 = vrot.slane %v3101, 1
    %v3103 = vmax.f32 %v3101, %v3102
    %v3104 = vsel %vm489, %v1890, -inf
    %v3105 = vrot.slane %v3104, 4
    %v3106 = vmax.f32 %v3104, %v3105
    %v3107 = vrot.slane %v3106, 2
    %v3108 = vmax.f32 %v3106, %v3107
    %v3109 = vrot.slane %v3108, 1
    %v3110 = vmax.f32 %v3108, %v3109
    %v3111 = vsel %vm489, %v1895, -inf
    %v3112 = vrot.slane %v3111, 4
    %v3113 = vmax.f32 %v3111, %v3112
    %v3114 = vrot.slane %v3113, 2
    %v3115 = vmax.f32 %v3113, %v3114
    %v3116 = vrot.slane %v3115, 1
    %v3117 = vmax.f32 %v3115, %v3116
    %v3118 = vsel %vm489, %v1900, -inf
    %v3119 = vrot.slane %v3118, 4
    %v3120 = vmax.f32 %v3118, %v3119
    %v3121 = vrot.slane %v3120, 2
    %v3122 = vmax.f32 %v3120, %v3121
    %v3123 = vrot.slane %v3122, 1
    %v3124 = vmax.f32 %v3122, %v3123
    %v3125 = vsel %vm489, %v1905, -inf
    %v3126 = vrot.slane %v3125, 4
    %v3127 = vmax.f32 %v3125, %v3126
    %v3128 = vrot.slane %v3127, 2
    %v3129 = vmax.f32 %v3127, %v3128
    %v3130 = vrot.slane %v3129, 1
    %v3131 = vmax.f32 %v3129, %v3130
    %v3132 = vsel %vm489, %v1910, -inf
    %v3133 = vrot.slane %v3132, 4
    %v3134 = vmax.f32 %v3132, %v3133
    %v3135 = vrot.slane %v3134, 2
    %v3136 = vmax.f32 %v3134, %v3135
    %v3137 = vrot.slane %v3136, 1
    %v3138 = vmax.f32 %v3136, %v3137
    %v3139 = vsel %vm489, %v1915, -inf
    %v3140 = vrot.slane %v3139, 4
    %v3141 = vmax.f32 %v3139, %v3140
    %v3142 = vrot.slane %v3141, 2
    %v3143 = vmax.f32 %v3141, %v3142
    %v3144 = vrot.slane %v3143, 1
    %v3145 = vmax.f32 %v3143, %v3144
    %v3146 = vsel %vm489, %v1920, -inf
    %v3147 = vrot.slane %v3146, 4
    %v3148 = vmax.f32 %v3146, %v3147
    %v3149 = vrot.slane %v3148, 2
    %v3150 = vmax.f32 %v3148, %v3149
    %v3151 = vrot.slane %v3150, 1
    %v3152 = vmax.f32 %v3150, %v3151
    %v3153 = vsel %vm489, %v1925, -inf
    %v3154 = vrot.slane %v3153, 4
    %v3155 = vmax.f32 %v3153, %v3154
    %v3156 = vrot.slane %v3155, 2
    %v3157 = vmax.f32 %v3155, %v3156
    %v3158 = vrot.slane %v3157, 1
    %v3159 = vmax.f32 %v3157, %v3158
    %v3160 = vsel %vm489, %v1930, -inf
    %v3161 = vrot.slane %v3160, 4
    %v3162 = vmax.f32 %v3160, %v3161
    %v3163 = vrot.slane %v3162, 2
    %v3164 = vmax.f32 %v3162, %v3163
    %v3165 = vrot.slane %v3164, 1
    %v3166 = vmax.f32 %v3164, %v3165
    %v3167 = vsub.f32 %v1855, %v3061
    %v3168 = vsub.f32 %v1860, %v3068
    %v3169 = vsub.f32 %v1865, %v3075
    %v3170 = vsub.f32 %v1870, %v3082
    %v3171 = vsub.f32 %v1875, %v3089
    %v3172 = vsub.f32 %v1880, %v3096
    %v3173 = vsub.f32 %v1885, %v3103
    %v3174 = vsub.f32 %v1890, %v3110
    %v3175 = vsub.f32 %v1895, %v3117
    %v3176 = vsub.f32 %v1900, %v3124
    %v3177 = vsub.f32 %v1905, %v3131
    %v3178 = vsub.f32 %v1910, %v3138
    %v3179 = vsub.f32 %v1915, %v3145
    %v3180 = vsub.f32 %v1920, %v3152
    %v3181 = vsub.f32 %v1925, %v3159
    %v3182 = vsub.f32 %v1930, %v3166
    %v3183 = vmul.f32 %v3167, 1.442695
    %v3184 = vpow.pop %v3183
    %v3185 = vmul.f32 %v3168, 1.442695
    %v3186 = vpow.pop %v3185
    %v3187 = vmul.f32 %v3169, 1.442695
    %v3188 = vpow.pop %v3187
    %v3189 = vmul.f32 %v3170, 1.442695
    %v3190 = vpow.pop %v3189
    %v3191 = vmul.f32 %v3171, 1.442695
    %v3192 = vpow.pop %v3191
    %v3193 = vmul.f32 %v3172, 1.442695
    %v3194 = vpow.pop %v3193
    %v3195 = vmul.f32 %v3173, 1.442695
    %v3196 = vpow.pop %v3195
    %v3197 = vmul.f32 %v3174, 1.442695
    %v3198 = vpow.pop %v3197
    %v3199 = vmul.f32 %v3175, 1.442695
    %v3200 = vpow.pop %v3199
    %v3201 = vmul.f32 %v3176, 1.442695
    %v3202 = vpow.pop %v3201
    %v3203 = vmul.f32 %v3177, 1.442695
    %v3204 = vpow.pop %v3203
    %v3205 = vmul.f32 %v3178, 1.442695
    %v3206 = vpow.pop %v3205
    %v3207 = vmul.f32 %v3179, 1.442695
    %v3208 = vpow.pop %v3207
    %v3209 = vmul.f32 %v3180, 1.442695
    %v3210 = vpow.pop %v3209
    %v3211 = vmul.f32 %v3181, 1.442695
    %v3212 = vpow.pop %v3211
    %v3213 = vmul.f32 %v3182, 1.442695
    %v3214 = vpow.pop %v3213
    %v3215 = vsel %vm489, %v3184, 0.0
    %v3216 = vrot.slane %v3215, 4
    %v3217 = vadd.f32 %v3215, %v3216
    %v3218 = vrot.slane %v3217, 2
    %v3219 = vadd.f32 %v3217, %v3218
    %v3220 = vrot.slane %v3219, 1
    %v3221 = vadd.f32 %v3219, %v3220
    %v3222 = vsel %vm489, %v3186, 0.0
    %v3223 = vrot.slane %v3222, 4
    %v3224 = vadd.f32 %v3222, %v3223
    %v3225 = vrot.slane %v3224, 2
    %v3226 = vadd.f32 %v3224, %v3225
    %v3227 = vrot.slane %v3226, 1
    %v3228 = vadd.f32 %v3226, %v3227
    %v3229 = vsel %vm489, %v3188, 0.0
    %v3230 = vrot.slane %v3229, 4
    %v3231 = vadd.f32 %v3229, %v3230
    %v3232 = vrot.slane %v3231, 2
    %v3233 = vadd.f32 %v3231, %v3232
    %v3234 = vrot.slane %v3233, 1
    %v3235 = vadd.f32 %v3233, %v3234
    %v3236 = vsel %vm489, %v3190, 0.0
    %v3237 = vrot.slane %v3236, 4
    %v3238 = vadd.f32 %v3236, %v3237
    %v3239 = vrot.slane %v3238, 2
    %v3240 = vadd.f32 %v3238, %v3239
    %v3241 = vrot.slane %v3240, 1
    %v3242 = vadd.f32 %v3240, %v3241
    %v3243 = vsel %vm489, %v3192, 0.0
    %v3244 = vrot.slane %v3243, 4
    %v3245 = vadd.f32 %v3243, %v3244
    %v3246 = vrot.slane %v3245, 2
    %v3247 = vadd.f32 %v3245, %v3246
    %v3248 = vrot.slane %v3247, 1
    %v3249 = vadd.f32 %v3247, %v3248
    %v3250 = vsel %vm489, %v3194, 0.0
    %v3251 = vrot.slane %v3250, 4
    %v3252 = vadd.f32 %v3250, %v3251
    %v3253 = vrot.slane %v3252, 2
    %v3254 = vadd.f32 %v3252, %v3253
    %v3255 = vrot.slane %v3254, 1
    %v3256 = vadd.f32 %v3254, %v3255
    %v3257 = vsel %vm489, %v3196, 0.0
    %v3258 = vrot.slane %v3257, 4
    %v3259 = vadd.f32 %v3257, %v3258
    %v3260 = vrot.slane %v3259, 2
    %v3261 = vadd.f32 %v3259, %v3260
    %v3262 = vrot.slane %v3261, 1
    %v3263 = vadd.f32 %v3261, %v3262
    %v3264 = vsel %vm489, %v3198, 0.0
    %v3265 = vrot.slane %v3264, 4
    %v3266 = vadd.f32 %v3264, %v3265
    %v3267 = vrot.slane %v3266, 2
    %v3268 = vadd.f32 %v3266, %v3267
    %v3269 = vrot.slane %v3268, 1
    %v3270 = vadd.f32 %v3268, %v3269
    %v3271 = vsel %vm489, %v3200, 0.0
    %v3272 = vrot.slane %v3271, 4
    %v3273 = vadd.f32 %v3271, %v3272
    %v3274 = vrot.slane %v3273, 2
    %v3275 = vadd.f32 %v3273, %v3274
    %v3276 = vrot.slane %v3275, 1
    %v3277 = vadd.f32 %v3275, %v3276
    %v3278 = vsel %vm489, %v3202, 0.0
    %v3279 = vrot.slane %v3278, 4
    %v3280 = vadd.f32 %v3278, %v3279
    %v3281 = vrot.slane %v3280, 2
    %v3282 = vadd.f32 %v3280, %v3281
    %v3283 = vrot.slane %v3282, 1
    %v3284 = vadd.f32 %v3282, %v3283
    %v3285 = vsel %vm489, %v3204, 0.0
    %v3286 = vrot.slane %v3285, 4
    %v3287 = vadd.f32 %v3285, %v3286
    %v3288 = vrot.slane %v3287, 2
    %v3289 = vadd.f32 %v3287, %v3288
    %v3290 = vrot.slane %v3289, 1
    %v3291 = vadd.f32 %v3289, %v3290
    %v3292 = vsel %vm489, %v3206, 0.0
    %v3293 = vrot.slane %v3292, 4
    %v3294 = vadd.f32 %v3292, %v3293
    %v3295 = vrot.slane %v3294, 2
    %v3296 = vadd.f32 %v3294, %v3295
    %v3297 = vrot.slane %v3296, 1
    %v3298 = vadd.f32 %v3296, %v3297
    %v3299 = vsel %vm489, %v3208, 0.0
    %v3300 = vrot.slane %v3299, 4
    %v3301 = vadd.f32 %v3299, %v3300
    %v3302 = vrot.slane %v3301, 2
    %v3303 = vadd.f32 %v3301, %v3302
    %v3304 = vrot.slane %v3303, 1
    %v3305 = vadd.f32 %v3303, %v3304
    %v3306 = vsel %vm489, %v3210, 0.0
    %v3307 = vrot.slane %v3306, 4
    %v3308 = vadd.f32 %v3306, %v3307
    %v3309 = vrot.slane %v3308, 2
    %v3310 = vadd.f32 %v3308, %v3309
    %v3311 = vrot.slane %v3310, 1
    %v3312 = vadd.f32 %v3310, %v3311
    %v3313 = vsel %vm489, %v3212, 0.0
    %v3314 = vrot.slane %v3313, 4
    %v3315 = vadd.f32 %v3313, %v3314
    %v3316 = vrot.slane %v3315, 2
    %v3317 = vadd.f32 %v3315, %v3316
    %v3318 = vrot.slane %v3317, 1
    %v3319 = vadd.f32 %v3317, %v3318
    %v3320 = vsel %vm489, %v3214, 0.0
    %v3321 = vrot.slane %v3320, 4
    %v3322 = vadd.f32 %v3320, %v3321
    %v3323 = vrot.slane %v3322, 2
    %v3324 = vadd.f32 %v3322, %v3323
    %v3325 = vrot.slane %v3324, 1
    %v3326 = vadd.f32 %v3324, %v3325
    %v3327 = vrcp.pop %v3221
    %v3328 = vrcp.pop %v3228
    %v3329 = vrcp.pop %v3235
    %v3330 = vrcp.pop %v3242
    %v3331 = vrcp.pop %v3249
    %v3332 = vrcp.pop %v3256
    %v3333 = vrcp.pop %v3263
    %v3334 = vrcp.pop %v3270
    %v3335 = vrcp.pop %v3277
    %v3336 = vrcp.pop %v3284
    %v3337 = vrcp.pop %v3291
    %v3338 = vrcp.pop %v3298
    %v3339 = vrcp.pop %v3305
    %v3340 = vrcp.pop %v3312
    %v3341 = vrcp.pop %v3319
    %v3342 = vrcp.pop %v3326
    %v3343 = vmul.f32 %v3184, %v3327
    %v3344 = vmul.f32 %v3186, %v3328
    %v3345 = vmul.f32 %v3188, %v3329
    %v3346 = vmul.f32 %v3190, %v3330
    %v3347 = vmul.f32 %v3192, %v3331
    %v3348 = vmul.f32 %v3194, %v3332
    %v3349 = vmul.f32 %v3196, %v3333
    %v3350 = vmul.f32 %v3198, %v3334
    %v3351 = vmul.f32 %v3200, %v3335
    %v3352 = vmul.f32 %v3202, %v3336
    %v3353 = vmul.f32 %v3204, %v3337
    %v3354 = vmul.f32 %v3206, %v3338
    %v3355 = vmul.f32 %v3208, %v3339
    %v3356 = vmul.f32 %v3210, %v3340
    %v3357 = vmul.f32 %v3212, %v3341
    %v3358 = vmul.f32 %v3214, %v3342
    %v3359 = vmul.f32 %v3343, %v2977
    %v3360 = vmul.f32 %v3344, %v2982
    %v3361 = vmul.f32 %v3345, %v2987
    %v3362 = vmul.f32 %v3346, %v2992
    %v3363 = vmul.f32 %v3347, %v2997
    %v3364 = vmul.f32 %v3348, %v3002
    %v3365 = vmul.f32 %v3349, %v3007
    %v3366 = vmul.f32 %v3350, %v3012
    %v3367 = vmul.f32 %v3351, %v3017
    %v3368 = vmul.f32 %v3352, %v3022
    %v3369 = vmul.f32 %v3353, %v3027
    %v3370 = vmul.f32 %v3354, %v3032
    %v3371 = vmul.f32 %v3355, %v3037
    %v3372 = vmul.f32 %v3356, %v3042
    %v3373 = vmul.f32 %v3357, %v3047
    %v3374 = vmul.f32 %v3358, %v3052
    %v3375 = vsel %vm489, %v3359, 0.0
    %v3376 = vrot.slane %v3375, 4
    %v3377 = vadd.f32 %v3375, %v3376
    %v3378 = vrot.slane %v3377, 2
    %v3379 = vadd.f32 %v3377, %v3378
    %v3380 = vrot.slane %v3379, 1
    %v3381 = vadd.f32 %v3379, %v3380
    %v3382 = vsel %vm489, %v3360, 0.0
    %v3383 = vrot.slane %v3382, 4
    %v3384 = vadd.f32 %v3382, %v3383
    %v3385 = vrot.slane %v3384, 2
    %v3386 = vadd.f32 %v3384, %v3385
    %v3387 = vrot.slane %v3386, 1
    %v3388 = vadd.f32 %v3386, %v3387
    %v3389 = vsel %vm489, %v3361, 0.0
    %v3390 = vrot.slane %v3389, 4
    %v3391 = vadd.f32 %v3389, %v3390
    %v3392 = vrot.slane %v3391, 2
    %v3393 = vadd.f32 %v3391, %v3392
    %v3394 = vrot.slane %v3393, 1
    %v3395 = vadd.f32 %v3393, %v3394
    %v3396 = vsel %vm489, %v3362, 0.0
    %v3397 = vrot.slane %v3396, 4
    %v3398 = vadd.f32 %v3396, %v3397
    %v3399 = vrot.slane %v3398, 2
    %v3400 = vadd.f32 %v3398, %v3399
    %v3401 = vrot.slane %v3400, 1
    %v3402 = vadd.f32 %v3400, %v3401
    %v3403 = vsel %vm489, %v3363, 0.0
    %v3404 = vrot.slane %v3403, 4
    %v3405 = vadd.f32 %v3403, %v3404
    %v3406 = vrot.slane %v3405, 2
    %v3407 = vadd.f32 %v3405, %v3406
    %v3408 = vrot.slane %v3407, 1
    %v3409 = vadd.f32 %v3407, %v3408
    %v3410 = vsel %vm489, %v3364, 0.0
    %v3411 = vrot.slane %v3410, 4
    %v3412 = vadd.f32 %v3410, %v3411
    %v3413 = vrot.slane %v3412, 2
    %v3414 = vadd.f32 %v3412, %v3413
    %v3415 = vrot.slane %v3414, 1
    %v3416 = vadd.f32 %v3414, %v3415
    %v3417 = vsel %vm489, %v3365, 0.0
    %v3418 = vrot.slane %v3417, 4
    %v3419 = vadd.f32 %v3417, %v3418
    %v3420 = vrot.slane %v3419, 2
    %v3421 = vadd.f32 %v3419, %v3420
    %v3422 = vrot.slane %v3421, 1
    %v3423 = vadd.f32 %v3421, %v3422
    %v3424 = vsel %vm489, %v3366, 0.0
    %v3425 = vrot.slane %v3424, 4
    %v3426 = vadd.f32 %v3424, %v3425
    %v3427 = vrot.slane %v3426, 2
    %v3428 = vadd.f32 %v3426, %v3427
    %v3429 = vrot.slane %v3428, 1
    %v3430 = vadd.f32 %v3428, %v3429
    %v3431 = vsel %vm489, %v3367, 0.0
    %v3432 = vrot.slane %v3431, 4
    %v3433 = vadd.f32 %v3431, %v3432
    %v3434 = vrot.slane %v3433, 2
    %v3435 = vadd.f32 %v3433, %v3434
    %v3436 = vrot.slane %v3435, 1
    %v3437 = vadd.f32 %v3435, %v3436
    %v3438 = vsel %vm489, %v3368, 0.0
    %v3439 = vrot.slane %v3438, 4
    %v3440 = vadd.f32 %v3438, %v3439
    %v3441 = vrot.slane %v3440, 2
    %v3442 = vadd.f32 %v3440, %v3441
    %v3443 = vrot.slane %v3442, 1
    %v3444 = vadd.f32 %v3442, %v3443
    %v3445 = vsel %vm489, %v3369, 0.0
    %v3446 = vrot.slane %v3445, 4
    %v3447 = vadd.f32 %v3445, %v3446
    %v3448 = vrot.slane %v3447, 2
    %v3449 = vadd.f32 %v3447, %v3448
    %v3450 = vrot.slane %v3449, 1
    %v3451 = vadd.f32 %v3449, %v3450
    %v3452 = vsel %vm489, %v3370, 0.0
    %v3453 = vrot.slane %v3452, 4
    %v3454 = vadd.f32 %v3452, %v3453
    %v3455 = vrot.slane %v3454, 2
    %v3456 = vadd.f32 %v3454, %v3455
    %v3457 = vrot.slane %v3456, 1
    %v3458 = vadd.f32 %v3456, %v3457
    %v3459 = vsel %vm489, %v3371, 0.0
    %v3460 = vrot.slane %v3459, 4
    %v3461 = vadd.f32 %v3459, %v3460
    %v3462 = vrot.slane %v3461, 2
    %v3463 = vadd.f32 %v3461, %v3462
    %v3464 = vrot.slane %v3463, 1
    %v3465 = vadd.f32 %v3463, %v3464
    %v3466 = vsel %vm489, %v3372, 0.0
    %v3467 = vrot.slane %v3466, 4
    %v3468 = vadd.f32 %v3466, %v3467
    %v3469 = vrot.slane %v3468, 2
    %v3470 = vadd.f32 %v3468, %v3469
    %v3471 = vrot.slane %v3470, 1
    %v3472 = vadd.f32 %v3470, %v3471
    %v3473 = vsel %vm489, %v3373, 0.0
    %v3474 = vrot.slane %v3473, 4
    %v3475 = vadd.f32 %v3473, %v3474
    %v3476 = vrot.slane %v3475, 2
    %v3477 = vadd.f32 %v3475, %v3476
    %v3478 = vrot.slane %v3477, 1
    %v3479 = vadd.f32 %v3477, %v3478
    %v3480 = vsel %vm489, %v3374, 0.0
    %v3481 = vrot.slane %v3480, 4
    %v3482 = vadd.f32 %v3480, %v3481
    %v3483 = vrot.slane %v3482, 2
    %v3484 = vadd.f32 %v3482, %v3483
    %v3485 = vrot.slane %v3484, 1
    %v3486 = vadd.f32 %v3484, %v3485
    %vm3503 = vcmask 1041409
    %v3504 = vsel %vm3503, %v3388, %v3381
    %vm3505 = vcmask 1042434
    %v3506 = vsel %vm3505, %v3395, %v3504
    %vm3507 = vcmask 1043459
    %v3508 = vsel %vm3507, %v3402, %v3506
    %vm3509 = vcmask 1044484
    %v3510 = vsel %vm3509, %v3409, %v3508
    %vm3511 = vcmask 1045509
    %v3512 = vsel %vm3511, %v3416, %v3510
    %vm3513 = vcmask 1046534
    %v3514 = vsel %vm3513, %v3423, %v3512
    %vm3515 = vcmask 1047559
    %v3516 = vsel %vm3515, %v3430, %v3514
    %v3517 = vsel %vm3503, %v3444, %v3437
    %v3518 = vsel %vm3505, %v3451, %v3517
    %v3519 = vsel %vm3507, %v3458, %v3518
    %v3520 = vsel %vm3509, %v3465, %v3519
    %v3521 = vsel %vm3511, %v3472, %v3520
    %v3522 = vsel %vm3513, %v3479, %v3521
    %v3523 = vsel %vm3515, %v3486, %v3522
    %v3526 = vsel %vm489, %v3516, 0.0
    %3527 = vadd.xlane.f32.xlu0 %v3526
    %v3528 = vpop.xlane.xlu0 %3527
    %v3529 = vsel %vm489, %v3523, 0.0
    %3530 = vadd.xlane.f32.xlu0 %v3529
    %v3531 = vpop.xlane.xlu0 %3530
    %v3532 = vmul.f32 %v3528, %v747
    %v3533 = vmul.f32 %v3531, %v747
    %v3536 = vrot.slane %v3532, 1
    %v3537 = vrot.slane %v3532, 2
    %v3538 = vrot.slane %v3532, 3
    %v3539 = vrot.slane %v3532, 4
    %v3540 = vrot.slane %v3532, 5
    %v3541 = vrot.slane %v3532, 6
    %v3542 = vrot.slane %v3532, 7
    %v3543 = vrot.slane %v3533, 1
    %v3544 = vrot.slane %v3533, 2
    %v3545 = vrot.slane %v3533, 3
    %v3546 = vrot.slane %v3533, 4
    %v3547 = vrot.slane %v3533, 5
    %v3548 = vrot.slane %v3533, 6
    %v3549 = vrot.slane %v3533, 7
    %v3566 = vsub.f32 %v3381, %v3532
    %v3567 = vsub.f32 %v3388, %v3536
    %v3568 = vsub.f32 %v3395, %v3537
    %v3569 = vsub.f32 %v3402, %v3538
    %v3570 = vsub.f32 %v3409, %v3539
    %v3571 = vsub.f32 %v3416, %v3540
    %v3572 = vsub.f32 %v3423, %v3541
    %v3573 = vsub.f32 %v3430, %v3542
    %v3574 = vsub.f32 %v3437, %v3533
    %v3575 = vsub.f32 %v3444, %v3543
    %v3576 = vsub.f32 %v3451, %v3544
    %v3577 = vsub.f32 %v3458, %v3545
    %v3578 = vsub.f32 %v3465, %v3546
    %v3579 = vsub.f32 %v3472, %v3547
    %v3580 = vsub.f32 %v3479, %v3548
    %v3581 = vsub.f32 %v3486, %v3549
    %v3582 = vmul.f32 %v3566, %v3566
    %v3583 = vmul.f32 %v3567, %v3567
    %v3584 = vmul.f32 %v3568, %v3568
    %v3585 = vmul.f32 %v3569, %v3569
    %v3586 = vmul.f32 %v3570, %v3570
    %v3587 = vmul.f32 %v3571, %v3571
    %v3588 = vmul.f32 %v3572, %v3572
    %v3589 = vmul.f32 %v3573, %v3573
    %v3590 = vmul.f32 %v3574, %v3574
    %v3591 = vmul.f32 %v3575, %v3575
    %v3592 = vmul.f32 %v3576, %v3576
    %v3593 = vmul.f32 %v3577, %v3577
    %v3594 = vmul.f32 %v3578, %v3578
    %v3595 = vmul.f32 %v3579, %v3579
    %v3596 = vmul.f32 %v3580, %v3580
    %v3597 = vmul.f32 %v3581, %v3581
    %v3614 = vrot.slane %v3583, 7
    %v3615 = vsel %vm3503, %v3614, %v3582
    %v3616 = vrot.slane %v3584, 6
    %v3617 = vsel %vm3505, %v3616, %v3615
    %v3618 = vrot.slane %v3585, 5
    %v3619 = vsel %vm3507, %v3618, %v3617
    %v3620 = vrot.slane %v3586, 4
    %v3621 = vsel %vm3509, %v3620, %v3619
    %v3622 = vrot.slane %v3587, 3
    %v3623 = vsel %vm3511, %v3622, %v3621
    %v3624 = vrot.slane %v3588, 2
    %v3625 = vsel %vm3513, %v3624, %v3623
    %v3626 = vrot.slane %v3589, 1
    %v3627 = vsel %vm3515, %v3626, %v3625
    %v3628 = vrot.slane %v3591, 7
    %v3629 = vsel %vm3503, %v3628, %v3590
    %v3630 = vrot.slane %v3592, 6
    %v3631 = vsel %vm3505, %v3630, %v3629
    %v3632 = vrot.slane %v3593, 5
    %v3633 = vsel %vm3507, %v3632, %v3631
    %v3634 = vrot.slane %v3594, 4
    %v3635 = vsel %vm3509, %v3634, %v3633
    %v3636 = vrot.slane %v3595, 3
    %v3637 = vsel %vm3511, %v3636, %v3635
    %v3638 = vrot.slane %v3596, 2
    %v3639 = vsel %vm3513, %v3638, %v3637
    %v3640 = vrot.slane %v3597, 1
    %v3641 = vsel %vm3515, %v3640, %v3639
    %v3644 = vsel %vm489, %v3627, 0.0
    %3645 = vadd.xlane.f32.xlu0 %v3644
    %v3646 = vpop.xlane.xlu0 %3645
    %v3647 = vsel %vm489, %v3641, 0.0
    %3648 = vadd.xlane.f32.xlu0 %v3647
    %v3649 = vpop.xlane.xlu0 %3648
    %v3650 = vmul.f32 %v3646, %v747
    %v3651 = vmul.f32 %v3649, %v747
    %v3652 = vadd.f32 %v3650, 1e-05
    %v3653 = vadd.f32 %v3651, 1e-05
    %v3654 = vrsqrt.pop %v3652
    %v3655 = vrsqrt.pop %v3653
    %v3658 = vrot.slane %v3654, 1
    %v3659 = vrot.slane %v3654, 2
    %v3660 = vrot.slane %v3654, 3
    %v3661 = vrot.slane %v3654, 4
    %v3662 = vrot.slane %v3654, 5
    %v3663 = vrot.slane %v3654, 6
    %v3664 = vrot.slane %v3654, 7
    %v3665 = vrot.slane %v3655, 1
    %v3666 = vrot.slane %v3655, 2
    %v3667 = vrot.slane %v3655, 3
    %v3668 = vrot.slane %v3655, 4
    %v3669 = vrot.slane %v3655, 5
    %v3670 = vrot.slane %v3655, 6
    %v3671 = vrot.slane %v3655, 7
    %v3688 = vmul.f32 %v3566, %v3654
    %v3689 = vmul.f32 %v3567, %v3658
    %v3690 = vmul.f32 %v3568, %v3659
    %v3691 = vmul.f32 %v3569, %v3660
    %v3692 = vmul.f32 %v3570, %v3661
    %v3693 = vmul.f32 %v3571, %v3662
    %v3694 = vmul.f32 %v3572, %v3663
    %v3695 = vmul.f32 %v3573, %v3664
    %v3696 = vmul.f32 %v3574, %v3655
    %v3697 = vmul.f32 %v3575, %v3665
    %v3698 = vmul.f32 %v3576, %v3666
    %v3699 = vmul.f32 %v3577, %v3667
    %v3700 = vmul.f32 %v3578, %v3668
    %v3701 = vmul.f32 %v3579, %v3669
    %v3702 = vmul.f32 %v3580, %v3670
    %v3703 = vmul.f32 %v3581, %v3671
    %v3704 = vlaneseq
    %v3705 = vshrl.u32 %v3704, 7
    %v3706 = vsub.s32 6, %v3705
    %v3707 = vrot.slane %v18, %v3706
    %v3708 = vmul.f32 %v3688, %v3707
    %v3709 = vmul.f32 %v3689, %v3707
    %v3710 = vmul.f32 %v3690, %v3707
    %v3711 = vmul.f32 %v3691, %v3707
    %v3712 = vmul.f32 %v3692, %v3707
    %v3713 = vmul.f32 %v3693, %v3707
    %v3714 = vmul.f32 %v3694, %v3707
    %v3715 = vmul.f32 %v3695, %v3707
    %v3716 = vmul.f32 %v3696, %v3707
    %v3717 = vmul.f32 %v3697, %v3707
    %v3718 = vmul.f32 %v3698, %v3707
    %v3719 = vmul.f32 %v3699, %v3707
    %v3720 = vmul.f32 %v3700, %v3707
    %v3721 = vmul.f32 %v3701, %v3707
    %v3722 = vmul.f32 %v3702, %v3707
    %v3723 = vmul.f32 %v3703, %v3707
    %v3724 = vlaneseq
    %v3725 = vshrl.u32 %v3724, 7
    %v3726 = vsub.s32 7, %v3725
    %v3727 = vrot.slane %v18, %v3726
    %v3728 = vadd.f32 %v3708, %v3727
    %v3729 = vadd.f32 %v3709, %v3727
    %v3730 = vadd.f32 %v3710, %v3727
    %v3731 = vadd.f32 %v3711, %v3727
    %v3732 = vadd.f32 %v3712, %v3727
    %v3733 = vadd.f32 %v3713, %v3727
    %v3734 = vadd.f32 %v3714, %v3727
    %v3735 = vadd.f32 %v3715, %v3727
    %v3736 = vadd.f32 %v3716, %v3727
    %v3737 = vadd.f32 %v3717, %v3727
    %v3738 = vadd.f32 %v3718, %v3727
    %v3739 = vadd.f32 %v3719, %v3727
    %v3740 = vadd.f32 %v3720, %v3727
    %v3741 = vadd.f32 %v3721, %v3727
    %v3742 = vadd.f32 %v3722, %v3727
    %v3743 = vadd.f32 %v3723, %v3727
    %v3744 = vlaneseq
    %v3745 = vshrl.u32 %v3744, 7
    %v3746 = vsub.s32 0, %v3745
    %v3747 = vrot.slane %v19, %v3746
    %v3764 = vrot.slane %v3729, 7
    %v3765 = vsel %vm3503, %v3764, %v3728
    %v3766 = vrot.slane %v3730, 6
    %v3767 = vsel %vm3505, %v3766, %v3765
    %v3768 = vrot.slane %v3731, 5
    %v3769 = vsel %vm3507, %v3768, %v3767
    %v3770 = vrot.slane %v3732, 4
    %v3771 = vsel %vm3509, %v3770, %v3769
    %v3772 = vrot.slane %v3733, 3
    %v3773 = vsel %vm3511, %v3772, %v3771
    %v3774 = vrot.slane %v3734, 2
    %v3775 = vsel %vm3513, %v3774, %v3773
    %v3776 = vrot.slane %v3735, 1
    %v3777 = vsel %vm3515, %v3776, %v3775
    %v3778 = vrot.slane %v3737, 7
    %v3779 = vsel %vm3503, %v3778, %v3736
    %v3780 = vrot.slane %v3738, 6
    %v3781 = vsel %vm3505, %v3780, %v3779
    %v3782 = vrot.slane %v3739, 5
    %v3783 = vsel %vm3507, %v3782, %v3781
    %v3784 = vrot.slane %v3740, 4
    %v3785 = vsel %vm3509, %v3784, %v3783
    %v3786 = vrot.slane %v3741, 3
    %v3787 = vsel %vm3511, %v3786, %v3785
    %v3788 = vrot.slane %v3742, 2
    %v3789 = vsel %vm3513, %v3788, %v3787
    %v3790 = vrot.slane %v3743, 1
    %v3791 = vsel %vm3515, %v3790, %v3789
    %v3792 = vsel %vm489, %v3777, 0
    %v3794 = vsel %vm489, %v3791, 0
    %3796 = vmatprep.subr.mxu0 0.0
    %3797 = vmatpush1.msra.mxu0 %v68
    %3798 = vmatprep.subr.mxu0 0.0
    %3799 = vmatpush1.msra.mxu0 %v69
    %3800 = vmatprep.subr.mxu0 0.0
    %3801 = vmatpush1.msra.mxu0 %v70
    %3802 = vmatprep.subr.mxu0 0.0
    %3803 = vmatpush1.msra.mxu0 %v71
    %3804 = vmatprep.subr.mxu0 0.0
    %3805 = vmatpush1.msra.mxu0 0.0
    %3806 = vmatprep.subr.mxu0 0.0
    %3807 = vmatpush1.msra.mxu0 0.0
    %3808 = vmatprep.subr.mxu0 0.0
    %3809 = vmatpush1.msra.mxu0 0.0
    %3810 = vmatprep.subr.mxu0 0.0
    %3811 = vmatpush1.msra.mxu0 0.0
    %3812 = vmatprep.subr.mxu0 0.0
    %3813 = vmatpush1.msra.mxu0 0.0
    %3814 = vmatprep.subr.mxu0 0.0
    %3815 = vmatpush1.msra.mxu0 0.0
    %3816 = vmatprep.subr.mxu0 0.0
    %3817 = vmatpush1.msra.mxu0 0.0
    %3818 = vmatprep.subr.mxu0 0.0
    %3819 = vmatpush1.msra.mxu0 0.0
    %3820 = vmatprep.subr.mxu0 0.0
    %3821 = vmatpush1.msra.mxu0 0.0
    %3822 = vmatprep.subr.mxu0 0.0
    %3823 = vmatpush1.msra.mxu0 0.0
    %3824 = vmatprep.subr.mxu0 0.0
    %3825 = vmatpush1.msra.mxu0 0.0
    %3826 = vmatprep.subr.mxu0 0.0
    %3827 = vmatpush1.msra.mxu0 0.0
    %3828 = vmatprep.subr.mxu0 0.0
    %3829 = vmatpush1.msra.mxu0 0.0
    %3830 = vmatprep.subr.mxu0 0.0
    %3831 = vmatpush1.msra.mxu0 0.0
    %3832 = vmatprep.subr.mxu0 0.0
    %3833 = vmatpush1.msra.mxu0 0.0
    %3834 = vmatprep.subr.mxu0 0.0
    %3835 = vmatpush1.msra.mxu0 0.0
    %3836 = vmatprep.subr.mxu0 0.0
    %3837 = vmatpush1.msra.mxu0 0.0
    %3838 = vmatprep.subr.mxu0 0.0
    %3839 = vmatpush1.msra.mxu0 0.0
    %3840 = vmatprep.subr.mxu0 0.0
    %3841 = vmatpush1.msra.mxu0 0.0
    %3842 = vmatprep.subr.mxu0 0.0
    %3843 = vmatpush1.msra.mxu0 0.0
    %3844 = vmatprep.subr.mxu0 0.0
    %3845 = vmatpush1.msra.mxu0 0.0
    %3846 = vmatprep.subr.mxu0 0.0
    %3847 = vmatpush1.msra.mxu0 0.0
    %3848 = vmatprep.subr.mxu0 0.0
    %3849 = vmatpush1.msra.mxu0 0.0
    %3850 = vmatprep.subr.mxu0 0.0
    %3851 = vmatpush1.msra.mxu0 0.0
    %3852 = vmatprep.subr.mxu0 0.0
    %3853 = vmatpush1.msra.mxu0 0.0
    %3854 = vmatprep.subr.mxu0 0.0
    %3855 = vmatpush1.msra.mxu0 0.0
    %3856 = vmatprep.subr.mxu0 0.0
    %3857 = vmatpush1.msra.mxu0 0.0
    %3858 = vmatprep.subr.mxu0 0.0
    %3859 = vmatpush1.msra.mxu0 0.0
    %3860 = vmatprep.mubr.f32.mxu0 0.0
    %3861 = vmatmul.mubr.f32.gmra.mrb[0].mxu0 %v3792
    %v3862 = vpop.f32.mrb[0].mxu0
    %v3863 = vadd.f32 %v3747, %v3862
    %v3864 = vpop.f32.mrb[0].mxu0
    %3865 = vmatprep.mubr.f32.mxu0 0.0
    %3866 = vmatmul.mubr.f32.gmra.mrb[0].mxu0 %v3794
    %v3867 = vpop.f32.mrb[0].mxu0
    %v3868 = vadd.f32 %v3747, %v3867
    %v3869 = vpop.f32.mrb[0].mxu0
    %3870 = vdwg.mxu0
    %v3871 = vmax.f32 %v3863, 0.0
    %v3872 = vmax.f32 %v3868, 0.0
    %v3873 = vsel %vm489, %v3871, 0.0
    %3874 = vadd.xlane.f32.xlu0 %v3873
    %v3875 = vpop.xlane.xlu0 %3874
    %v3876 = vsel %vm489, %v3872, 0.0
    %3877 = vadd.xlane.f32.xlu0 %v3876
    %v3878 = vpop.xlane.xlu0 %3877
    %v3879 = vmul.f32 %v3875, %v747
    %v3880 = vmul.f32 %v3878, %v747
    %v3881 = vsub.f32 %v3871, %v3879
    %v3882 = vsub.f32 %v3872, %v3880
    %v3883 = vmul.f32 %v3881, %v3881
    %v3884 = vmul.f32 %v3882, %v3882
    %v3885 = vsel %vm489, %v3883, 0.0
    %3886 = vadd.xlane.f32.xlu0 %v3885
    %v3887 = vpop.xlane.xlu0 %3886
    %v3888 = vsel %vm489, %v3884, 0.0
    %3889 = vadd.xlane.f32.xlu0 %v3888
    %v3890 = vpop.xlane.xlu0 %3889
    %v3891 = vmul.f32 %v3887, %v747
    %v3892 = vmul.f32 %v3890, %v747
    %v3893 = vadd.f32 %v3891, 1e-05
    %v3894 = vadd.f32 %v3892, 1e-05
    %v3895 = vrsqrt.pop %v3893
    %v3896 = vrsqrt.pop %v3894
    %v3897 = vmul.f32 %v3881, %v3895
    %v3898 = vmul.f32 %v3882, %v3896
    %v3899 = vlaneseq
    %v3900 = vshrl.u32 %v3899, 7
    %v3901 = vsub.s32 1, %v3900
    %v3902 = vrot.slane %v19, %v3901
    %v3903 = vmul.f32 %v3897, %v3902
    %v3904 = vmul.f32 %v3898, %v3902
    %v3905 = vlaneseq
    %v3906 = vshrl.u32 %v3905, 7
    %v3907 = vsub.s32 2, %v3906
    %v3908 = vrot.slane %v19, %v3907
    %v3909 = vadd.f32 %v3903, %v3908
    %v3910 = vadd.f32 %v3904, %v3908
    %v3911 = vsel %vm489, %v3909, 0.0
    %v3912 = vrot.slane %v3911, 4
    %v3913 = vadd.f32 %v3911, %v3912
    %v3914 = vrot.slane %v3913, 2
    %v3915 = vadd.f32 %v3913, %v3914
    %v3916 = vrot.slane %v3915, 1
    %v3917 = vadd.f32 %v3915, %v3916
    %v3918 = vsel %vm489, %v3910, 0.0
    %v3919 = vrot.slane %v3918, 4
    %v3920 = vadd.f32 %v3918, %v3919
    %v3921 = vrot.slane %v3920, 2
    %v3922 = vadd.f32 %v3920, %v3921
    %v3923 = vrot.slane %v3922, 1
    %v3924 = vadd.f32 %v3922, %v3923
    %v3925 = vrcp.pop 8.0
    %v3926 = vmul.f32 %v3917, %v3925
    %v3927 = vmul.f32 %v3924, %v3925
    %v3928 = vlaneseq
    %v3929 = vshrl.u32 %v3928, 7
    %v3930 = vsub.s32 3, %v3929
    %v3931 = vrot.slane %v19, %v3930
    %v3934 = vsel %vm3503, %v3927, %v3926
    %v3935 = vsel %vm489, %v3934, 0
    %3937 = vmatprep.subr.mxu0 0.0
    %3938 = vmatpush1.msra.mxu0 %v72
    %3939 = vmatprep.subr.mxu0 0.0
    %3940 = vmatpush1.msra.mxu0 %v73
    %3941 = vmatprep.subr.mxu0 0.0
    %3942 = vmatpush1.msra.mxu0 %v74
    %3943 = vmatprep.subr.mxu0 0.0
    %3944 = vmatpush1.msra.mxu0 %v75
    %3945 = vmatprep.subr.mxu0 0.0
    %3946 = vmatpush1.msra.mxu0 0.0
    %3947 = vmatprep.subr.mxu0 0.0
    %3948 = vmatpush1.msra.mxu0 0.0
    %3949 = vmatprep.subr.mxu0 0.0
    %3950 = vmatpush1.msra.mxu0 0.0
    %3951 = vmatprep.subr.mxu0 0.0
    %3952 = vmatpush1.msra.mxu0 0.0
    %3953 = vmatprep.subr.mxu0 0.0
    %3954 = vmatpush1.msra.mxu0 0.0
    %3955 = vmatprep.subr.mxu0 0.0
    %3956 = vmatpush1.msra.mxu0 0.0
    %3957 = vmatprep.subr.mxu0 0.0
    %3958 = vmatpush1.msra.mxu0 0.0
    %3959 = vmatprep.subr.mxu0 0.0
    %3960 = vmatpush1.msra.mxu0 0.0
    %3961 = vmatprep.subr.mxu0 0.0
    %3962 = vmatpush1.msra.mxu0 0.0
    %3963 = vmatprep.subr.mxu0 0.0
    %3964 = vmatpush1.msra.mxu0 0.0
    %3965 = vmatprep.subr.mxu0 0.0
    %3966 = vmatpush1.msra.mxu0 0.0
    %3967 = vmatprep.subr.mxu0 0.0
    %3968 = vmatpush1.msra.mxu0 0.0
    %3969 = vmatprep.subr.mxu0 0.0
    %3970 = vmatpush1.msra.mxu0 0.0
    %3971 = vmatprep.subr.mxu0 0.0
    %3972 = vmatpush1.msra.mxu0 0.0
    %3973 = vmatprep.subr.mxu0 0.0
    %3974 = vmatpush1.msra.mxu0 0.0
    %3975 = vmatprep.subr.mxu0 0.0
    %3976 = vmatpush1.msra.mxu0 0.0
    %3977 = vmatprep.subr.mxu0 0.0
    %3978 = vmatpush1.msra.mxu0 0.0
    %3979 = vmatprep.subr.mxu0 0.0
    %3980 = vmatpush1.msra.mxu0 0.0
    %3981 = vmatprep.subr.mxu0 0.0
    %3982 = vmatpush1.msra.mxu0 0.0
    %3983 = vmatprep.subr.mxu0 0.0
    %3984 = vmatpush1.msra.mxu0 0.0
    %3985 = vmatprep.subr.mxu0 0.0
    %3986 = vmatpush1.msra.mxu0 0.0
    %3987 = vmatprep.subr.mxu0 0.0
    %3988 = vmatpush1.msra.mxu0 0.0
    %3989 = vmatprep.subr.mxu0 0.0
    %3990 = vmatpush1.msra.mxu0 0.0
    %3991 = vmatprep.subr.mxu0 0.0
    %3992 = vmatpush1.msra.mxu0 0.0
    %3993 = vmatprep.subr.mxu0 0.0
    %3994 = vmatpush1.msra.mxu0 0.0
    %3995 = vmatprep.subr.mxu0 0.0
    %3996 = vmatpush1.msra.mxu0 0.0
    %3997 = vmatprep.subr.mxu0 0.0
    %3998 = vmatpush1.msra.mxu0 0.0
    %3999 = vmatprep.subr.mxu0 0.0
    %4000 = vmatpush1.msra.mxu0 0.0
    %4001 = vmatprep.mubr.f32.mxu0 0.0
    %4002 = vmatmul.mubr.f32.gmra.mrb[0].mxu0 %v3935
    %v4003 = vpop.f32.mrb[0].mxu0
    %v4004 = vadd.f32 %v3931, %v4003
    %v4005 = vpop.f32.mrb[0].mxu0
    %4006 = vdwg.mxu0
    %vm4007 = vcmask 17408
    %4008 = vst.msk [vmem:[#allocation2] sm:$0x3] %vm4007, %v4004
    // Predicated region
    $region18: #{_lambda_.1} parent=1 // pred_check
      _
    $region19: #{_lambda_.1} parent=1 // pred_check_branch
      %4010 = sbr.rel (0) target = $region21
    $region20: #{_lambda_.1} parent=1 // pred_region
      %s4012 = ssub.s32 32, 32
      %4013 = vsyncadd [#allocation3], %s4012
      %s4015 = sshll.u32 [#allocation2], 4
      %s4016 = int_to_ptr.vmem [resolvable:$true] %s4015
      %4018 = dma.vmem_to_hbm [thread:$0]  %s4016, 32, %s4, [#allocation3]
    $region21: #{_lambda_.1} parent=1 // pred_fallthru
      _
    // Predicated region
    $region22: #{_lambda_.1} parent=1 // pred_check
      _
    $region23: #{_lambda_.1} parent=1 // pred_check_branch
      %4020 = sbr.rel (0) target = $region25
    $region24: #{_lambda_.1} parent=1 // pred_region
      %4021 = dma.done [#allocation3], 32
    $region25: #{_lambda_.1} parent=1 // pred_fallthru
      _
    %4022 = vsyncpa [#allocation3], 1

</llo_original>
